<compile_context>
chip_gen: v5e
topology: v5e:2x2
jax: 0.10.0
libtpu: 0.0.40
codegen_flags: <defaults>
</compile_context>

<pallas_src>
import jax
import jax.numpy as jnp
from jax.experimental import pallas as pl
from jax.experimental.pallas import tpu as pltpu

CHANNEL = 32
KSIZE = 3


def _make_kernel(cdt):
    def band_conv(src_ref, g_ref, b_ref, dst_ref):
        # src_ref : (B, H, W*C)    conv input (lane-dense)
        # g_ref   : (3, W*C, W*C)  banded weights, one matrix per ky
        # b_ref   : (1, W*C)       bias tiled W times (f32)
        # dst_ref : (B, H, W*C)    f32 conv output (+bias); fully overwritten
        B, H, WC = src_ref.shape
        BH = B * H
        b_row = b_ref[...]

        def lhs():
            # Re-load from the Ref for every matmul (vld streams into the MXU)
            # so nothing block-sized stays live in vregs.
            return src_ref[...].astype(cdt).reshape(BH, WC)

        # ky = 1 (same row): full-height assign, bias folded in.
        d = jnp.dot(lhs(), g_ref[1], preferred_element_type=jnp.float32)
        dst_ref[...] = (d + b_row).reshape(B, H, WC)

        # ky = 0 (row above): output rows 1..H-1 use input rows 0..H-2.
        d = jnp.dot(lhs(), g_ref[0], preferred_element_type=jnp.float32)
        d = d.reshape(B, H, WC)
        dst_ref[:, 1:H, :] += d[:, 0:H - 1, :]

        # ky = 2 (row below): output rows 0..H-2 use input rows 1..H-1.
        d = jnp.dot(lhs(), g_ref[2], preferred_element_type=jnp.float32)
        d = d.reshape(B, H, WC)
        dst_ref[:, 0:H - 1, :] += d[:, 1:H, :]

    def kernel(x_ref, g1_ref, b1_ref, g2_ref, b2_ref, o_ref, act_ref, acc_ref):
        band_conv(x_ref, g1_ref, b1_ref, act_ref)        # conv20 + bias
        act_ref[...] = jnp.maximum(act_ref[...], 0.0)    # ReLU, in-place VMEM
        band_conv(act_ref, g2_ref, b2_ref, acc_ref)      # conv21 + bias
        # residual add + lane-dense store (x re-read from its Ref)
        o_ref[...] = (x_ref[...].astype(jnp.float32)
                      + acc_ref[...]).astype(o_ref.dtype)

    return kernel


def _banded_weights(w_khwc, width, cdt):
    """(3, 3, C, C) laid out (ky, kx, cin, cout) -> (3, W*C, W*C).

    Block (u, w) of G[ky] equals W[ky, u - w + 1] when |u - w| <= 1, else 0,
    so that Y_row[h] = sum_ky X_row[h + ky - 1] @ G[ky] (zero pad implicit).
    """
    mats = []
    for ky in range(KSIZE):
        g = jnp.zeros((width * CHANNEL, width * CHANNEL), jnp.float32)
        for kx in range(KSIZE):
            shift = jnp.eye(width, width, k=-(kx - 1), dtype=jnp.float32)
            g = g + jnp.kron(shift, w_khwc[ky, kx].astype(jnp.float32))
        mats.append(g)
    return jnp.stack(mats).astype(cdt)


def _pick_batch_block(n, h, wc, x_itemsize):
    """Images per grid step: VMEM-aware, prefers >= 2 grid steps (v7x 2xTC)."""
    per_img = h * wc * (2 * x_itemsize      # x block, double-buffered
                        + 2 * x_itemsize    # out block, double-buffered
                        + 2 * 4)            # two f32 VMEM scratches
    budget = 10 * 1024 * 1024
    fitting = [b for b in range(1, min(n, 8) + 1)
               if n % b == 0 and b * per_img <= budget]
    best = max(fitting) if fitting else 1
    if n // best < 2:
        # ~0.35us/step extra on single-TC chips, up to ~2x win on v7x.
        two_step = [b for b in fitting if n // b >= 2]
        if two_step:
            best = max(two_step)
    return best


def resblock_pallas_nhwc(x_nhwc, w1, b1, w2, b2, *, use_bf16_mxu=False):
    """Native NHWC entry point.

    x_nhwc: (N, H, W, 32); w*: (3, 3, 32, 32) laid out (ky, kx, cin, cout);
    b*: (32,). use_bf16_mxu=True halves banded-weight VMEM and MXU time on
    v6e/v7x (bias/ReLU/residual stay f32); keep False on v5e / for exact f32.
    """
    N, H, W, C = x_nhwc.shape
    assert C == CHANNEL
    assert H % 8 == 0, "H must be a multiple of 8 (sublane tiling)"
    assert (W * C) % 128 == 0, "W*C must be a multiple of 128 (lane tiling)"
    WC = W * C
    cdt = jnp.bfloat16 if use_bf16_mxu else jnp.float32
    w_isz = 2 if use_bf16_mxu else 4

    # TODO(synk): for wide images (W*C > ~1024) add W-band tiling with a
    # 1-pixel halo; the banded weights grow as (W*C)^2 so this single-band
    # build targets moderate widths that fit VMEM.
    wbytes = 2 * KSIZE * WC * WC * w_isz * 2    # x2: assume double-buffered
    assert wbytes <= (44 << 20), (
        "image too wide for the single-band banded-matmul kernel; "
        "enable use_bf16_mxu or add W-band tiling")

    bblk = _pick_batch_block(N, H, WC, x_nhwc.dtype.itemsize)
    assert N % bblk == 0

    g1 = _banded_weights(w1, W, cdt)
    g2 = _banded_weights(w2, W, cdt)
    b1r = jnp.tile(b1.astype(jnp.float32), W).reshape(1, WC)
    b2r = jnp.tile(b2.astype(jnp.float32), W).reshape(1, WC)

    x2 = x_nhwc.reshape(N, H, WC)               # lane-dense view (free)

    io_bytes = bblk * H * WC * (4 * x_nhwc.dtype.itemsize + 2 * 4)
    need = wbytes + io_bytes + (2 << 20)
    vmem_limit = int(min(max(need, 32 << 20), 56 << 20))

    flops = int(12 * N * H * WC * WC)           # 2 convs x 3 ky matmuls
    bytes_accessed = int(2 * N * H * WC * x_nhwc.dtype.itemsize
                         + 2 * KSIZE * WC * WC * w_isz + 2 * WC * 4)

    out2 = pl.pallas_call(
        _make_kernel(cdt),
        out_shape=jax.ShapeDtypeStruct((N, H, WC), x_nhwc.dtype),
        grid_spec=pltpu.PrefetchScalarGridSpec(
            num_scalar_prefetch=0,
            grid=(N // bblk,),
            in_specs=[
                pl.BlockSpec((bblk, H, WC), lambda n: (n, 0, 0)),
                pl.BlockSpec((KSIZE, WC, WC), lambda n: (0, 0, 0)),
                pl.BlockSpec((1, WC), lambda n: (0, 0)),
                pl.BlockSpec((KSIZE, WC, WC), lambda n: (0, 0, 0)),
                pl.BlockSpec((1, WC), lambda n: (0, 0)),
            ],
            out_specs=pl.BlockSpec((bblk, H, WC), lambda n: (n, 0, 0)),
            scratch_shapes=[pltpu.VMEM((bblk, H, WC), jnp.float32),
                            pltpu.VMEM((bblk, H, WC), jnp.float32)],
        ),
        compiler_params=pltpu.CompilerParams(
            dimension_semantics=("parallel",),
            vmem_limit_bytes=vmem_limit),
        cost_estimate=pl.CostEstimate(flops=flops, transcendentals=0,
                                      bytes_accessed=bytes_accessed),
    )(x2, g1, b1r, g2, b2r)

    return out2.reshape(N, H, W, C)


def resblock_pallas(x_nchw, w1, b1, w2, b2, *, use_bf16_mxu=False):
    """PyTorch-layout (NCHW) compatibility wrapper around the NHWC kernel."""
    x_nhwc = jnp.transpose(x_nchw, (0, 2, 3, 1))
    out = resblock_pallas_nhwc(x_nhwc, w1, b1, w2, b2,
                               use_bf16_mxu=use_bf16_mxu)
    return jnp.transpose(out, (0, 3, 1, 2))


def _reference(x_nchw, w1, b1, w2, b2):
    """Pure-JAX reference using lax.conv (weights converted to OIHW)."""
    def conv(x, w_khwc, b):
        w_oihw = jnp.transpose(w_khwc, (3, 2, 0, 1))  # (Cout, Cin, kH, kW)
        y = jax.lax.conv_general_dilated(
            x, w_oihw, window_strides=(1, 1), padding=((1, 1), (1, 1)),
            dimension_numbers=("NCHW", "OIHW", "NCHW"))
        return y + b.reshape(1, -1, 1, 1)
    rs1 = jax.nn.relu(conv(x_nchw, w1, b1))
    rs1 = conv(rs1, w2, b2)
    return x_nchw + rs1


if __name__ == "__main__":
    key = jax.random.PRNGKey(0)
    k_x, k_w1, k_b1, k_w2, k_b2 = jax.random.split(key, 5)

    N, C, H, W = 2, CHANNEL, 16, 16
    x = jax.random.normal(k_x, (N, C, H, W), dtype=jnp.float32)

    # Deterministic synthetic parameters (shapes match nn.Conv2d(32, 32, 3)).
    fan_in = C * KSIZE * KSIZE
    scale = 1.0 / jnp.sqrt(jnp.float32(fan_in))
    w1 = jax.random.uniform(k_w1, (KSIZE, KSIZE, C, C), jnp.float32, -scale, scale)
    b1 = jax.random.uniform(k_b1, (C,), jnp.float32, -scale, scale)
    w2 = jax.random.uniform(k_w2, (KSIZE, KSIZE, C, C), jnp.float32, -scale, scale)
    b2 = jax.random.uniform(k_b2, (C,), jnp.float32, -scale, scale)

    out = jax.block_until_ready(resblock_pallas(x, w1, b1, w2, b2))

    ref = _reference(x, w1, b1, w2, b2)
    assert out.shape == (N, C, H, W)
    assert jnp.allclose(out, ref, atol=2e-4, rtol=2e-4), "mismatch vs reference"

    print("KERNEL_OK")
</pallas_src>

<mosaic_0001>
module attributes {stable_mosaic.version = 11 : i64} {
  func.func @kernel(%arg0: i32, %arg1: memref<1x16x512xf32, #tpu.memory_space<vmem>>, %arg2: memref<3x512x512xf32, #tpu.memory_space<vmem>>, %arg3: memref<1x512xf32, #tpu.memory_space<vmem>>, %arg4: memref<3x512x512xf32, #tpu.memory_space<vmem>>, %arg5: memref<1x512xf32, #tpu.memory_space<vmem>>, %arg6: memref<1x16x512xf32, #tpu.memory_space<vmem>>, %arg7: memref<1x16x512xf32, #tpu.memory_space<vmem>>, %arg8: memref<1x16x512xf32, #tpu.memory_space<vmem>>) attributes {dimension_semantics = [#tpu.dimension_semantics<parallel>], iteration_bounds = array<i64: 2>, scalar_prefetch = 0 : i64, scratch_operands = 2 : i64, tpu.core_type = #tpu.core_type<tc>, window_params = [{transform_indices = @transform_0, window_bounds = array<i64: 1, 16, 512>}, {pipeline_mode = #tpu.pipeline_mode<synchronous>, transform_indices = @transform_1, window_bounds = array<i64: 3, 512, 512>}, {pipeline_mode = #tpu.pipeline_mode<synchronous>, transform_indices = @transform_2, window_bounds = array<i64: 1, 512>}, {pipeline_mode = #tpu.pipeline_mode<synchronous>, transform_indices = @transform_3, window_bounds = array<i64: 3, 512, 512>}, {pipeline_mode = #tpu.pipeline_mode<synchronous>, transform_indices = @transform_4, window_bounds = array<i64: 1, 512>}, {transform_indices = @transform_5, window_bounds = array<i64: 1, 16, 512>}]} {
    %c0 = arith.constant 0 : index
    %c0_0 = arith.constant 0 : index
    %0 = vector.load %arg3[%c0, %c0_0] : memref<1x512xf32, #tpu.memory_space<vmem>>, vector<1x512xf32>
    %c0_1 = arith.constant 0 : index
    %c0_2 = arith.constant 0 : index
    %c0_3 = arith.constant 0 : index
    %1 = vector.load %arg1[%c0_1, %c0_2, %c0_3] : memref<1x16x512xf32, #tpu.memory_space<vmem>>, vector<1x16x512xf32>
    %2 = vector.shape_cast %1 : vector<1x16x512xf32> to vector<16x512xf32>
    %c1 = arith.constant 1 : index
    %c0_4 = arith.constant 0 : index
    %c0_5 = arith.constant 0 : index
    %3 = vector.load %arg2[%c1, %c0_4, %c0_5] : memref<3x512x512xf32, #tpu.memory_space<vmem>>, vector<1x512x512xf32>
    %4 = vector.shape_cast %3 : vector<1x512x512xf32> to vector<512x512xf32>
    %cst = arith.constant dense<0.000000e+00> : vector<16x512xf32>
    %5 = tpu.matmul %2, %4, %cst {dimension_numbers = #tpu.dot_dimension_numbers<[1], [0], [0], [1], [0, 0, 1, 1], [], []>} : vector<16x512xf32>, vector<512x512xf32>, vector<16x512xf32> -> vector<16x512xf32>
    %6 = vector.broadcast %0 : vector<1x512xf32> to vector<16x512xf32>
    %7 = arith.addf %5, %6 : vector<16x512xf32>
    %8 = vector.shape_cast %7 : vector<16x512xf32> to vector<1x16x512xf32>
    %c0_6 = arith.constant 0 : index
    %c0_7 = arith.constant 0 : index
    %c0_8 = arith.constant 0 : index
    %9 = vector.load %arg7[%c0_6, %c0_7, %c0_8] : memref<1x16x512xf32, #tpu.memory_space<vmem>>, vector<1x16x512xf32>
    tpu.vector_store %arg7[%c0_6, %c0_7, %c0_8], %8 {strides = array<i32>} : memref<1x16x512xf32, #tpu.memory_space<vmem>>, vector<1x16x512xf32>,
    %c0_9 = arith.constant 0 : index
    %c0_10 = arith.constant 0 : index
    %c0_11 = arith.constant 0 : index
    %10 = vector.load %arg1[%c0_9, %c0_10, %c0_11] : memref<1x16x512xf32, #tpu.memory_space<vmem>>, vector<1x16x512xf32>
    %11 = vector.shape_cast %10 : vector<1x16x512xf32> to vector<16x512xf32>
    %c0_12 = arith.constant 0 : index
    %c0_13 = arith.constant 0 : index
    %c0_14 = arith.constant 0 : index
    %12 = vector.load %arg2[%c0_12, %c0_13, %c0_14] : memref<3x512x512xf32, #tpu.memory_space<vmem>>, vector<1x512x512xf32>
    %13 = vector.shape_cast %12 : vector<1x512x512xf32> to vector<512x512xf32>
    %cst_15 = arith.constant dense<0.000000e+00> : vector<16x512xf32>
    %14 = tpu.matmul %11, %13, %cst_15 {dimension_numbers = #tpu.dot_dimension_numbers<[1], [0], [0], [1], [0, 0, 1, 1], [], []>} : vector<16x512xf32>, vector<512x512xf32>, vector<16x512xf32> -> vector<16x512xf32>
    %15 = vector.shape_cast %14 : vector<16x512xf32> to vector<1x16x512xf32>
    %c0_16 = arith.constant 0 : index
    %c1_17 = arith.constant 1 : index
    %c0_18 = arith.constant 0 : index
    %16 = vector.load %arg7[%c0_16, %c1_17, %c0_18] : memref<1x16x512xf32, #tpu.memory_space<vmem>>, vector<1x15x512xf32>
    %17 = vector.extract_strided_slice %15 {offsets = [0, 0, 0], sizes = [1, 15, 512], strides = [1, 1, 1]} : vector<1x16x512xf32> to vector<1x15x512xf32>
    %18 = arith.addf %16, %17 : vector<1x15x512xf32>
    %c0_19 = arith.constant 0 : index
    %c1_20 = arith.constant 1 : index
    %c0_21 = arith.constant 0 : index
    %19 = vector.load %arg7[%c0_19, %c1_20, %c0_21] : memref<1x16x512xf32, #tpu.memory_space<vmem>>, vector<1x15x512xf32>
    tpu.vector_store %arg7[%c0_19, %c1_20, %c0_21], %18 {strides = array<i32>} : memref<1x16x512xf32, #tpu.memory_space<vmem>>, vector<1x15x512xf32>,
    %c0_22 = arith.constant 0 : index
    %c0_23 = arith.constant 0 : index
    %c0_24 = arith.constant 0 : index
    %20 = vector.load %arg1[%c0_22, %c0_23, %c0_24] : memref<1x16x512xf32, #tpu.memory_space<vmem>>, vector<1x16x512xf32>
    %21 = vector.shape_cast %20 : vector<1x16x512xf32> to vector<16x512xf32>
    %c2 = arith.constant 2 : index
    %c0_25 = arith.constant 0 : index
    %c0_26 = arith.constant 0 : index
    %22 = vector.load %arg2[%c2, %c0_25, %c0_26] : memref<3x512x512xf32, #tpu.memory_space<vmem>>, vector<1x512x512xf32>
    %23 = vector.shape_cast %22 : vector<1x512x512xf32> to vector<512x512xf32>
    %cst_27 = arith.constant dense<0.000000e+00> : vector<16x512xf32>
    %24 = tpu.matmul %21, %23, %cst_27 {dimension_numbers = #tpu.dot_dimension_numbers<[1], [0], [0], [1], [0, 0, 1, 1], [], []>} : vector<16x512xf32>, vector<512x512xf32>, vector<16x512xf32> -> vector<16x512xf32>
    %25 = vector.shape_cast %24 : vector<16x512xf32> to vector<1x16x512xf32>
    %c0_28 = arith.constant 0 : index
    %c0_29 = arith.constant 0 : index
    %c0_30 = arith.constant 0 : index
    %26 = vector.load %arg7[%c0_28, %c0_29, %c0_30] : memref<1x16x512xf32, #tpu.memory_space<vmem>>, vector<1x15x512xf32>
    %27 = vector.extract_strided_slice %25 {offsets = [0, 1, 0], sizes = [1, 15, 512], strides = [1, 1, 1]} : vector<1x16x512xf32> to vector<1x15x512xf32>
    %28 = arith.addf %26, %27 : vector<1x15x512xf32>
    %c0_31 = arith.constant 0 : index
    %c0_32 = arith.constant 0 : index
    %c0_33 = arith.constant 0 : index
    %29 = vector.load %arg7[%c0_31, %c0_32, %c0_33] : memref<1x16x512xf32, #tpu.memory_space<vmem>>, vector<1x15x512xf32>
    tpu.vector_store %arg7[%c0_31, %c0_32, %c0_33], %28 {strides = array<i32>} : memref<1x16x512xf32, #tpu.memory_space<vmem>>, vector<1x15x512xf32>,
    %c0_34 = arith.constant 0 : index
    %c0_35 = arith.constant 0 : index
    %c0_36 = arith.constant 0 : index
    %30 = vector.load %arg7[%c0_34, %c0_35, %c0_36] : memref<1x16x512xf32, #tpu.memory_space<vmem>>, vector<1x16x512xf32>
    %cst_37 = arith.constant 0.000000e+00 : f32
    %31 = vector.broadcast %cst_37 : f32 to vector<1x16x512xf32>
    %32 = arith.maximumf %30, %31 : vector<1x16x512xf32>
    %c0_38 = arith.constant 0 : index
    %c0_39 = arith.constant 0 : index
    %c0_40 = arith.constant 0 : index
    %33 = vector.load %arg7[%c0_38, %c0_39, %c0_40] : memref<1x16x512xf32, #tpu.memory_space<vmem>>, vector<1x16x512xf32>
    tpu.vector_store %arg7[%c0_38, %c0_39, %c0_40], %32 {strides = array<i32>} : memref<1x16x512xf32, #tpu.memory_space<vmem>>, vector<1x16x512xf32>,
    %c0_41 = arith.constant 0 : index
    %c0_42 = arith.constant 0 : index
    %34 = vector.load %arg5[%c0_41, %c0_42] : memref<1x512xf32, #tpu.memory_space<vmem>>, vector<1x512xf32>
    %c0_43 = arith.constant 0 : index
    %c0_44 = arith.constant 0 : index
    %c0_45 = arith.constant 0 : index
    %35 = vector.load %arg7[%c0_43, %c0_44, %c0_45] : memref<1x16x512xf32, #tpu.memory_space<vmem>>, vector<1x16x512xf32>
    %36 = vector.shape_cast %35 : vector<1x16x512xf32> to vector<16x512xf32>
    %c1_46 = arith.constant 1 : index
    %c0_47 = arith.constant 0 : index
    %c0_48 = arith.constant 0 : index
    %37 = vector.load %arg4[%c1_46, %c0_47, %c0_48] : memref<3x512x512xf32, #tpu.memory_space<vmem>>, vector<1x512x512xf32>
    %38 = vector.shape_cast %37 : vector<1x512x512xf32> to vector<512x512xf32>
    %cst_49 = arith.constant dense<0.000000e+00> : vector<16x512xf32>
    %39 = tpu.matmul %36, %38, %cst_49 {dimension_numbers = #tpu.dot_dimension_numbers<[1], [0], [0], [1], [0, 0, 1, 1], [], []>} : vector<16x512xf32>, vector<512x512xf32>, vector<16x512xf32> -> vector<16x512xf32>
    %40 = vector.broadcast %34 : vector<1x512xf32> to vector<16x512xf32>
    %41 = arith.addf %39, %40 : vector<16x512xf32>
    %42 = vector.shape_cast %41 : vector<16x512xf32> to vector<1x16x512xf32>
    %c0_50 = arith.constant 0 : index
    %c0_51 = arith.constant 0 : index
    %c0_52 = arith.constant 0 : index
    %43 = vector.load %arg8[%c0_50, %c0_51, %c0_52] : memref<1x16x512xf32, #tpu.memory_space<vmem>>, vector<1x16x512xf32>
    tpu.vector_store %arg8[%c0_50, %c0_51, %c0_52], %42 {strides = array<i32>} : memref<1x16x512xf32, #tpu.memory_space<vmem>>, vector<1x16x512xf32>,
    %c0_53 = arith.constant 0 : index
    %c0_54 = arith.constant 0 : index
    %c0_55 = arith.constant 0 : index
    %44 = vector.load %arg7[%c0_53, %c0_54, %c0_55] : memref<1x16x512xf32, #tpu.memory_space<vmem>>, vector<1x16x512xf32>
    %45 = vector.shape_cast %44 : vector<1x16x512xf32> to vector<16x512xf32>
    %c0_56 = arith.constant 0 : index
    %c0_57 = arith.constant 0 : index
    %c0_58 = arith.constant 0 : index
    %46 = vector.load %arg4[%c0_56, %c0_57, %c0_58] : memref<3x512x512xf32, #tpu.memory_space<vmem>>, vector<1x512x512xf32>
    %47 = vector.shape_cast %46 : vector<1x512x512xf32> to vector<512x512xf32>
    %cst_59 = arith.constant dense<0.000000e+00> : vector<16x512xf32>
    %48 = tpu.matmul %45, %47, %cst_59 {dimension_numbers = #tpu.dot_dimension_numbers<[1], [0], [0], [1], [0, 0, 1, 1], [], []>} : vector<16x512xf32>, vector<512x512xf32>, vector<16x512xf32> -> vector<16x512xf32>
    %49 = vector.shape_cast %48 : vector<16x512xf32> to vector<1x16x512xf32>
    %c0_60 = arith.constant 0 : index
    %c1_61 = arith.constant 1 : index
    %c0_62 = arith.constant 0 : index
    %50 = vector.load %arg8[%c0_60, %c1_61, %c0_62] : memref<1x16x512xf32, #tpu.memory_space<vmem>>, vector<1x15x512xf32>
    %51 = vector.extract_strided_slice %49 {offsets = [0, 0, 0], sizes = [1, 15, 512], strides = [1, 1, 1]} : vector<1x16x512xf32> to vector<1x15x512xf32>
    %52 = arith.addf %50, %51 : vector<1x15x512xf32>
    %c0_63 = arith.constant 0 : index
    %c1_64 = arith.constant 1 : index
    %c0_65 = arith.constant 0 : index
    %53 = vector.load %arg8[%c0_63, %c1_64, %c0_65] : memref<1x16x512xf32, #tpu.memory_space<vmem>>, vector<1x15x512xf32>
    tpu.vector_store %arg8[%c0_63, %c1_64, %c0_65], %52 {strides = array<i32>} : memref<1x16x512xf32, #tpu.memory_space<vmem>>, vector<1x15x512xf32>,
    %c0_66 = arith.constant 0 : index
    %c0_67 = arith.constant 0 : index
    %c0_68 = arith.constant 0 : index
    %54 = vector.load %arg7[%c0_66, %c0_67, %c0_68] : memref<1x16x512xf32, #tpu.memory_space<vmem>>, vector<1x16x512xf32>
    %55 = vector.shape_cast %54 : vector<1x16x512xf32> to vector<16x512xf32>
    %c2_69 = arith.constant 2 : index
    %c0_70 = arith.constant 0 : index
    %c0_71 = arith.constant 0 : index
    %56 = vector.load %arg4[%c2_69, %c0_70, %c0_71] : memref<3x512x512xf32, #tpu.memory_space<vmem>>, vector<1x512x512xf32>
    %57 = vector.shape_cast %56 : vector<1x512x512xf32> to vector<512x512xf32>
    %cst_72 = arith.constant dense<0.000000e+00> : vector<16x512xf32>
    %58 = tpu.matmul %55, %57, %cst_72 {dimension_numbers = #tpu.dot_dimension_numbers<[1], [0], [0], [1], [0, 0, 1, 1], [], []>} : vector<16x512xf32>, vector<512x512xf32>, vector<16x512xf32> -> vector<16x512xf32>
    %59 = vector.shape_cast %58 : vector<16x512xf32> to vector<1x16x512xf32>
    %c0_73 = arith.constant 0 : index
    %c0_74 = arith.constant 0 : index
    %c0_75 = arith.constant 0 : index
    %60 = vector.load %arg8[%c0_73, %c0_74, %c0_75] : memref<1x16x512xf32, #tpu.memory_space<vmem>>, vector<1x15x512xf32>
    %61 = vector.extract_strided_slice %59 {offsets = [0, 1, 0], sizes = [1, 15, 512], strides = [1, 1, 1]} : vector<1x16x512xf32> to vector<1x15x512xf32>
    %62 = arith.addf %60, %61 : vector<1x15x512xf32>
    %c0_76 = arith.constant 0 : index
    %c0_77 = arith.constant 0 : index
    %c0_78 = arith.constant 0 : index
    %63 = vector.load %arg8[%c0_76, %c0_77, %c0_78] : memref<1x16x512xf32, #tpu.memory_space<vmem>>, vector<1x15x512xf32>
    tpu.vector_store %arg8[%c0_76, %c0_77, %c0_78], %62 {strides = array<i32>} : memref<1x16x512xf32, #tpu.memory_space<vmem>>, vector<1x15x512xf32>,
    %c0_79 = arith.constant 0 : index
    %c0_80 = arith.constant 0 : index
    %c0_81 = arith.constant 0 : index
    %64 = vector.load %arg1[%c0_79, %c0_80, %c0_81] : memref<1x16x512xf32, #tpu.memory_space<vmem>>, vector<1x16x512xf32>
    %c0_82 = arith.constant 0 : index
    %c0_83 = arith.constant 0 : index
    %c0_84 = arith.constant 0 : index
    %65 = vector.load %arg8[%c0_82, %c0_83, %c0_84] : memref<1x16x512xf32, #tpu.memory_space<vmem>>, vector<1x16x512xf32>
    %66 = arith.addf %64, %65 : vector<1x16x512xf32>
    %c0_85 = arith.constant 0 : index
    %c0_86 = arith.constant 0 : index
    %c0_87 = arith.constant 0 : index
    %67 = vector.load %arg6[%c0_85, %c0_86, %c0_87] : memref<1x16x512xf32, #tpu.memory_space<vmem>>, vector<1x16x512xf32>
    tpu.vector_store %arg6[%c0_85, %c0_86, %c0_87], %66 {strides = array<i32>} : memref<1x16x512xf32, #tpu.memory_space<vmem>>, vector<1x16x512xf32>,
    return
  }
  func.func @transform_0(%arg0: i32) -> (i32, i32, i32) {
    %c0_i32 = arith.constant 0 : i32
    %c0_i32_0 = arith.constant 0 : i32
    %c0_i32_1 = arith.constant 0 : i32
    return %arg0, %c0_i32, %c0_i32_0 : i32, i32, i32
  }
  func.func @transform_1(%arg0: i32) -> (i32, i32, i32) {
    %c0_i32 = arith.constant 0 : i32
    %c0_i32_0 = arith.constant 0 : i32
    %c0_i32_1 = arith.constant 0 : i32
    %c0_i32_2 = arith.constant 0 : i32
    return %c0_i32, %c0_i32_0, %c0_i32_1 : i32, i32, i32
  }
  func.func @transform_2(%arg0: i32) -> (i32, i32) {
    %c0_i32 = arith.constant 0 : i32
    %c0_i32_0 = arith.constant 0 : i32
    %c0_i32_1 = arith.constant 0 : i32
    return %c0_i32, %c0_i32_0 : i32, i32
  }
  func.func @transform_3(%arg0: i32) -> (i32, i32, i32) {
    %c0_i32 = arith.constant 0 : i32
    %c0_i32_0 = arith.constant 0 : i32
    %c0_i32_1 = arith.constant 0 : i32
    %c0_i32_2 = arith.constant 0 : i32
    return %c0_i32, %c0_i32_0, %c0_i32_1 : i32, i32, i32
  }
  func.func @transform_4(%arg0: i32) -> (i32, i32) {
    %c0_i32 = arith.constant 0 : i32
    %c0_i32_0 = arith.constant 0 : i32
    %c0_i32_1 = arith.constant 0 : i32
    return %c0_i32, %c0_i32_0 : i32, i32
  }
  func.func @transform_5(%arg0: i32) -> (i32, i32, i32) {
    %c0_i32 = arith.constant 0 : i32
    %c0_i32_0 = arith.constant 0 : i32
    %c0_i32_1 = arith.constant 0 : i32
    return %arg0, %c0_i32, %c0_i32_0 : i32, i32, i32
  }
}

</mosaic_0001>

<llo_original>
// kernel: tpu_custom_call.1
$region0: #{tpu_custom_call.1}
  #allocation0 [shape = 'u32[]', space=smem, size = 0x4, offset = 0x4, fixed_abs, tag = 'smem constant byte address 0x4 - core index']
  #allocation1 [shape = 'u32[72,128]{1,0:T(1,128)}', space=vmem, size = 0x9000, scoped, tag = 'internal scratch']
  #allocation2 [shape = 'f32[1,16,512]{2,1,0:T(8,128)}', space=vmem, size = 0x8000, scoped, tag = 'scratch operand']
  #allocation3 [shape = 'f32[1,16,512]{2,1,0:T(8,128)}', space=vmem, size = 0x8000, scoped, tag = 'scratch operand']
  %s0 = inlined_call_operand.hbm [shape: f32[2,16,512], index: 0, kind: input, shape index: {}]
  %s1 = inlined_call_operand.hbm [shape: f32[3,512,512], index: 1, kind: input, shape index: {}]
  %s2 = inlined_call_operand.hbm [shape: f32[1,512], index: 2, kind: input, shape index: {}]
  %s3 = inlined_call_operand.hbm [shape: f32[3,512,512], index: 3, kind: input, shape index: {}]
  %s4 = inlined_call_operand.hbm [shape: f32[1,512], index: 4, kind: input, shape index: {}]
  %s5 = inlined_call_operand.hbm [shape: f32[2,16,512], index: 5, kind: output, shape index: {}]
  %s6 = sld [smem:[#allocation0]]
  $region73: #{tpu_custom_call.1} parent=0
    _
  %s8 = ssub.s32 1, %s6
  %s9 = scalar_select 0, %s8, %s6
  $region1: #{tpu_custom_call.1} parent=0
    #allocation4 [shape = 'u8[65536]{0}', space=vmem, size = 0x10000, scoped, tag = 'input window, operand 0']
    #allocation5 [shape = 's32[2]{0}', space=sflag, size = 0x8, scoped, tag = 'scoped memory for tpu_custom_call.1']
    #allocation6 [shape = 's32[2]{0}', space=sflag, size = 0x8, scoped, tag = 'scoped memory for tpu_custom_call.1']
    #allocation7 [shape = 'u8[3145728]{0}', space=vmem, size = 0x300000, scoped, tag = 'input window, operand 1, single buffered']
    #allocation8 [shape = 's32[1]{0}', space=sflag, size = 0x4, scoped, tag = 'scoped memory for tpu_custom_call.1']
    #allocation9 [shape = 'u8[2048]{0}', space=vmem, size = 0x800, scoped, tag = 'input window, operand 2, single buffered']
    #allocation10 [shape = 'u8[3145728]{0}', space=vmem, size = 0x300000, scoped, tag = 'input window, operand 3, single buffered']
    #allocation11 [shape = 's32[1]{0}', space=sflag, size = 0x4, scoped, tag = 'scoped memory for tpu_custom_call.1']
    #allocation12 [shape = 'u8[2048]{0}', space=vmem, size = 0x800, scoped, tag = 'input window, operand 4, single buffered']
    #allocation13 [shape = 'u8[65536]{0}', space=vmem, size = 0x10000, scoped, tag = 'output window, operand 0']
    %10 = vsyncpa [#allocation5], 0
    %s11 = scalar_lea.sflag [#allocation5], 1
    %12 = vsyncpa %s11, 0
    %13 = vsyncpa [#allocation8], 0
    %14 = vsyncpa [#allocation11], 0
    %15 = vsyncpa [#allocation6], 0
    %s16 = scalar_lea.sflag [#allocation6], 1
    %17 = vsyncpa %s16, 0
    loop: start=0, step=1, limit=4
    $region2: #{tpu_custom_call.1} parent=1 // loop_pre_header
      _
    $region3: #{tpu_custom_call.1} parent=1 // loop_header
      %s19 = sphi 0, %s23
      %p20 = scmp.ge.s32.totalorder %s19, 4
      %s29 = sphi 0, %s31
      %s32 = sphi 0, %s29
      %s33 = sphi 0, %s32
      %s49 = sphi 0, %s33
      %s53 = sphi 0, %s53
      %s55 = sphi 0, %s53
      %s56 = sphi 0, %s55
      %s70 = sphi 0, %s56
      %s74 = sphi 0, %s74
      %s76 = sphi 0, %s74
      %s77 = sphi 0, %s76
      %s91 = sphi 0, %s77
      %s95 = sphi 0, %s95
      %s97 = sphi 0, %s95
      %s98 = sphi 0, %s97
      %s112 = sphi 0, %s98
      %s116 = sphi 0, %s116
      %s118 = sphi 0, %s116
      %s119 = sphi 0, %s118
      %s133 = sphi 0, %s119
      %s139 = sphi 0, %s141
      %s142 = sphi 0, %s139
      %s143 = sphi 0, %s142
      %s159 = sphi 0, %s143
    $region4: #{tpu_custom_call.1} parent=1 // loop_header_branch
      %22 = sbr.rel (%p20) target = $region8
    $region5: #{tpu_custom_call.1} parent=1 // loop_body
      %s24 = ssub.s32 %s19, 1
      %s25 = ssub.s32 %s19, 2
      %s26 = sadd.s32 %s19, 1
      %s27 = ssub.s32 %s19, %s26
      %p28 = scmp.eq.s32.totalorder %s27, 0
      %s30 = sadd.s32 %s29, 1
      %s31 = scalar_select %p28, %s29, %s30
      %p34 = pneg %p28
      %p35 = scmp.eq.s32.totalorder %s19, 1
      %p36 = por %p34, %p35
      %p37 = scmp.ne.s32.totalorder %s29, %s32
      %p38 = scmp.eq.s32.totalorder %s19, 0
      %p39 = por %p37, %p38
      %p40 = scmp.ne.s32.totalorder %s29, %s32
      %p41 = scmp.eq.s32.totalorder %s24, 1
      %p42 = por %p40, %p41
      %p43 = scmp.ne.s32.totalorder %s32, %s33
      %p44 = scmp.eq.s32.totalorder %s24, 0
      %p45 = por %p43, %p44
      %p46 = scmp.ne.s32.totalorder %s32, %s33
      %p47 = scmp.eq.s32.totalorder %s25, 1
      %p48 = por %p46, %p47
      %p50 = scmp.ne.s32.totalorder %s33, %s49
      %p51 = scmp.eq.s32.totalorder %s25, 0
      %p52 = por %p50, %p51
      %s54 = sadd.s32 %s53, 1
      %p57 = scmp.eq.s32.totalorder %s19, 1
      %p58 = scmp.ne.s32.totalorder %s53, %s55
      %p59 = scmp.eq.s32.totalorder %s19, 0
      %p60 = por %p58, %p59
      %p61 = scmp.ne.s32.totalorder %s53, %s55
      %p62 = scmp.eq.s32.totalorder %s24, 1
      %p63 = por %p61, %p62
      %p64 = scmp.ne.s32.totalorder %s55, %s56
      %p65 = scmp.eq.s32.totalorder %s24, 0
      %p66 = por %p64, %p65
      %p67 = scmp.ne.s32.totalorder %s55, %s56
      %p68 = scmp.eq.s32.totalorder %s25, 1
      %p69 = por %p67, %p68
      %p71 = scmp.ne.s32.totalorder %s56, %s70
      %p72 = scmp.eq.s32.totalorder %s25, 0
      %p73 = por %p71, %p72
      %s75 = sadd.s32 %s74, 1
      %p78 = scmp.eq.s32.totalorder %s19, 1
      %p79 = scmp.ne.s32.totalorder %s74, %s76
      %p80 = scmp.eq.s32.totalorder %s19, 0
      %p81 = por %p79, %p80
      %p82 = scmp.ne.s32.totalorder %s74, %s76
      %p83 = scmp.eq.s32.totalorder %s24, 1
      %p84 = por %p82, %p83
      %p85 = scmp.ne.s32.totalorder %s76, %s77
      %p86 = scmp.eq.s32.totalorder %s24, 0
      %p87 = por %p85, %p86
      %p88 = scmp.ne.s32.totalorder %s76, %s77
      %p89 = scmp.eq.s32.totalorder %s25, 1
      %p90 = por %p88, %p89
      %p92 = scmp.ne.s32.totalorder %s77, %s91
      %p93 = scmp.eq.s32.totalorder %s25, 0
      %p94 = por %p92, %p93
      %s96 = sadd.s32 %s95, 1
      %p99 = scmp.eq.s32.totalorder %s19, 1
      %p100 = scmp.ne.s32.totalorder %s95, %s97
      %p101 = scmp.eq.s32.totalorder %s19, 0
      %p102 = por %p100, %p101
      %p103 = scmp.ne.s32.totalorder %s95, %s97
      %p104 = scmp.eq.s32.totalorder %s24, 1
      %p105 = por %p103, %p104
      %p106 = scmp.ne.s32.totalorder %s97, %s98
      %p107 = scmp.eq.s32.totalorder %s24, 0
      %p108 = por %p106, %p107
      %p109 = scmp.ne.s32.totalorder %s97, %s98
      %p110 = scmp.eq.s32.totalorder %s25, 1
      %p111 = por %p109, %p110
      %p113 = scmp.ne.s32.totalorder %s98, %s112
      %p114 = scmp.eq.s32.totalorder %s25, 0
      %p115 = por %p113, %p114
      %s117 = sadd.s32 %s116, 1
      %p120 = scmp.eq.s32.totalorder %s19, 1
      %p121 = scmp.ne.s32.totalorder %s116, %s118
      %p122 = scmp.eq.s32.totalorder %s19, 0
      %p123 = por %p121, %p122
      %p124 = scmp.ne.s32.totalorder %s116, %s118
      %p125 = scmp.eq.s32.totalorder %s24, 1
      %p126 = por %p124, %p125
      %p127 = scmp.ne.s32.totalorder %s118, %s119
      %p128 = scmp.eq.s32.totalorder %s24, 0
      %p129 = por %p127, %p128
      %p130 = scmp.ne.s32.totalorder %s118, %s119
      %p131 = scmp.eq.s32.totalorder %s25, 1
      %p132 = por %p130, %p131
      %p134 = scmp.ne.s32.totalorder %s119, %s133
      %p135 = scmp.eq.s32.totalorder %s25, 0
      %p136 = por %p134, %p135
      %s137 = ssub.s32 %s19, %s26
      %p138 = scmp.eq.s32.totalorder %s137, 0
      %s140 = sadd.s32 %s139, 1
      %s141 = scalar_select %p138, %s139, %s140
      %p144 = pneg %p138
      %p145 = scmp.eq.s32.totalorder %s19, 1
      %p146 = por %p144, %p145
      %p147 = scmp.ne.s32.totalorder %s139, %s142
      %p148 = scmp.eq.s32.totalorder %s19, 0
      %p149 = por %p147, %p148
      %p150 = scmp.ne.s32.totalorder %s139, %s142
      %p151 = scmp.eq.s32.totalorder %s24, 1
      %p152 = por %p150, %p151
      %p153 = scmp.ne.s32.totalorder %s142, %s143
      %p154 = scmp.eq.s32.totalorder %s24, 0
      %p155 = por %p153, %p154
      %p156 = scmp.ne.s32.totalorder %s142, %s143
      %p157 = scmp.eq.s32.totalorder %s25, 1
      %p158 = por %p156, %p157
      %p160 = scmp.ne.s32.totalorder %s143, %s159
      %p161 = scmp.eq.s32.totalorder %s25, 0
      %p162 = por %p160, %p161
      %p163 = scmp.le.s32.totalorder 1, %s19
      %p164 = scmp.lt.s32.totalorder %s19, 3
      %p165 = pnand %p163, %p164
      %p166 = pneg %p165
      // Predicated region
      $region9: #{tpu_custom_call.1} parent=5 // pred_check
        _
      $region10: #{tpu_custom_call.1} parent=5 // pred_check_branch
        %168 = sbr.rel (%p165) target = $region12
      $region11: #{tpu_custom_call.1} parent=5 // pred_region
        %s169 = ssub.s32 %s19, 1
        // Predicated region
        $region13: #{tpu_custom_call.1} parent=11 // pred_check
          %p170 = pneg %p66
        $region14: #{tpu_custom_call.1} parent=11 // pred_check_branch
          %172 = sbr.rel (%p170) target = $region16
        $region15: #{tpu_custom_call.1} parent=11 // pred_region
          %174 = vsyncadd [#allocation8], 0
          %s175 = sshll.u32 %s1, 4
          %s176 = int_to_ptr.hbm [resolvable:$true] %s175
          %s177 = sshll.u32 [#allocation7], 4
          %s178 = int_to_ptr.vmem [resolvable:$true] %s177
          %183 = dma.hbm_to_vmem [thread:$0]  %s176, 98304, %s178, [#allocation8], 512, 512, 32
        $region16: #{tpu_custom_call.1} parent=11 // pred_fallthru
          _
        // Predicated region
        $region17: #{tpu_custom_call.1} parent=11 // pred_check
          %p184 = pneg %p87
        $region18: #{tpu_custom_call.1} parent=11 // pred_check_branch
          %186 = sbr.rel (%p184) target = $region20
        $region19: #{tpu_custom_call.1} parent=11 // pred_region
          %188 = vsyncadd [#allocation8], 0
          %s190 = sshll.u32 %s2, 4
          %s191 = int_to_ptr.hbm [resolvable:$true] %s190
          %s192 = sshll.u32 [#allocation9], 4
          %s193 = int_to_ptr.vmem [resolvable:$true] %s192
          %195 = dma.hbm_to_vmem [thread:$0]  %s191, 64, %s193, [#allocation8]
        $region20: #{tpu_custom_call.1} parent=11 // pred_fallthru
          _
        // Predicated region
        $region21: #{tpu_custom_call.1} parent=11 // pred_check
          %p196 = pneg %p108
        $region22: #{tpu_custom_call.1} parent=11 // pred_check_branch
          %198 = sbr.rel (%p196) target = $region24
        $region23: #{tpu_custom_call.1} parent=11 // pred_region
          %200 = vsyncadd [#allocation11], 0
          %s201 = sshll.u32 %s3, 4
          %s202 = int_to_ptr.hbm [resolvable:$true] %s201
          %s203 = sshll.u32 [#allocation10], 4
          %s204 = int_to_ptr.vmem [resolvable:$true] %s203
          %209 = dma.hbm_to_vmem [thread:$0]  %s202, 98304, %s204, [#allocation11], 512, 512, 32
        $region24: #{tpu_custom_call.1} parent=11 // pred_fallthru
          _
        // Predicated region
        $region25: #{tpu_custom_call.1} parent=11 // pred_check
          %p210 = pneg %p129
        $region26: #{tpu_custom_call.1} parent=11 // pred_check_branch
          %212 = sbr.rel (%p210) target = $region28
        $region27: #{tpu_custom_call.1} parent=11 // pred_region
          %214 = vsyncadd [#allocation11], 0
          %s216 = sshll.u32 %s4, 4
          %s217 = int_to_ptr.hbm [resolvable:$true] %s216
          %s218 = sshll.u32 [#allocation12], 4
          %s219 = int_to_ptr.vmem [resolvable:$true] %s218
          %221 = dma.hbm_to_vmem [thread:$0]  %s217, 64, %s219, [#allocation11]
        $region28: #{tpu_custom_call.1} parent=11 // pred_fallthru
          _
      $region12: #{tpu_custom_call.1} parent=5 // pred_fallthru
        _
      %p222 = scmp.lt.s32.totalorder %s19, 2
      // Predicated region
      $region29: #{tpu_custom_call.1} parent=5 // pred_check
        %p223 = pneg %p222
      $region30: #{tpu_custom_call.1} parent=5 // pred_check_branch
        %225 = sbr.rel (%p223) target = $region32
      $region31: #{tpu_custom_call.1} parent=5 // pred_region
        // Predicated region
        $region33: #{tpu_custom_call.1} parent=31 // pred_check
          %p226 = pneg %p39
        $region34: #{tpu_custom_call.1} parent=31 // pred_check_branch
          %228 = sbr.rel (%p226) target = $region36
        $region35: #{tpu_custom_call.1} parent=31 // pred_region
          %s229 = sand.u32 %s29, 1
          %s230 = scalar_lea.sflag [#allocation5], %s229
          %s231 = sand.u32 %s29, 1
          %s232 = smul.addr %s231, 64
          %s233 = scalar_lea.vmem [#allocation4], %s232
          %235 = vsyncadd %s230, 0
          %s236 = smul.addr %s19, 8
          %s237 = smul.addr %s236, 8
          %s238 = scalar_lea.hbm %s0, %s237
          %s239 = sshll.u32 %s238, 4
          %s240 = int_to_ptr.hbm [resolvable:$true] %s239
          %s241 = sshll.u32 %s233, 4
          %s242 = int_to_ptr.vmem [resolvable:$true] %s241
          %247 = dma.hbm_to_vmem [thread:$0]  %s240, 1024, %s242, %s230, 512, 512, 32
        $region36: #{tpu_custom_call.1} parent=31 // pred_fallthru
          _
      $region32: #{tpu_custom_call.1} parent=5 // pred_fallthru
        _
      %p248 = scmp.le.s32.totalorder 1, %s19
      %p249 = scmp.lt.s32.totalorder %s19, 3
      %p250 = pnand %p248, %p249
      %p251 = pneg %p250
      // Predicated region
      $region37: #{tpu_custom_call.1} parent=5 // pred_check
        _
      $region38: #{tpu_custom_call.1} parent=5 // pred_check_branch
        %253 = sbr.rel (%p250) target = $region40
      $region39: #{tpu_custom_call.1} parent=5 // pred_region
        %s254 = ssub.s32 %s19, 1
        %s255 = sand.u32 %s32, 1
        %s256 = scalar_lea.sflag [#allocation5], %s255
        %s257 = sand.u32 %s32, 1
        %s258 = smul.addr %s257, 64
        %s259 = scalar_lea.vmem [#allocation4], %s258
        // Predicated region
        $region41: #{tpu_custom_call.1} parent=39 // pred_check
          %p260 = pneg %p45
        $region42: #{tpu_custom_call.1} parent=39 // pred_check_branch
          %262 = sbr.rel (%p260) target = $region44
        $region43: #{tpu_custom_call.1} parent=39 // pred_region
          %264 = dma.done %s256, 1024
        $region44: #{tpu_custom_call.1} parent=39 // pred_fallthru
          _
        // Predicated region
        $region45: #{tpu_custom_call.1} parent=39 // pred_check
          %p265 = pneg %p66
        $region46: #{tpu_custom_call.1} parent=39 // pred_check_branch
          %267 = sbr.rel (%p265) target = $region48
        $region47: #{tpu_custom_call.1} parent=39 // pred_region
          %269 = dma.done [#allocation8], 98304
        $region48: #{tpu_custom_call.1} parent=39 // pred_fallthru
          _
        // Predicated region
        $region49: #{tpu_custom_call.1} parent=39 // pred_check
          %p270 = pneg %p87
        $region50: #{tpu_custom_call.1} parent=39 // pred_check_branch
          %272 = sbr.rel (%p270) target = $region52
        $region51: #{tpu_custom_call.1} parent=39 // pred_region
          %274 = dma.done [#allocation8], 64
        $region52: #{tpu_custom_call.1} parent=39 // pred_fallthru
          _
        // Predicated region
        $region53: #{tpu_custom_call.1} parent=39 // pred_check
          %p275 = pneg %p108
        $region54: #{tpu_custom_call.1} parent=39 // pred_check_branch
          %277 = sbr.rel (%p275) target = $region56
        $region55: #{tpu_custom_call.1} parent=39 // pred_region
          %279 = dma.done [#allocation11], 98304
        $region56: #{tpu_custom_call.1} parent=39 // pred_fallthru
          _
        // Predicated region
        $region57: #{tpu_custom_call.1} parent=39 // pred_check
          %p280 = pneg %p129
        $region58: #{tpu_custom_call.1} parent=39 // pred_check_branch
          %282 = sbr.rel (%p280) target = $region60
        $region59: #{tpu_custom_call.1} parent=39 // pred_region
          %284 = dma.done [#allocation11], 64
        $region60: #{tpu_custom_call.1} parent=39 // pred_fallthru
          _
        %s285 = sand.u32 %s32, 1
        %s286 = scalar_lea.sflag [#allocation5], %s285
        %s287 = sand.u32 %s32, 1
        %s288 = smul.addr %s287, 64
        %s289 = scalar_lea.vmem [#allocation4], %s288
        %p290 = pneg %p45
        %p291 = pneg %p42
        %p292 = pneg %p66
        %p293 = pneg %p63
        %p294 = pneg %p87
        %p295 = pneg %p84
        %p296 = pneg %p108
        %p297 = pneg %p105
        %p298 = pneg %p129
        %p299 = pneg %p126
        %p300 = pneg %p155
        %p301 = pneg %p152
        %s302 = sand.u32 %s142, 1
        %s303 = scalar_lea.sflag [#allocation6], %s302
        %s304 = sand.u32 %s142, 1
        %s305 = smul.addr %s304, 64
        %s306 = scalar_lea.vmem [#allocation13], %s305
        %v307 = vld [vmem:[#allocation9] sm:$0xf]
        %v308 = vld [vmem:[%s259] sm:$0xff]
        %v309 = vld [vmem:[%s259 + $0x8] sm:$0xff]
        %v310 = vld [vmem:[%s259 + $0x10] sm:$0xff]
        %v311 = vld [vmem:[%s259 + $0x18] sm:$0xff]
        %v312 = vld [vmem:[%s259 + $0x20] sm:$0xff]
        %v313 = vld [vmem:[%s259 + $0x28] sm:$0xff]
        %v314 = vld [vmem:[%s259 + $0x30] sm:$0xff]
        %v315 = vld [vmem:[%s259 + $0x38] sm:$0xff]
        %s316 = scalar_lea.vmem [#allocation7], 2048
        %v317 = vld [vmem:[%s316] sm:$0xff]
        %v318 = vld [vmem:[%s316 + $0x8] sm:$0xff]
        %v319 = vld [vmem:[%s316 + $0x10] sm:$0xff]
        %v320 = vld [vmem:[%s316 + $0x18] sm:$0xff]
        %v321 = vld [vmem:[%s316 + $0x20] sm:$0xff]
        %v322 = vld [vmem:[%s316 + $0x28] sm:$0xff]
        %v323 = vld [vmem:[%s316 + $0x30] sm:$0xff]
        %v324 = vld [vmem:[%s316 + $0x38] sm:$0xff]
        %v325 = vld [vmem:[%s316 + $0x40] sm:$0xff]
        %v326 = vld [vmem:[%s316 + $0x48] sm:$0xff]
        %v327 = vld [vmem:[%s316 + $0x50] sm:$0xff]
        %v328 = vld [vmem:[%s316 + $0x58] sm:$0xff]
        %v329 = vld [vmem:[%s316 + $0x60] sm:$0xff]
        %v330 = vld [vmem:[%s316 + $0x68] sm:$0xff]
        %v331 = vld [vmem:[%s316 + $0x70] sm:$0xff]
        %v332 = vld [vmem:[%s316 + $0x78] sm:$0xff]
        %v333 = vld [vmem:[%s316 + $0x80] sm:$0xff]
        %v334 = vld [vmem:[%s316 + $0x88] sm:$0xff]
        %v335 = vld [vmem:[%s316 + $0x90] sm:$0xff]
        %v336 = vld [vmem:[%s316 + $0x98] sm:$0xff]
        %v337 = vld [vmem:[%s316 + $0xa0] sm:$0xff]
        %v338 = vld [vmem:[%s316 + $0xa8] sm:$0xff]
        %v339 = vld [vmem:[%s316 + $0xb0] sm:$0xff]
        %v340 = vld [vmem:[%s316 + $0xb8] sm:$0xff]
        %v341 = vld [vmem:[%s316 + $0xc0] sm:$0xff]
        %v342 = vld [vmem:[%s316 + $0xc8] sm:$0xff]
        %v343 = vld [vmem:[%s316 + $0xd0] sm:$0xff]
        %v344 = vld [vmem:[%s316 + $0xd8] sm:$0xff]
        %v345 = vld [vmem:[%s316 + $0xe0] sm:$0xff]
        %v346 = vld [vmem:[%s316 + $0xe8] sm:$0xff]
        %v347 = vld [vmem:[%s316 + $0xf0] sm:$0xff]
        %v348 = vld [vmem:[%s316 + $0xf8] sm:$0xff]
        %v349 = vld [vmem:[%s316 + $0x100] sm:$0xff]
        %v350 = vld [vmem:[%s316 + $0x108] sm:$0xff]
        %v351 = vld [vmem:[%s316 + $0x110] sm:$0xff]
        %v352 = vld [vmem:[%s316 + $0x118] sm:$0xff]
        %v353 = vld [vmem:[%s316 + $0x120] sm:$0xff]
        %v354 = vld [vmem:[%s316 + $0x128] sm:$0xff]
        %v355 = vld [vmem:[%s316 + $0x130] sm:$0xff]
        %v356 = vld [vmem:[%s316 + $0x138] sm:$0xff]
        %v357 = vld [vmem:[%s316 + $0x140] sm:$0xff]
        %v358 = vld [vmem:[%s316 + $0x148] sm:$0xff]
        %v359 = vld [vmem:[%s316 + $0x150] sm:$0xff]
        %v360 = vld [vmem:[%s316 + $0x158] sm:$0xff]
        %v361 = vld [vmem:[%s316 + $0x160] sm:$0xff]
        %v362 = vld [vmem:[%s316 + $0x168] sm:$0xff]
        %v363 = vld [vmem:[%s316 + $0x170] sm:$0xff]
        %v364 = vld [vmem:[%s316 + $0x178] sm:$0xff]
        %v365 = vld [vmem:[%s316 + $0x180] sm:$0xff]
        %v366 = vld [vmem:[%s316 + $0x188] sm:$0xff]
        %v367 = vld [vmem:[%s316 + $0x190] sm:$0xff]
        %v368 = vld [vmem:[%s316 + $0x198] sm:$0xff]
        %v369 = vld [vmem:[%s316 + $0x1a0] sm:$0xff]
        %v370 = vld [vmem:[%s316 + $0x1a8] sm:$0xff]
        %v371 = vld [vmem:[%s316 + $0x1b0] sm:$0xff]
        %v372 = vld [vmem:[%s316 + $0x1b8] sm:$0xff]
        %v373 = vld [vmem:[%s316 + $0x1c0] sm:$0xff]
        %v374 = vld [vmem:[%s316 + $0x1c8] sm:$0xff]
        %v375 = vld [vmem:[%s316 + $0x1d0] sm:$0xff]
        %v376 = vld [vmem:[%s316 + $0x1d8] sm:$0xff]
        %v377 = vld [vmem:[%s316 + $0x1e0] sm:$0xff]
        %v378 = vld [vmem:[%s316 + $0x1e8] sm:$0xff]
        %v379 = vld [vmem:[%s316 + $0x1f0] sm:$0xff]
        %v380 = vld [vmem:[%s316 + $0x1f8] sm:$0xff]
        %v381 = vld [vmem:[%s316 + $0x200] sm:$0xff]
        %v382 = vld [vmem:[%s316 + $0x208] sm:$0xff]
        %v383 = vld [vmem:[%s316 + $0x210] sm:$0xff]
        %v384 = vld [vmem:[%s316 + $0x218] sm:$0xff]
        %v385 = vld [vmem:[%s316 + $0x220] sm:$0xff]
        %v386 = vld [vmem:[%s316 + $0x228] sm:$0xff]
        %v387 = vld [vmem:[%s316 + $0x230] sm:$0xff]
        %v388 = vld [vmem:[%s316 + $0x238] sm:$0xff]
        %v389 = vld [vmem:[%s316 + $0x240] sm:$0xff]
        %v390 = vld [vmem:[%s316 + $0x248] sm:$0xff]
        %v391 = vld [vmem:[%s316 + $0x250] sm:$0xff]
        %v392 = vld [vmem:[%s316 + $0x258] sm:$0xff]
        %v393 = vld [vmem:[%s316 + $0x260] sm:$0xff]
        %v394 = vld [vmem:[%s316 + $0x268] sm:$0xff]
        %v395 = vld [vmem:[%s316 + $0x270] sm:$0xff]
        %v396 = vld [vmem:[%s316 + $0x278] sm:$0xff]
        %v397 = vld [vmem:[%s316 + $0x280] sm:$0xff]
        %v398 = vld [vmem:[%s316 + $0x288] sm:$0xff]
        %v399 = vld [vmem:[%s316 + $0x290] sm:$0xff]
        %v400 = vld [vmem:[%s316 + $0x298] sm:$0xff]
        %v401 = vld [vmem:[%s316 + $0x2a0] sm:$0xff]
        %v402 = vld [vmem:[%s316 + $0x2a8] sm:$0xff]
        %v403 = vld [vmem:[%s316 + $0x2b0] sm:$0xff]
        %v404 = vld [vmem:[%s316 + $0x2b8] sm:$0xff]
        %v405 = vld [vmem:[%s316 + $0x2c0] sm:$0xff]
        %v406 = vld [vmem:[%s316 + $0x2c8] sm:$0xff]
        %v407 = vld [vmem:[%s316 + $0x2d0] sm:$0xff]
        %v408 = vld [vmem:[%s316 + $0x2d8] sm:$0xff]
        %v409 = vld [vmem:[%s316 + $0x2e0] sm:$0xff]
        %v410 = vld [vmem:[%s316 + $0x2e8] sm:$0xff]
        %v411 = vld [vmem:[%s316 + $0x2f0] sm:$0xff]
        %v412 = vld [vmem:[%s316 + $0x2f8] sm:$0xff]
        %v413 = vld [vmem:[%s316 + $0x300] sm:$0xff]
        %v414 = vld [vmem:[%s316 + $0x308] sm:$0xff]
        %v415 = vld [vmem:[%s316 + $0x310] sm:$0xff]
        %v416 = vld [vmem:[%s316 + $0x318] sm:$0xff]
        %v417 = vld [vmem:[%s316 + $0x320] sm:$0xff]
        %v418 = vld [vmem:[%s316 + $0x328] sm:$0xff]
        %v419 = vld [vmem:[%s316 + $0x330] sm:$0xff]
        %v420 = vld [vmem:[%s316 + $0x338] sm:$0xff]
        %v421 = vld [vmem:[%s316 + $0x340] sm:$0xff]
        %v422 = vld [vmem:[%s316 + $0x348] sm:$0xff]
        %v423 = vld [vmem:[%s316 + $0x350] sm:$0xff]
        %v424 = vld [vmem:[%s316 + $0x358] sm:$0xff]
        %v425 = vld [vmem:[%s316 + $0x360] sm:$0xff]
        %v426 = vld [vmem:[%s316 + $0x368] sm:$0xff]
        %v427 = vld [vmem:[%s316 + $0x370] sm:$0xff]
        %v428 = vld [vmem:[%s316 + $0x378] sm:$0xff]
        %v429 = vld [vmem:[%s316 + $0x380] sm:$0xff]
        %v430 = vld [vmem:[%s316 + $0x388] sm:$0xff]
        %v431 = vld [vmem:[%s316 + $0x390] sm:$0xff]
        %v432 = vld [vmem:[%s316 + $0x398] sm:$0xff]
        %v433 = vld [vmem:[%s316 + $0x3a0] sm:$0xff]
        %v434 = vld [vmem:[%s316 + $0x3a8] sm:$0xff]
        %v435 = vld [vmem:[%s316 + $0x3b0] sm:$0xff]
        %v436 = vld [vmem:[%s316 + $0x3b8] sm:$0xff]
        %v437 = vld [vmem:[%s316 + $0x3c0] sm:$0xff]
        %v438 = vld [vmem:[%s316 + $0x3c8] sm:$0xff]
        %v439 = vld [vmem:[%s316 + $0x3d0] sm:$0xff]
        %v440 = vld [vmem:[%s316 + $0x3d8] sm:$0xff]
        %v441 = vld [vmem:[%s316 + $0x3e0] sm:$0xff]
        %v442 = vld [vmem:[%s316 + $0x3e8] sm:$0xff]
        %v443 = vld [vmem:[%s316 + $0x3f0] sm:$0xff]
        %v444 = vld [vmem:[%s316 + $0x3f8] sm:$0xff]
        %v445 = vld [vmem:[%s316 + $0x400] sm:$0xff]
        %v446 = vld [vmem:[%s316 + $0x408] sm:$0xff]
        %v447 = vld [vmem:[%s316 + $0x410] sm:$0xff]
        %v448 = vld [vmem:[%s316 + $0x418] sm:$0xff]
        %v449 = vld [vmem:[%s316 + $0x420] sm:$0xff]
        %v450 = vld [vmem:[%s316 + $0x428] sm:$0xff]
        %v451 = vld [vmem:[%s316 + $0x430] sm:$0xff]
        %v452 = vld [vmem:[%s316 + $0x438] sm:$0xff]
        %v453 = vld [vmem:[%s316 + $0x440] sm:$0xff]
        %v454 = vld [vmem:[%s316 + $0x448] sm:$0xff]
        %v455 = vld [vmem:[%s316 + $0x450] sm:$0xff]
        %v456 = vld [vmem:[%s316 + $0x458] sm:$0xff]
        %v457 = vld [vmem:[%s316 + $0x460] sm:$0xff]
        %v458 = vld [vmem:[%s316 + $0x468] sm:$0xff]
        %v459 = vld [vmem:[%s316 + $0x470] sm:$0xff]
        %v460 = vld [vmem:[%s316 + $0x478] sm:$0xff]
        %v461 = vld [vmem:[%s316 + $0x480] sm:$0xff]
        %v462 = vld [vmem:[%s316 + $0x488] sm:$0xff]
        %v463 = vld [vmem:[%s316 + $0x490] sm:$0xff]
        %v464 = vld [vmem:[%s316 + $0x498] sm:$0xff]
        %v465 = vld [vmem:[%s316 + $0x4a0] sm:$0xff]
        %v466 = vld [vmem:[%s316 + $0x4a8] sm:$0xff]
        %v467 = vld [vmem:[%s316 + $0x4b0] sm:$0xff]
        %v468 = vld [vmem:[%s316 + $0x4b8] sm:$0xff]
        %v469 = vld [vmem:[%s316 + $0x4c0] sm:$0xff]
        %v470 = vld [vmem:[%s316 + $0x4c8] sm:$0xff]
        %v471 = vld [vmem:[%s316 + $0x4d0] sm:$0xff]
        %v472 = vld [vmem:[%s316 + $0x4d8] sm:$0xff]
        %v473 = vld [vmem:[%s316 + $0x4e0] sm:$0xff]
        %v474 = vld [vmem:[%s316 + $0x4e8] sm:$0xff]
        %v475 = vld [vmem:[%s316 + $0x4f0] sm:$0xff]
        %v476 = vld [vmem:[%s316 + $0x4f8] sm:$0xff]
        %v477 = vld [vmem:[%s316 + $0x500] sm:$0xff]
        %v478 = vld [vmem:[%s316 + $0x508] sm:$0xff]
        %v479 = vld [vmem:[%s316 + $0x510] sm:$0xff]
        %v480 = vld [vmem:[%s316 + $0x518] sm:$0xff]
        %v481 = vld [vmem:[%s316 + $0x520] sm:$0xff]
        %v482 = vld [vmem:[%s316 + $0x528] sm:$0xff]
        %v483 = vld [vmem:[%s316 + $0x530] sm:$0xff]
        %v484 = vld [vmem:[%s316 + $0x538] sm:$0xff]
        %v485 = vld [vmem:[%s316 + $0x540] sm:$0xff]
        %v486 = vld [vmem:[%s316 + $0x548] sm:$0xff]
        %v487 = vld [vmem:[%s316 + $0x550] sm:$0xff]
        %v488 = vld [vmem:[%s316 + $0x558] sm:$0xff]
        %v489 = vld [vmem:[%s316 + $0x560] sm:$0xff]
        %v490 = vld [vmem:[%s316 + $0x568] sm:$0xff]
        %v491 = vld [vmem:[%s316 + $0x570] sm:$0xff]
        %v492 = vld [vmem:[%s316 + $0x578] sm:$0xff]
        %v493 = vld [vmem:[%s316 + $0x580] sm:$0xff]
        %v494 = vld [vmem:[%s316 + $0x588] sm:$0xff]
        %v495 = vld [vmem:[%s316 + $0x590] sm:$0xff]
        %v496 = vld [vmem:[%s316 + $0x598] sm:$0xff]
        %v497 = vld [vmem:[%s316 + $0x5a0] sm:$0xff]
        %v498 = vld [vmem:[%s316 + $0x5a8] sm:$0xff]
        %v499 = vld [vmem:[%s316 + $0x5b0] sm:$0xff]
        %v500 = vld [vmem:[%s316 + $0x5b8] sm:$0xff]
        %v501 = vld [vmem:[%s316 + $0x5c0] sm:$0xff]
        %v502 = vld [vmem:[%s316 + $0x5c8] sm:$0xff]
        %v503 = vld [vmem:[%s316 + $0x5d0] sm:$0xff]
        %v504 = vld [vmem:[%s316 + $0x5d8] sm:$0xff]
        %v505 = vld [vmem:[%s316 + $0x5e0] sm:$0xff]
        %v506 = vld [vmem:[%s316 + $0x5e8] sm:$0xff]
        %v507 = vld [vmem:[%s316 + $0x5f0] sm:$0xff]
        %v508 = vld [vmem:[%s316 + $0x5f8] sm:$0xff]
        %v509 = vld [vmem:[%s316 + $0x600] sm:$0xff]
        %v510 = vld [vmem:[%s316 + $0x608] sm:$0xff]
        %v511 = vld [vmem:[%s316 + $0x610] sm:$0xff]
        %v512 = vld [vmem:[%s316 + $0x618] sm:$0xff]
        %v513 = vld [vmem:[%s316 + $0x620] sm:$0xff]
        %v514 = vld [vmem:[%s316 + $0x628] sm:$0xff]
        %v515 = vld [vmem:[%s316 + $0x630] sm:$0xff]
        %v516 = vld [vmem:[%s316 + $0x638] sm:$0xff]
        %v517 = vld [vmem:[%s316 + $0x640] sm:$0xff]
        %v518 = vld [vmem:[%s316 + $0x648] sm:$0xff]
        %v519 = vld [vmem:[%s316 + $0x650] sm:$0xff]
        %v520 = vld [vmem:[%s316 + $0x658] sm:$0xff]
        %v521 = vld [vmem:[%s316 + $0x660] sm:$0xff]
        %v522 = vld [vmem:[%s316 + $0x668] sm:$0xff]
        %v523 = vld [vmem:[%s316 + $0x670] sm:$0xff]
        %v524 = vld [vmem:[%s316 + $0x678] sm:$0xff]
        %v525 = vld [vmem:[%s316 + $0x680] sm:$0xff]
        %v526 = vld [vmem:[%s316 + $0x688] sm:$0xff]
        %v527 = vld [vmem:[%s316 + $0x690] sm:$0xff]
        %v528 = vld [vmem:[%s316 + $0x698] sm:$0xff]
        %v529 = vld [vmem:[%s316 + $0x6a0] sm:$0xff]
        %v530 = vld [vmem:[%s316 + $0x6a8] sm:$0xff]
        %v531 = vld [vmem:[%s316 + $0x6b0] sm:$0xff]
        %v532 = vld [vmem:[%s316 + $0x6b8] sm:$0xff]
        %v533 = vld [vmem:[%s316 + $0x6c0] sm:$0xff]
        %v534 = vld [vmem:[%s316 + $0x6c8] sm:$0xff]
        %v535 = vld [vmem:[%s316 + $0x6d0] sm:$0xff]
        %v536 = vld [vmem:[%s316 + $0x6d8] sm:$0xff]
        %v537 = vld [vmem:[%s316 + $0x6e0] sm:$0xff]
        %v538 = vld [vmem:[%s316 + $0x6e8] sm:$0xff]
        %v539 = vld [vmem:[%s316 + $0x6f0] sm:$0xff]
        %v540 = vld [vmem:[%s316 + $0x6f8] sm:$0xff]
        %v541 = vld [vmem:[%s316 + $0x700] sm:$0xff]
        %v542 = vld [vmem:[%s316 + $0x708] sm:$0xff]
        %v543 = vld [vmem:[%s316 + $0x710] sm:$0xff]
        %v544 = vld [vmem:[%s316 + $0x718] sm:$0xff]
        %v545 = vld [vmem:[%s316 + $0x720] sm:$0xff]
        %v546 = vld [vmem:[%s316 + $0x728] sm:$0xff]
        %v547 = vld [vmem:[%s316 + $0x730] sm:$0xff]
        %v548 = vld [vmem:[%s316 + $0x738] sm:$0xff]
        %v549 = vld [vmem:[%s316 + $0x740] sm:$0xff]
        %v550 = vld [vmem:[%s316 + $0x748] sm:$0xff]
        %v551 = vld [vmem:[%s316 + $0x750] sm:$0xff]
        %v552 = vld [vmem:[%s316 + $0x758] sm:$0xff]
        %v553 = vld [vmem:[%s316 + $0x760] sm:$0xff]
        %v554 = vld [vmem:[%s316 + $0x768] sm:$0xff]
        %v555 = vld [vmem:[%s316 + $0x770] sm:$0xff]
        %v556 = vld [vmem:[%s316 + $0x778] sm:$0xff]
        %v557 = vld [vmem:[%s316 + $0x780] sm:$0xff]
        %v558 = vld [vmem:[%s316 + $0x788] sm:$0xff]
        %v559 = vld [vmem:[%s316 + $0x790] sm:$0xff]
        %v560 = vld [vmem:[%s316 + $0x798] sm:$0xff]
        %v561 = vld [vmem:[%s316 + $0x7a0] sm:$0xff]
        %v562 = vld [vmem:[%s316 + $0x7a8] sm:$0xff]
        %v563 = vld [vmem:[%s316 + $0x7b0] sm:$0xff]
        %v564 = vld [vmem:[%s316 + $0x7b8] sm:$0xff]
        %v565 = vld [vmem:[%s316 + $0x7c0] sm:$0xff]
        %v566 = vld [vmem:[%s316 + $0x7c8] sm:$0xff]
        %v567 = vld [vmem:[%s316 + $0x7d0] sm:$0xff]
        %v568 = vld [vmem:[%s316 + $0x7d8] sm:$0xff]
        %v569 = vld [vmem:[%s316 + $0x7e0] sm:$0xff]
        %v570 = vld [vmem:[%s316 + $0x7e8] sm:$0xff]
        %v571 = vld [vmem:[%s316 + $0x7f0] sm:$0xff]
        %v572 = vld [vmem:[%s316 + $0x7f8] sm:$0xff]
        %v574 = vperm.slane %v307, 0
        %v575 = vperm.slane %v307, 1
        %v576 = vperm.slane %v307, 2
        %v577 = vperm.slane %v307, 3
        %582 = vmatpush.msra.mxu0 %v377
        %583 = vmatpush.msra.mxu0 %v373
        %584 = vmatpush.msra.mxu0 %v369
        %585 = vmatpush.msra.mxu0 %v365
        %586 = vmatpush.msra.mxu0 %v361
        %587 = vmatpush.msra.mxu0 %v357
        %588 = vmatpush.msra.mxu0 %v353
        %589 = vmatpush.msra.mxu0 %v349
        %590 = vmatpush.msra.mxu0 %v345
        %591 = vmatpush.msra.mxu0 %v341
        %592 = vmatpush.msra.mxu0 %v337
        %593 = vmatpush.msra.mxu0 %v333
        %594 = vmatpush.msra.mxu0 %v329
        %595 = vmatpush.msra.mxu0 %v325
        %596 = vmatpush.msra.mxu0 %v321
        %597 = vmatpush.msra.mxu0 %v317
        %598 = vmatmul.f32.gmra.mxu0 %v308
        %v599 = vpop.f32.mrf.mxu0
        %v600 = vadd.f32 %v574, %v599
        %601 = vmatmul.f32.gmra.mxu0 %v312
        %v602 = vpop.f32.mrf.mxu0
        %v603 = vadd.f32 %v574, %v602
        %604 = vdwg.mxu0
        %605 = vmatpush.msra.mxu0 %v441
        %606 = vmatpush.msra.mxu0 %v437
        %607 = vmatpush.msra.mxu0 %v433
        %608 = vmatpush.msra.mxu0 %v429
        %609 = vmatpush.msra.mxu0 %v425
        %610 = vmatpush.msra.mxu0 %v421
        %611 = vmatpush.msra.mxu0 %v417
        %612 = vmatpush.msra.mxu0 %v413
        %613 = vmatpush.msra.mxu0 %v409
        %614 = vmatpush.msra.mxu0 %v405
        %615 = vmatpush.msra.mxu0 %v401
        %616 = vmatpush.msra.mxu0 %v397
        %617 = vmatpush.msra.mxu0 %v393
        %618 = vmatpush.msra.mxu0 %v389
        %619 = vmatpush.msra.mxu0 %v385
        %620 = vmatpush.msra.mxu0 %v381
        %621 = vmatmul.f32.gmra.mxu0 %v309
        %v622 = vpop.f32.mrf.mxu0
        %v623 = vadd.f32 %v600, %v622
        %624 = vmatmul.f32.gmra.mxu0 %v313
        %v625 = vpop.f32.mrf.mxu0
        %v626 = vadd.f32 %v603, %v625
        %627 = vdwg.mxu0
        %628 = vmatpush.msra.mxu0 %v505
        %629 = vmatpush.msra.mxu0 %v501
        %630 = vmatpush.msra.mxu0 %v497
        %631 = vmatpush.msra.mxu0 %v493
        %632 = vmatpush.msra.mxu0 %v489
        %633 = vmatpush.msra.mxu0 %v485
        %634 = vmatpush.msra.mxu0 %v481
        %635 = vmatpush.msra.mxu0 %v477
        %636 = vmatpush.msra.mxu0 %v473
        %637 = vmatpush.msra.mxu0 %v469
        %638 = vmatpush.msra.mxu0 %v465
        %639 = vmatpush.msra.mxu0 %v461
        %640 = vmatpush.msra.mxu0 %v457
        %641 = vmatpush.msra.mxu0 %v453
        %642 = vmatpush.msra.mxu0 %v449
        %643 = vmatpush.msra.mxu0 %v445
        %644 = vmatmul.f32.gmra.mxu0 %v310
        %v645 = vpop.f32.mrf.mxu0
        %v646 = vadd.f32 %v623, %v645
        %647 = vmatmul.f32.gmra.mxu0 %v314
        %v648 = vpop.f32.mrf.mxu0
        %v649 = vadd.f32 %v626, %v648
        %650 = vdwg.mxu0
        %651 = vmatpush.msra.mxu0 %v569
        %652 = vmatpush.msra.mxu0 %v565
        %653 = vmatpush.msra.mxu0 %v561
        %654 = vmatpush.msra.mxu0 %v557
        %655 = vmatpush.msra.mxu0 %v553
        %656 = vmatpush.msra.mxu0 %v549
        %657 = vmatpush.msra.mxu0 %v545
        %658 = vmatpush.msra.mxu0 %v541
        %659 = vmatpush.msra.mxu0 %v537
        %660 = vmatpush.msra.mxu0 %v533
        %661 = vmatpush.msra.mxu0 %v529
        %662 = vmatpush.msra.mxu0 %v525
        %663 = vmatpush.msra.mxu0 %v521
        %664 = vmatpush.msra.mxu0 %v517
        %665 = vmatpush.msra.mxu0 %v513
        %666 = vmatpush.msra.mxu0 %v509
        %667 = vmatmul.f32.gmra.mxu0 %v311
        %v668 = vpop.f32.mrf.mxu0
        %v669 = vadd.f32 %v646, %v668
        %670 = vmatmul.f32.gmra.mxu0 %v315
        %v671 = vpop.f32.mrf.mxu0
        %v672 = vadd.f32 %v649, %v671
        %673 = vdwg.mxu0
        %674 = vmatpush.msra.mxu0 %v378
        %675 = vmatpush.msra.mxu0 %v374
        %676 = vmatpush.msra.mxu0 %v370
        %677 = vmatpush.msra.mxu0 %v366
        %678 = vmatpush.msra.mxu0 %v362
        %679 = vmatpush.msra.mxu0 %v358
        %680 = vmatpush.msra.mxu0 %v354
        %681 = vmatpush.msra.mxu0 %v350
        %682 = vmatpush.msra.mxu0 %v346
        %683 = vmatpush.msra.mxu0 %v342
        %684 = vmatpush.msra.mxu0 %v338
        %685 = vmatpush.msra.mxu0 %v334
        %686 = vmatpush.msra.mxu0 %v330
        %687 = vmatpush.msra.mxu0 %v326
        %688 = vmatpush.msra.mxu0 %v322
        %689 = vmatpush.msra.mxu0 %v318
        %690 = vmatmul.f32.gmra.mxu0 %v308
        %v691 = vpop.f32.mrf.mxu0
        %v692 = vadd.f32 %v575, %v691
        %693 = vmatmul.f32.gmra.mxu0 %v312
        %v694 = vpop.f32.mrf.mxu0
        %v695 = vadd.f32 %v575, %v694
        %696 = vdwg.mxu0
        %697 = vmatpush.msra.mxu0 %v442
        %698 = vmatpush.msra.mxu0 %v438
        %699 = vmatpush.msra.mxu0 %v434
        %700 = vmatpush.msra.mxu0 %v430
        %701 = vmatpush.msra.mxu0 %v426
        %702 = vmatpush.msra.mxu0 %v422
        %703 = vmatpush.msra.mxu0 %v418
        %704 = vmatpush.msra.mxu0 %v414
        %705 = vmatpush.msra.mxu0 %v410
        %706 = vmatpush.msra.mxu0 %v406
        %707 = vmatpush.msra.mxu0 %v402
        %708 = vmatpush.msra.mxu0 %v398
        %709 = vmatpush.msra.mxu0 %v394
        %710 = vmatpush.msra.mxu0 %v390
        %711 = vmatpush.msra.mxu0 %v386
        %712 = vmatpush.msra.mxu0 %v382
        %713 = vmatmul.f32.gmra.mxu0 %v309
        %v714 = vpop.f32.mrf.mxu0
        %v715 = vadd.f32 %v692, %v714
        %716 = vmatmul.f32.gmra.mxu0 %v313
        %v717 = vpop.f32.mrf.mxu0
        %v718 = vadd.f32 %v695, %v717
        %719 = vdwg.mxu0
        %720 = vmatpush.msra.mxu0 %v506
        %721 = vmatpush.msra.mxu0 %v502
        %722 = vmatpush.msra.mxu0 %v498
        %723 = vmatpush.msra.mxu0 %v494
        %724 = vmatpush.msra.mxu0 %v490
        %725 = vmatpush.msra.mxu0 %v486
        %726 = vmatpush.msra.mxu0 %v482
        %727 = vmatpush.msra.mxu0 %v478
        %728 = vmatpush.msra.mxu0 %v474
        %729 = vmatpush.msra.mxu0 %v470
        %730 = vmatpush.msra.mxu0 %v466
        %731 = vmatpush.msra.mxu0 %v462
        %732 = vmatpush.msra.mxu0 %v458
        %733 = vmatpush.msra.mxu0 %v454
        %734 = vmatpush.msra.mxu0 %v450
        %735 = vmatpush.msra.mxu0 %v446
        %736 = vmatmul.f32.gmra.mxu0 %v310
        %v737 = vpop.f32.mrf.mxu0
        %v738 = vadd.f32 %v715, %v737
        %739 = vmatmul.f32.gmra.mxu0 %v314
        %v740 = vpop.f32.mrf.mxu0
        %v741 = vadd.f32 %v718, %v740
        %742 = vdwg.mxu0
        %743 = vmatpush.msra.mxu0 %v570
        %744 = vmatpush.msra.mxu0 %v566
        %745 = vmatpush.msra.mxu0 %v562
        %746 = vmatpush.msra.mxu0 %v558
        %747 = vmatpush.msra.mxu0 %v554
        %748 = vmatpush.msra.mxu0 %v550
        %749 = vmatpush.msra.mxu0 %v546
        %750 = vmatpush.msra.mxu0 %v542
        %751 = vmatpush.msra.mxu0 %v538
        %752 = vmatpush.msra.mxu0 %v534
        %753 = vmatpush.msra.mxu0 %v530
        %754 = vmatpush.msra.mxu0 %v526
        %755 = vmatpush.msra.mxu0 %v522
        %756 = vmatpush.msra.mxu0 %v518
        %757 = vmatpush.msra.mxu0 %v514
        %758 = vmatpush.msra.mxu0 %v510
        %759 = vmatmul.f32.gmra.mxu0 %v311
        %v760 = vpop.f32.mrf.mxu0
        %v761 = vadd.f32 %v738, %v760
        %762 = vmatmul.f32.gmra.mxu0 %v315
        %v763 = vpop.f32.mrf.mxu0
        %v764 = vadd.f32 %v741, %v763
        %765 = vdwg.mxu0
        %766 = vmatpush.msra.mxu0 %v379
        %767 = vmatpush.msra.mxu0 %v375
        %768 = vmatpush.msra.mxu0 %v371
        %769 = vmatpush.msra.mxu0 %v367
        %770 = vmatpush.msra.mxu0 %v363
        %771 = vmatpush.msra.mxu0 %v359
        %772 = vmatpush.msra.mxu0 %v355
        %773 = vmatpush.msra.mxu0 %v351
        %774 = vmatpush.msra.mxu0 %v347
        %775 = vmatpush.msra.mxu0 %v343
        %776 = vmatpush.msra.mxu0 %v339
        %777 = vmatpush.msra.mxu0 %v335
        %778 = vmatpush.msra.mxu0 %v331
        %779 = vmatpush.msra.mxu0 %v327
        %780 = vmatpush.msra.mxu0 %v323
        %781 = vmatpush.msra.mxu0 %v319
        %782 = vmatmul.f32.gmra.mxu0 %v308
        %v783 = vpop.f32.mrf.mxu0
        %v784 = vadd.f32 %v576, %v783
        %785 = vmatmul.f32.gmra.mxu0 %v312
        %v786 = vpop.f32.mrf.mxu0
        %v787 = vadd.f32 %v576, %v786
        %788 = vdwg.mxu0
        %789 = vmatpush.msra.mxu0 %v443
        %790 = vmatpush.msra.mxu0 %v439
        %791 = vmatpush.msra.mxu0 %v435
        %792 = vmatpush.msra.mxu0 %v431
        %793 = vmatpush.msra.mxu0 %v427
        %794 = vmatpush.msra.mxu0 %v423
        %795 = vmatpush.msra.mxu0 %v419
        %796 = vmatpush.msra.mxu0 %v415
        %797 = vmatpush.msra.mxu0 %v411
        %798 = vmatpush.msra.mxu0 %v407
        %799 = vmatpush.msra.mxu0 %v403
        %800 = vmatpush.msra.mxu0 %v399
        %801 = vmatpush.msra.mxu0 %v395
        %802 = vmatpush.msra.mxu0 %v391
        %803 = vmatpush.msra.mxu0 %v387
        %804 = vmatpush.msra.mxu0 %v383
        %805 = vmatmul.f32.gmra.mxu0 %v309
        %v806 = vpop.f32.mrf.mxu0
        %v807 = vadd.f32 %v784, %v806
        %808 = vmatmul.f32.gmra.mxu0 %v313
        %v809 = vpop.f32.mrf.mxu0
        %v810 = vadd.f32 %v787, %v809
        %811 = vdwg.mxu0
        %812 = vmatpush.msra.mxu0 %v507
        %813 = vmatpush.msra.mxu0 %v503
        %814 = vmatpush.msra.mxu0 %v499
        %815 = vmatpush.msra.mxu0 %v495
        %816 = vmatpush.msra.mxu0 %v491
        %817 = vmatpush.msra.mxu0 %v487
        %818 = vmatpush.msra.mxu0 %v483
        %819 = vmatpush.msra.mxu0 %v479
        %820 = vmatpush.msra.mxu0 %v475
        %821 = vmatpush.msra.mxu0 %v471
        %822 = vmatpush.msra.mxu0 %v467
        %823 = vmatpush.msra.mxu0 %v463
        %824 = vmatpush.msra.mxu0 %v459
        %825 = vmatpush.msra.mxu0 %v455
        %826 = vmatpush.msra.mxu0 %v451
        %827 = vmatpush.msra.mxu0 %v447
        %828 = vmatmul.f32.gmra.mxu0 %v310
        %v829 = vpop.f32.mrf.mxu0
        %v830 = vadd.f32 %v807, %v829
        %831 = vmatmul.f32.gmra.mxu0 %v314
        %v832 = vpop.f32.mrf.mxu0
        %v833 = vadd.f32 %v810, %v832
        %834 = vdwg.mxu0
        %835 = vmatpush.msra.mxu0 %v571
        %836 = vmatpush.msra.mxu0 %v567
        %837 = vmatpush.msra.mxu0 %v563
        %838 = vmatpush.msra.mxu0 %v559
        %839 = vmatpush.msra.mxu0 %v555
        %840 = vmatpush.msra.mxu0 %v551
        %841 = vmatpush.msra.mxu0 %v547
        %842 = vmatpush.msra.mxu0 %v543
        %843 = vmatpush.msra.mxu0 %v539
        %844 = vmatpush.msra.mxu0 %v535
        %845 = vmatpush.msra.mxu0 %v531
        %846 = vmatpush.msra.mxu0 %v527
        %847 = vmatpush.msra.mxu0 %v523
        %848 = vmatpush.msra.mxu0 %v519
        %849 = vmatpush.msra.mxu0 %v515
        %850 = vmatpush.msra.mxu0 %v511
        %851 = vmatmul.f32.gmra.mxu0 %v311
        %v852 = vpop.f32.mrf.mxu0
        %v853 = vadd.f32 %v830, %v852
        %854 = vmatmul.f32.gmra.mxu0 %v315
        %v855 = vpop.f32.mrf.mxu0
        %v856 = vadd.f32 %v833, %v855
        %857 = vdwg.mxu0
        %858 = vmatpush.msra.mxu0 %v380
        %859 = vmatpush.msra.mxu0 %v376
        %860 = vmatpush.msra.mxu0 %v372
        %861 = vmatpush.msra.mxu0 %v368
        %862 = vmatpush.msra.mxu0 %v364
        %863 = vmatpush.msra.mxu0 %v360
        %864 = vmatpush.msra.mxu0 %v356
        %865 = vmatpush.msra.mxu0 %v352
        %866 = vmatpush.msra.mxu0 %v348
        %867 = vmatpush.msra.mxu0 %v344
        %868 = vmatpush.msra.mxu0 %v340
        %869 = vmatpush.msra.mxu0 %v336
        %870 = vmatpush.msra.mxu0 %v332
        %871 = vmatpush.msra.mxu0 %v328
        %872 = vmatpush.msra.mxu0 %v324
        %873 = vmatpush.msra.mxu0 %v320
        %874 = vmatmul.f32.gmra.mxu0 %v308
        %v875 = vpop.f32.mrf.mxu0
        %v876 = vadd.f32 %v577, %v875
        %877 = vmatmul.f32.gmra.mxu0 %v312
        %v878 = vpop.f32.mrf.mxu0
        %v879 = vadd.f32 %v577, %v878
        %880 = vdwg.mxu0
        %881 = vmatpush.msra.mxu0 %v444
        %882 = vmatpush.msra.mxu0 %v440
        %883 = vmatpush.msra.mxu0 %v436
        %884 = vmatpush.msra.mxu0 %v432
        %885 = vmatpush.msra.mxu0 %v428
        %886 = vmatpush.msra.mxu0 %v424
        %887 = vmatpush.msra.mxu0 %v420
        %888 = vmatpush.msra.mxu0 %v416
        %889 = vmatpush.msra.mxu0 %v412
        %890 = vmatpush.msra.mxu0 %v408
        %891 = vmatpush.msra.mxu0 %v404
        %892 = vmatpush.msra.mxu0 %v400
        %893 = vmatpush.msra.mxu0 %v396
        %894 = vmatpush.msra.mxu0 %v392
        %895 = vmatpush.msra.mxu0 %v388
        %896 = vmatpush.msra.mxu0 %v384
        %897 = vmatmul.f32.gmra.mxu0 %v309
        %v898 = vpop.f32.mrf.mxu0
        %v899 = vadd.f32 %v876, %v898
        %900 = vmatmul.f32.gmra.mxu0 %v313
        %v901 = vpop.f32.mrf.mxu0
        %v902 = vadd.f32 %v879, %v901
        %903 = vdwg.mxu0
        %904 = vmatpush.msra.mxu0 %v508
        %905 = vmatpush.msra.mxu0 %v504
        %906 = vmatpush.msra.mxu0 %v500
        %907 = vmatpush.msra.mxu0 %v496
        %908 = vmatpush.msra.mxu0 %v492
        %909 = vmatpush.msra.mxu0 %v488
        %910 = vmatpush.msra.mxu0 %v484
        %911 = vmatpush.msra.mxu0 %v480
        %912 = vmatpush.msra.mxu0 %v476
        %913 = vmatpush.msra.mxu0 %v472
        %914 = vmatpush.msra.mxu0 %v468
        %915 = vmatpush.msra.mxu0 %v464
        %916 = vmatpush.msra.mxu0 %v460
        %917 = vmatpush.msra.mxu0 %v456
        %918 = vmatpush.msra.mxu0 %v452
        %919 = vmatpush.msra.mxu0 %v448
        %920 = vmatmul.f32.gmra.mxu0 %v310
        %v921 = vpop.f32.mrf.mxu0
        %v922 = vadd.f32 %v899, %v921
        %923 = vmatmul.f32.gmra.mxu0 %v314
        %v924 = vpop.f32.mrf.mxu0
        %v925 = vadd.f32 %v902, %v924
        %926 = vdwg.mxu0
        %927 = vmatpush.msra.mxu0 %v572
        %928 = vmatpush.msra.mxu0 %v568
        %929 = vmatpush.msra.mxu0 %v564
        %930 = vmatpush.msra.mxu0 %v560
        %931 = vmatpush.msra.mxu0 %v556
        %932 = vmatpush.msra.mxu0 %v552
        %933 = vmatpush.msra.mxu0 %v548
        %934 = vmatpush.msra.mxu0 %v544
        %935 = vmatpush.msra.mxu0 %v540
        %936 = vmatpush.msra.mxu0 %v536
        %937 = vmatpush.msra.mxu0 %v532
        %938 = vmatpush.msra.mxu0 %v528
        %939 = vmatpush.msra.mxu0 %v524
        %940 = vmatpush.msra.mxu0 %v520
        %941 = vmatpush.msra.mxu0 %v516
        %942 = vmatpush.msra.mxu0 %v512
        %943 = vmatmul.f32.gmra.mxu0 %v311
        %v944 = vpop.f32.mrf.mxu0
        %v945 = vadd.f32 %v922, %v944
        %946 = vmatmul.f32.gmra.mxu0 %v315
        %v947 = vpop.f32.mrf.mxu0
        %v948 = vadd.f32 %v925, %v947
        %949 = vdwg.mxu0
        %950 = vst [vmem:[#allocation2] sm:$0xff] %v669
        %951 = vst [vmem:[#allocation2 + $0x8] sm:$0xff] %v761
        %952 = vst [vmem:[#allocation2 + $0x10] sm:$0xff] %v853
        %953 = vst [vmem:[#allocation2 + $0x18] sm:$0xff] %v945
        %954 = vst [vmem:[#allocation2 + $0x20] sm:$0xff] %v672
        %955 = vst [vmem:[#allocation2 + $0x28] sm:$0xff] %v764
        %956 = vst [vmem:[#allocation2 + $0x30] sm:$0xff] %v856
        %957 = vst [vmem:[#allocation2 + $0x38] sm:$0xff] %v948
        %v958 = vld [vmem:[%s259] sm:$0xff]
        %v959 = vld [vmem:[%s259 + $0x8] sm:$0xff]
        %v960 = vld [vmem:[%s259 + $0x10] sm:$0xff]
        %v961 = vld [vmem:[%s259 + $0x18] sm:$0xff]
        %v962 = vld [vmem:[%s259 + $0x20] sm:$0xff]
        %v963 = vld [vmem:[%s259 + $0x28] sm:$0xff]
        %v964 = vld [vmem:[%s259 + $0x30] sm:$0xff]
        %v965 = vld [vmem:[%s259 + $0x38] sm:$0xff]
        %v966 = vld [vmem:[#allocation7] sm:$0xff]
        %v967 = vld [vmem:[#allocation7 + $0x8] sm:$0xff]
        %v968 = vld [vmem:[#allocation7 + $0x10] sm:$0xff]
        %v969 = vld [vmem:[#allocation7 + $0x18] sm:$0xff]
        %v970 = vld [vmem:[#allocation7 + $0x20] sm:$0xff]
        %v971 = vld [vmem:[#allocation7 + $0x28] sm:$0xff]
        %v972 = vld [vmem:[#allocation7 + $0x30] sm:$0xff]
        %v973 = vld [vmem:[#allocation7 + $0x38] sm:$0xff]
        %v974 = vld [vmem:[#allocation7 + $0x40] sm:$0xff]
        %v975 = vld [vmem:[#allocation7 + $0x48] sm:$0xff]
        %v976 = vld [vmem:[#allocation7 + $0x50] sm:$0xff]
        %v977 = vld [vmem:[#allocation7 + $0x58] sm:$0xff]
        %v978 = vld [vmem:[#allocation7 + $0x60] sm:$0xff]
        %v979 = vld [vmem:[#allocation7 + $0x68] sm:$0xff]
        %v980 = vld [vmem:[#allocation7 + $0x70] sm:$0xff]
        %v981 = vld [vmem:[#allocation7 + $0x78] sm:$0xff]
        %v982 = vld [vmem:[#allocation7 + $0x80] sm:$0xff]
        %v983 = vld [vmem:[#allocation7 + $0x88] sm:$0xff]
        %v984 = vld [vmem:[#allocation7 + $0x90] sm:$0xff]
        %v985 = vld [vmem:[#allocation7 + $0x98] sm:$0xff]
        %v986 = vld [vmem:[#allocation7 + $0xa0] sm:$0xff]
        %v987 = vld [vmem:[#allocation7 + $0xa8] sm:$0xff]
        %v988 = vld [vmem:[#allocation7 + $0xb0] sm:$0xff]
        %v989 = vld [vmem:[#allocation7 + $0xb8] sm:$0xff]
        %v990 = vld [vmem:[#allocation7 + $0xc0] sm:$0xff]
        %v991 = vld [vmem:[#allocation7 + $0xc8] sm:$0xff]
        %v992 = vld [vmem:[#allocation7 + $0xd0] sm:$0xff]
        %v993 = vld [vmem:[#allocation7 + $0xd8] sm:$0xff]
        %v994 = vld [vmem:[#allocation7 + $0xe0] sm:$0xff]
        %v995 = vld [vmem:[#allocation7 + $0xe8] sm:$0xff]
        %v996 = vld [vmem:[#allocation7 + $0xf0] sm:$0xff]
        %v997 = vld [vmem:[#allocation7 + $0xf8] sm:$0xff]
        %v998 = vld [vmem:[#allocation7 + $0x100] sm:$0xff]
        %v999 = vld [vmem:[#allocation7 + $0x108] sm:$0xff]
        %v1000 = vld [vmem:[#allocation7 + $0x110] sm:$0xff]
        %v1001 = vld [vmem:[#allocation7 + $0x118] sm:$0xff]
        %v1002 = vld [vmem:[#allocation7 + $0x120] sm:$0xff]
        %v1003 = vld [vmem:[#allocation7 + $0x128] sm:$0xff]
        %v1004 = vld [vmem:[#allocation7 + $0x130] sm:$0xff]
        %v1005 = vld [vmem:[#allocation7 + $0x138] sm:$0xff]
        %v1006 = vld [vmem:[#allocation7 + $0x140] sm:$0xff]
        %v1007 = vld [vmem:[#allocation7 + $0x148] sm:$0xff]
        %v1008 = vld [vmem:[#allocation7 + $0x150] sm:$0xff]
        %v1009 = vld [vmem:[#allocation7 + $0x158] sm:$0xff]
        %v1010 = vld [vmem:[#allocation7 + $0x160] sm:$0xff]
        %v1011 = vld [vmem:[#allocation7 + $0x168] sm:$0xff]
        %v1012 = vld [vmem:[#allocation7 + $0x170] sm:$0xff]
        %v1013 = vld [vmem:[#allocation7 + $0x178] sm:$0xff]
        %v1014 = vld [vmem:[#allocation7 + $0x180] sm:$0xff]
        %v1015 = vld [vmem:[#allocation7 + $0x188] sm:$0xff]
        %v1016 = vld [vmem:[#allocation7 + $0x190] sm:$0xff]
        %v1017 = vld [vmem:[#allocation7 + $0x198] sm:$0xff]
        %v1018 = vld [vmem:[#allocation7 + $0x1a0] sm:$0xff]
        %v1019 = vld [vmem:[#allocation7 + $0x1a8] sm:$0xff]
        %v1020 = vld [vmem:[#allocation7 + $0x1b0] sm:$0xff]
        %v1021 = vld [vmem:[#allocation7 + $0x1b8] sm:$0xff]
        %v1022 = vld [vmem:[#allocation7 + $0x1c0] sm:$0xff]
        %v1023 = vld [vmem:[#allocation7 + $0x1c8] sm:$0xff]
        %v1024 = vld [vmem:[#allocation7 + $0x1d0] sm:$0xff]
        %v1025 = vld [vmem:[#allocation7 + $0x1d8] sm:$0xff]
        %v1026 = vld [vmem:[#allocation7 + $0x1e0] sm:$0xff]
        %v1027 = vld [vmem:[#allocation7 + $0x1e8] sm:$0xff]
        %v1028 = vld [vmem:[#allocation7 + $0x1f0] sm:$0xff]
        %v1029 = vld [vmem:[#allocation7 + $0x1f8] sm:$0xff]
        %v1030 = vld [vmem:[#allocation7 + $0x200] sm:$0xff]
        %v1031 = vld [vmem:[#allocation7 + $0x208] sm:$0xff]
        %v1032 = vld [vmem:[#allocation7 + $0x210] sm:$0xff]
        %v1033 = vld [vmem:[#allocation7 + $0x218] sm:$0xff]
        %v1034 = vld [vmem:[#allocation7 + $0x220] sm:$0xff]
        %v1035 = vld [vmem:[#allocation7 + $0x228] sm:$0xff]
        %v1036 = vld [vmem:[#allocation7 + $0x230] sm:$0xff]
        %v1037 = vld [vmem:[#allocation7 + $0x238] sm:$0xff]
        %v1038 = vld [vmem:[#allocation7 + $0x240] sm:$0xff]
        %v1039 = vld [vmem:[#allocation7 + $0x248] sm:$0xff]
        %v1040 = vld [vmem:[#allocation7 + $0x250] sm:$0xff]
        %v1041 = vld [vmem:[#allocation7 + $0x258] sm:$0xff]
        %v1042 = vld [vmem:[#allocation7 + $0x260] sm:$0xff]
        %v1043 = vld [vmem:[#allocation7 + $0x268] sm:$0xff]
        %v1044 = vld [vmem:[#allocation7 + $0x270] sm:$0xff]
        %v1045 = vld [vmem:[#allocation7 + $0x278] sm:$0xff]
        %v1046 = vld [vmem:[#allocation7 + $0x280] sm:$0xff]
        %v1047 = vld [vmem:[#allocation7 + $0x288] sm:$0xff]
        %v1048 = vld [vmem:[#allocation7 + $0x290] sm:$0xff]
        %v1049 = vld [vmem:[#allocation7 + $0x298] sm:$0xff]
        %v1050 = vld [vmem:[#allocation7 + $0x2a0] sm:$0xff]
        %v1051 = vld [vmem:[#allocation7 + $0x2a8] sm:$0xff]
        %v1052 = vld [vmem:[#allocation7 + $0x2b0] sm:$0xff]
        %v1053 = vld [vmem:[#allocation7 + $0x2b8] sm:$0xff]
        %v1054 = vld [vmem:[#allocation7 + $0x2c0] sm:$0xff]
        %v1055 = vld [vmem:[#allocation7 + $0x2c8] sm:$0xff]
        %v1056 = vld [vmem:[#allocation7 + $0x2d0] sm:$0xff]
        %v1057 = vld [vmem:[#allocation7 + $0x2d8] sm:$0xff]
        %v1058 = vld [vmem:[#allocation7 + $0x2e0] sm:$0xff]
        %v1059 = vld [vmem:[#allocation7 + $0x2e8] sm:$0xff]
        %v1060 = vld [vmem:[#allocation7 + $0x2f0] sm:$0xff]
        %v1061 = vld [vmem:[#allocation7 + $0x2f8] sm:$0xff]
        %v1062 = vld [vmem:[#allocation7 + $0x300] sm:$0xff]
        %v1063 = vld [vmem:[#allocation7 + $0x308] sm:$0xff]
        %v1064 = vld [vmem:[#allocation7 + $0x310] sm:$0xff]
        %v1065 = vld [vmem:[#allocation7 + $0x318] sm:$0xff]
        %v1066 = vld [vmem:[#allocation7 + $0x320] sm:$0xff]
        %v1067 = vld [vmem:[#allocation7 + $0x328] sm:$0xff]
        %v1068 = vld [vmem:[#allocation7 + $0x330] sm:$0xff]
        %v1069 = vld [vmem:[#allocation7 + $0x338] sm:$0xff]
        %v1070 = vld [vmem:[#allocation7 + $0x340] sm:$0xff]
        %v1071 = vld [vmem:[#allocation7 + $0x348] sm:$0xff]
        %v1072 = vld [vmem:[#allocation7 + $0x350] sm:$0xff]
        %v1073 = vld [vmem:[#allocation7 + $0x358] sm:$0xff]
        %v1074 = vld [vmem:[#allocation7 + $0x360] sm:$0xff]
        %v1075 = vld [vmem:[#allocation7 + $0x368] sm:$0xff]
        %v1076 = vld [vmem:[#allocation7 + $0x370] sm:$0xff]
        %v1077 = vld [vmem:[#allocation7 + $0x378] sm:$0xff]
        %v1078 = vld [vmem:[#allocation7 + $0x380] sm:$0xff]
        %v1079 = vld [vmem:[#allocation7 + $0x388] sm:$0xff]
        %v1080 = vld [vmem:[#allocation7 + $0x390] sm:$0xff]
        %v1081 = vld [vmem:[#allocation7 + $0x398] sm:$0xff]
        %v1082 = vld [vmem:[#allocation7 + $0x3a0] sm:$0xff]
        %v1083 = vld [vmem:[#allocation7 + $0x3a8] sm:$0xff]
        %v1084 = vld [vmem:[#allocation7 + $0x3b0] sm:$0xff]
        %v1085 = vld [vmem:[#allocation7 + $0x3b8] sm:$0xff]
        %v1086 = vld [vmem:[#allocation7 + $0x3c0] sm:$0xff]
        %v1087 = vld [vmem:[#allocation7 + $0x3c8] sm:$0xff]
        %v1088 = vld [vmem:[#allocation7 + $0x3d0] sm:$0xff]
        %v1089 = vld [vmem:[#allocation7 + $0x3d8] sm:$0xff]
        %v1090 = vld [vmem:[#allocation7 + $0x3e0] sm:$0xff]
        %v1091 = vld [vmem:[#allocation7 + $0x3e8] sm:$0xff]
        %v1092 = vld [vmem:[#allocation7 + $0x3f0] sm:$0xff]
        %v1093 = vld [vmem:[#allocation7 + $0x3f8] sm:$0xff]
        %v1094 = vld [vmem:[#allocation7 + $0x400] sm:$0xff]
        %v1095 = vld [vmem:[#allocation7 + $0x408] sm:$0xff]
        %v1096 = vld [vmem:[#allocation7 + $0x410] sm:$0xff]
        %v1097 = vld [vmem:[#allocation7 + $0x418] sm:$0xff]
        %v1098 = vld [vmem:[#allocation7 + $0x420] sm:$0xff]
        %v1099 = vld [vmem:[#allocation7 + $0x428] sm:$0xff]
        %v1100 = vld [vmem:[#allocation7 + $0x430] sm:$0xff]
        %v1101 = vld [vmem:[#allocation7 + $0x438] sm:$0xff]
        %v1102 = vld [vmem:[#allocation7 + $0x440] sm:$0xff]
        %v1103 = vld [vmem:[#allocation7 + $0x448] sm:$0xff]
        %v1104 = vld [vmem:[#allocation7 + $0x450] sm:$0xff]
        %v1105 = vld [vmem:[#allocation7 + $0x458] sm:$0xff]
        %v1106 = vld [vmem:[#allocation7 + $0x460] sm:$0xff]
        %v1107 = vld [vmem:[#allocation7 + $0x468] sm:$0xff]
        %v1108 = vld [vmem:[#allocation7 + $0x470] sm:$0xff]
        %v1109 = vld [vmem:[#allocation7 + $0x478] sm:$0xff]
        %v1110 = vld [vmem:[#allocation7 + $0x480] sm:$0xff]
        %v1111 = vld [vmem:[#allocation7 + $0x488] sm:$0xff]
        %v1112 = vld [vmem:[#allocation7 + $0x490] sm:$0xff]
        %v1113 = vld [vmem:[#allocation7 + $0x498] sm:$0xff]
        %v1114 = vld [vmem:[#allocation7 + $0x4a0] sm:$0xff]
        %v1115 = vld [vmem:[#allocation7 + $0x4a8] sm:$0xff]
        %v1116 = vld [vmem:[#allocation7 + $0x4b0] sm:$0xff]
        %v1117 = vld [vmem:[#allocation7 + $0x4b8] sm:$0xff]
        %v1118 = vld [vmem:[#allocation7 + $0x4c0] sm:$0xff]
        %v1119 = vld [vmem:[#allocation7 + $0x4c8] sm:$0xff]
        %v1120 = vld [vmem:[#allocation7 + $0x4d0] sm:$0xff]
        %v1121 = vld [vmem:[#allocation7 + $0x4d8] sm:$0xff]
        %v1122 = vld [vmem:[#allocation7 + $0x4e0] sm:$0xff]
        %v1123 = vld [vmem:[#allocation7 + $0x4e8] sm:$0xff]
        %v1124 = vld [vmem:[#allocation7 + $0x4f0] sm:$0xff]
        %v1125 = vld [vmem:[#allocation7 + $0x4f8] sm:$0xff]
        %v1126 = vld [vmem:[#allocation7 + $0x500] sm:$0xff]
        %v1127 = vld [vmem:[#allocation7 + $0x508] sm:$0xff]
        %v1128 = vld [vmem:[#allocation7 + $0x510] sm:$0xff]
        %v1129 = vld [vmem:[#allocation7 + $0x518] sm:$0xff]
        %v1130 = vld [vmem:[#allocation7 + $0x520] sm:$0xff]
        %v1131 = vld [vmem:[#allocation7 + $0x528] sm:$0xff]
        %v1132 = vld [vmem:[#allocation7 + $0x530] sm:$0xff]
        %v1133 = vld [vmem:[#allocation7 + $0x538] sm:$0xff]
        %v1134 = vld [vmem:[#allocation7 + $0x540] sm:$0xff]
        %v1135 = vld [vmem:[#allocation7 + $0x548] sm:$0xff]
        %v1136 = vld [vmem:[#allocation7 + $0x550] sm:$0xff]
        %v1137 = vld [vmem:[#allocation7 + $0x558] sm:$0xff]
        %v1138 = vld [vmem:[#allocation7 + $0x560] sm:$0xff]
        %v1139 = vld [vmem:[#allocation7 + $0x568] sm:$0xff]
        %v1140 = vld [vmem:[#allocation7 + $0x570] sm:$0xff]
        %v1141 = vld [vmem:[#allocation7 + $0x578] sm:$0xff]
        %v1142 = vld [vmem:[#allocation7 + $0x580] sm:$0xff]
        %v1143 = vld [vmem:[#allocation7 + $0x588] sm:$0xff]
        %v1144 = vld [vmem:[#allocation7 + $0x590] sm:$0xff]
        %v1145 = vld [vmem:[#allocation7 + $0x598] sm:$0xff]
        %v1146 = vld [vmem:[#allocation7 + $0x5a0] sm:$0xff]
        %v1147 = vld [vmem:[#allocation7 + $0x5a8] sm:$0xff]
        %v1148 = vld [vmem:[#allocation7 + $0x5b0] sm:$0xff]
        %v1149 = vld [vmem:[#allocation7 + $0x5b8] sm:$0xff]
        %v1150 = vld [vmem:[#allocation7 + $0x5c0] sm:$0xff]
        %v1151 = vld [vmem:[#allocation7 + $0x5c8] sm:$0xff]
        %v1152 = vld [vmem:[#allocation7 + $0x5d0] sm:$0xff]
        %v1153 = vld [vmem:[#allocation7 + $0x5d8] sm:$0xff]
        %v1154 = vld [vmem:[#allocation7 + $0x5e0] sm:$0xff]
        %v1155 = vld [vmem:[#allocation7 + $0x5e8] sm:$0xff]
        %v1156 = vld [vmem:[#allocation7 + $0x5f0] sm:$0xff]
        %v1157 = vld [vmem:[#allocation7 + $0x5f8] sm:$0xff]
        %v1158 = vld [vmem:[#allocation7 + $0x600] sm:$0xff]
        %v1159 = vld [vmem:[#allocation7 + $0x608] sm:$0xff]
        %v1160 = vld [vmem:[#allocation7 + $0x610] sm:$0xff]
        %v1161 = vld [vmem:[#allocation7 + $0x618] sm:$0xff]
        %v1162 = vld [vmem:[#allocation7 + $0x620] sm:$0xff]
        %v1163 = vld [vmem:[#allocation7 + $0x628] sm:$0xff]
        %v1164 = vld [vmem:[#allocation7 + $0x630] sm:$0xff]
        %v1165 = vld [vmem:[#allocation7 + $0x638] sm:$0xff]
        %v1166 = vld [vmem:[#allocation7 + $0x640] sm:$0xff]
        %v1167 = vld [vmem:[#allocation7 + $0x648] sm:$0xff]
        %v1168 = vld [vmem:[#allocation7 + $0x650] sm:$0xff]
        %v1169 = vld [vmem:[#allocation7 + $0x658] sm:$0xff]
        %v1170 = vld [vmem:[#allocation7 + $0x660] sm:$0xff]
        %v1171 = vld [vmem:[#allocation7 + $0x668] sm:$0xff]
        %v1172 = vld [vmem:[#allocation7 + $0x670] sm:$0xff]
        %v1173 = vld [vmem:[#allocation7 + $0x678] sm:$0xff]
        %v1174 = vld [vmem:[#allocation7 + $0x680] sm:$0xff]
        %v1175 = vld [vmem:[#allocation7 + $0x688] sm:$0xff]
        %v1176 = vld [vmem:[#allocation7 + $0x690] sm:$0xff]
        %v1177 = vld [vmem:[#allocation7 + $0x698] sm:$0xff]
        %v1178 = vld [vmem:[#allocation7 + $0x6a0] sm:$0xff]
        %v1179 = vld [vmem:[#allocation7 + $0x6a8] sm:$0xff]
        %v1180 = vld [vmem:[#allocation7 + $0x6b0] sm:$0xff]
        %v1181 = vld [vmem:[#allocation7 + $0x6b8] sm:$0xff]
        %v1182 = vld [vmem:[#allocation7 + $0x6c0] sm:$0xff]
        %v1183 = vld [vmem:[#allocation7 + $0x6c8] sm:$0xff]
        %v1184 = vld [vmem:[#allocation7 + $0x6d0] sm:$0xff]
        %v1185 = vld [vmem:[#allocation7 + $0x6d8] sm:$0xff]
        %v1186 = vld [vmem:[#allocation7 + $0x6e0] sm:$0xff]
        %v1187 = vld [vmem:[#allocation7 + $0x6e8] sm:$0xff]
        %v1188 = vld [vmem:[#allocation7 + $0x6f0] sm:$0xff]
        %v1189 = vld [vmem:[#allocation7 + $0x6f8] sm:$0xff]
        %v1190 = vld [vmem:[#allocation7 + $0x700] sm:$0xff]
        %v1191 = vld [vmem:[#allocation7 + $0x708] sm:$0xff]
        %v1192 = vld [vmem:[#allocation7 + $0x710] sm:$0xff]
        %v1193 = vld [vmem:[#allocation7 + $0x718] sm:$0xff]
        %v1194 = vld [vmem:[#allocation7 + $0x720] sm:$0xff]
        %v1195 = vld [vmem:[#allocation7 + $0x728] sm:$0xff]
        %v1196 = vld [vmem:[#allocation7 + $0x730] sm:$0xff]
        %v1197 = vld [vmem:[#allocation7 + $0x738] sm:$0xff]
        %v1198 = vld [vmem:[#allocation7 + $0x740] sm:$0xff]
        %v1199 = vld [vmem:[#allocation7 + $0x748] sm:$0xff]
        %v1200 = vld [vmem:[#allocation7 + $0x750] sm:$0xff]
        %v1201 = vld [vmem:[#allocation7 + $0x758] sm:$0xff]
        %v1202 = vld [vmem:[#allocation7 + $0x760] sm:$0xff]
        %v1203 = vld [vmem:[#allocation7 + $0x768] sm:$0xff]
        %v1204 = vld [vmem:[#allocation7 + $0x770] sm:$0xff]
        %v1205 = vld [vmem:[#allocation7 + $0x778] sm:$0xff]
        %v1206 = vld [vmem:[#allocation7 + $0x780] sm:$0xff]
        %v1207 = vld [vmem:[#allocation7 + $0x788] sm:$0xff]
        %v1208 = vld [vmem:[#allocation7 + $0x790] sm:$0xff]
        %v1209 = vld [vmem:[#allocation7 + $0x798] sm:$0xff]
        %v1210 = vld [vmem:[#allocation7 + $0x7a0] sm:$0xff]
        %v1211 = vld [vmem:[#allocation7 + $0x7a8] sm:$0xff]
        %v1212 = vld [vmem:[#allocation7 + $0x7b0] sm:$0xff]
        %v1213 = vld [vmem:[#allocation7 + $0x7b8] sm:$0xff]
        %v1214 = vld [vmem:[#allocation7 + $0x7c0] sm:$0xff]
        %v1215 = vld [vmem:[#allocation7 + $0x7c8] sm:$0xff]
        %v1216 = vld [vmem:[#allocation7 + $0x7d0] sm:$0xff]
        %v1217 = vld [vmem:[#allocation7 + $0x7d8] sm:$0xff]
        %v1218 = vld [vmem:[#allocation7 + $0x7e0] sm:$0xff]
        %v1219 = vld [vmem:[#allocation7 + $0x7e8] sm:$0xff]
        %v1220 = vld [vmem:[#allocation7 + $0x7f0] sm:$0xff]
        %v1221 = vld [vmem:[#allocation7 + $0x7f8] sm:$0xff]
        %1222 = vmatpush.msra.mxu0 %v1026
        %1223 = vmatpush.msra.mxu0 %v1022
        %1224 = vmatpush.msra.mxu0 %v1018
        %1225 = vmatpush.msra.mxu0 %v1014
        %1226 = vmatpush.msra.mxu0 %v1010
        %1227 = vmatpush.msra.mxu0 %v1006
        %1228 = vmatpush.msra.mxu0 %v1002
        %1229 = vmatpush.msra.mxu0 %v998
        %1230 = vmatpush.msra.mxu0 %v994
        %1231 = vmatpush.msra.mxu0 %v990
        %1232 = vmatpush.msra.mxu0 %v986
        %1233 = vmatpush.msra.mxu0 %v982
        %1234 = vmatpush.msra.mxu0 %v978
        %1235 = vmatpush.msra.mxu0 %v974
        %1236 = vmatpush.msra.mxu0 %v970
        %1237 = vmatpush.msra.mxu0 %v966
        %1238 = vmatmul.f32.gmra.mxu0 %v958
        %v1239 = vpop.f32.mrf.mxu0
        %v1240 = vadd.f32 0.0, %v1239
        %1241 = vmatmul.f32.gmra.mxu0 %v962
        %v1242 = vpop.f32.mrf.mxu0
        %v1243 = vadd.f32 0.0, %v1242
        %1244 = vdwg.mxu0
        %1245 = vmatpush.msra.mxu0 %v1090
        %1246 = vmatpush.msra.mxu0 %v1086
        %1247 = vmatpush.msra.mxu0 %v1082
        %1248 = vmatpush.msra.mxu0 %v1078
        %1249 = vmatpush.msra.mxu0 %v1074
        %1250 = vmatpush.msra.mxu0 %v1070
        %1251 = vmatpush.msra.mxu0 %v1066
        %1252 = vmatpush.msra.mxu0 %v1062
        %1253 = vmatpush.msra.mxu0 %v1058
        %1254 = vmatpush.msra.mxu0 %v1054
        %1255 = vmatpush.msra.mxu0 %v1050
        %1256 = vmatpush.msra.mxu0 %v1046
        %1257 = vmatpush.msra.mxu0 %v1042
        %1258 = vmatpush.msra.mxu0 %v1038
        %1259 = vmatpush.msra.mxu0 %v1034
        %1260 = vmatpush.msra.mxu0 %v1030
        %1261 = vmatmul.f32.gmra.mxu0 %v959
        %v1262 = vpop.f32.mrf.mxu0
        %v1263 = vadd.f32 %v1240, %v1262
        %1264 = vmatmul.f32.gmra.mxu0 %v963
        %v1265 = vpop.f32.mrf.mxu0
        %v1266 = vadd.f32 %v1243, %v1265
        %1267 = vdwg.mxu0
        %1268 = vmatpush.msra.mxu0 %v1154
        %1269 = vmatpush.msra.mxu0 %v1150
        %1270 = vmatpush.msra.mxu0 %v1146
        %1271 = vmatpush.msra.mxu0 %v1142
        %1272 = vmatpush.msra.mxu0 %v1138
        %1273 = vmatpush.msra.mxu0 %v1134
        %1274 = vmatpush.msra.mxu0 %v1130
        %1275 = vmatpush.msra.mxu0 %v1126
        %1276 = vmatpush.msra.mxu0 %v1122
        %1277 = vmatpush.msra.mxu0 %v1118
        %1278 = vmatpush.msra.mxu0 %v1114
        %1279 = vmatpush.msra.mxu0 %v1110
        %1280 = vmatpush.msra.mxu0 %v1106
        %1281 = vmatpush.msra.mxu0 %v1102
        %1282 = vmatpush.msra.mxu0 %v1098
        %1283 = vmatpush.msra.mxu0 %v1094
        %1284 = vmatmul.f32.gmra.mxu0 %v960
        %v1285 = vpop.f32.mrf.mxu0
        %v1286 = vadd.f32 %v1263, %v1285
        %1287 = vmatmul.f32.gmra.mxu0 %v964
        %v1288 = vpop.f32.mrf.mxu0
        %v1289 = vadd.f32 %v1266, %v1288
        %1290 = vdwg.mxu0
        %1291 = vmatpush.msra.mxu0 %v1218
        %1292 = vmatpush.msra.mxu0 %v1214
        %1293 = vmatpush.msra.mxu0 %v1210
        %1294 = vmatpush.msra.mxu0 %v1206
        %1295 = vmatpush.msra.mxu0 %v1202
        %1296 = vmatpush.msra.mxu0 %v1198
        %1297 = vmatpush.msra.mxu0 %v1194
        %1298 = vmatpush.msra.mxu0 %v1190
        %1299 = vmatpush.msra.mxu0 %v1186
        %1300 = vmatpush.msra.mxu0 %v1182
        %1301 = vmatpush.msra.mxu0 %v1178
        %1302 = vmatpush.msra.mxu0 %v1174
        %1303 = vmatpush.msra.mxu0 %v1170
        %1304 = vmatpush.msra.mxu0 %v1166
        %1305 = vmatpush.msra.mxu0 %v1162
        %1306 = vmatpush.msra.mxu0 %v1158
        %1307 = vmatmul.f32.gmra.mxu0 %v961
        %v1308 = vpop.f32.mrf.mxu0
        %v1309 = vadd.f32 %v1286, %v1308
        %1310 = vmatmul.f32.gmra.mxu0 %v965
        %v1311 = vpop.f32.mrf.mxu0
        %v1312 = vadd.f32 %v1289, %v1311
        %1313 = vdwg.mxu0
        %1314 = vmatpush.msra.mxu0 %v1027
        %1315 = vmatpush.msra.mxu0 %v1023
        %1316 = vmatpush.msra.mxu0 %v1019
        %1317 = vmatpush.msra.mxu0 %v1015
        %1318 = vmatpush.msra.mxu0 %v1011
        %1319 = vmatpush.msra.mxu0 %v1007
        %1320 = vmatpush.msra.mxu0 %v1003
        %1321 = vmatpush.msra.mxu0 %v999
        %1322 = vmatpush.msra.mxu0 %v995
        %1323 = vmatpush.msra.mxu0 %v991
        %1324 = vmatpush.msra.mxu0 %v987
        %1325 = vmatpush.msra.mxu0 %v983
        %1326 = vmatpush.msra.mxu0 %v979
        %1327 = vmatpush.msra.mxu0 %v975
        %1328 = vmatpush.msra.mxu0 %v971
        %1329 = vmatpush.msra.mxu0 %v967
        %1330 = vmatmul.f32.gmra.mxu0 %v958
        %v1331 = vpop.f32.mrf.mxu0
        %v1332 = vadd.f32 0.0, %v1331
        %1333 = vmatmul.f32.gmra.mxu0 %v962
        %v1334 = vpop.f32.mrf.mxu0
        %v1335 = vadd.f32 0.0, %v1334
        %1336 = vdwg.mxu0
        %1337 = vmatpush.msra.mxu0 %v1091
        %1338 = vmatpush.msra.mxu0 %v1087
        %1339 = vmatpush.msra.mxu0 %v1083
        %1340 = vmatpush.msra.mxu0 %v1079
        %1341 = vmatpush.msra.mxu0 %v1075
        %1342 = vmatpush.msra.mxu0 %v1071
        %1343 = vmatpush.msra.mxu0 %v1067
        %1344 = vmatpush.msra.mxu0 %v1063
        %1345 = vmatpush.msra.mxu0 %v1059
        %1346 = vmatpush.msra.mxu0 %v1055
        %1347 = vmatpush.msra.mxu0 %v1051
        %1348 = vmatpush.msra.mxu0 %v1047
        %1349 = vmatpush.msra.mxu0 %v1043
        %1350 = vmatpush.msra.mxu0 %v1039
        %1351 = vmatpush.msra.mxu0 %v1035
        %1352 = vmatpush.msra.mxu0 %v1031
        %1353 = vmatmul.f32.gmra.mxu0 %v959
        %v1354 = vpop.f32.mrf.mxu0
        %v1355 = vadd.f32 %v1332, %v1354
        %1356 = vmatmul.f32.gmra.mxu0 %v963
        %v1357 = vpop.f32.mrf.mxu0
        %v1358 = vadd.f32 %v1335, %v1357
        %1359 = vdwg.mxu0
        %1360 = vmatpush.msra.mxu0 %v1155
        %1361 = vmatpush.msra.mxu0 %v1151
        %1362 = vmatpush.msra.mxu0 %v1147
        %1363 = vmatpush.msra.mxu0 %v1143
        %1364 = vmatpush.msra.mxu0 %v1139
        %1365 = vmatpush.msra.mxu0 %v1135
        %1366 = vmatpush.msra.mxu0 %v1131
        %1367 = vmatpush.msra.mxu0 %v1127
        %1368 = vmatpush.msra.mxu0 %v1123
        %1369 = vmatpush.msra.mxu0 %v1119
        %1370 = vmatpush.msra.mxu0 %v1115
        %1371 = vmatpush.msra.mxu0 %v1111
        %1372 = vmatpush.msra.mxu0 %v1107
        %1373 = vmatpush.msra.mxu0 %v1103
        %1374 = vmatpush.msra.mxu0 %v1099
        %1375 = vmatpush.msra.mxu0 %v1095
        %1376 = vmatmul.f32.gmra.mxu0 %v960
        %v1377 = vpop.f32.mrf.mxu0
        %v1378 = vadd.f32 %v1355, %v1377
        %1379 = vmatmul.f32.gmra.mxu0 %v964
        %v1380 = vpop.f32.mrf.mxu0
        %v1381 = vadd.f32 %v1358, %v1380
        %1382 = vdwg.mxu0
        %1383 = vmatpush.msra.mxu0 %v1219
        %1384 = vmatpush.msra.mxu0 %v1215
        %1385 = vmatpush.msra.mxu0 %v1211
        %1386 = vmatpush.msra.mxu0 %v1207
        %1387 = vmatpush.msra.mxu0 %v1203
        %1388 = vmatpush.msra.mxu0 %v1199
        %1389 = vmatpush.msra.mxu0 %v1195
        %1390 = vmatpush.msra.mxu0 %v1191
        %1391 = vmatpush.msra.mxu0 %v1187
        %1392 = vmatpush.msra.mxu0 %v1183
        %1393 = vmatpush.msra.mxu0 %v1179
        %1394 = vmatpush.msra.mxu0 %v1175
        %1395 = vmatpush.msra.mxu0 %v1171
        %1396 = vmatpush.msra.mxu0 %v1167
        %1397 = vmatpush.msra.mxu0 %v1163
        %1398 = vmatpush.msra.mxu0 %v1159
        %1399 = vmatmul.f32.gmra.mxu0 %v961
        %v1400 = vpop.f32.mrf.mxu0
        %v1401 = vadd.f32 %v1378, %v1400
        %1402 = vmatmul.f32.gmra.mxu0 %v965
        %v1403 = vpop.f32.mrf.mxu0
        %v1404 = vadd.f32 %v1381, %v1403
        %1405 = vdwg.mxu0
        %1406 = vmatpush.msra.mxu0 %v1028
        %1407 = vmatpush.msra.mxu0 %v1024
        %1408 = vmatpush.msra.mxu0 %v1020
        %1409 = vmatpush.msra.mxu0 %v1016
        %1410 = vmatpush.msra.mxu0 %v1012
        %1411 = vmatpush.msra.mxu0 %v1008
        %1412 = vmatpush.msra.mxu0 %v1004
        %1413 = vmatpush.msra.mxu0 %v1000
        %1414 = vmatpush.msra.mxu0 %v996
        %1415 = vmatpush.msra.mxu0 %v992
        %1416 = vmatpush.msra.mxu0 %v988
        %1417 = vmatpush.msra.mxu0 %v984
        %1418 = vmatpush.msra.mxu0 %v980
        %1419 = vmatpush.msra.mxu0 %v976
        %1420 = vmatpush.msra.mxu0 %v972
        %1421 = vmatpush.msra.mxu0 %v968
        %1422 = vmatmul.f32.gmra.mxu0 %v958
        %v1423 = vpop.f32.mrf.mxu0
        %v1424 = vadd.f32 0.0, %v1423
        %1425 = vmatmul.f32.gmra.mxu0 %v962
        %v1426 = vpop.f32.mrf.mxu0
        %v1427 = vadd.f32 0.0, %v1426
        %1428 = vdwg.mxu0
        %1429 = vmatpush.msra.mxu0 %v1092
        %1430 = vmatpush.msra.mxu0 %v1088
        %1431 = vmatpush.msra.mxu0 %v1084
        %1432 = vmatpush.msra.mxu0 %v1080
        %1433 = vmatpush.msra.mxu0 %v1076
        %1434 = vmatpush.msra.mxu0 %v1072
        %1435 = vmatpush.msra.mxu0 %v1068
        %1436 = vmatpush.msra.mxu0 %v1064
        %1437 = vmatpush.msra.mxu0 %v1060
        %1438 = vmatpush.msra.mxu0 %v1056
        %1439 = vmatpush.msra.mxu0 %v1052
        %1440 = vmatpush.msra.mxu0 %v1048
        %1441 = vmatpush.msra.mxu0 %v1044
        %1442 = vmatpush.msra.mxu0 %v1040
        %1443 = vmatpush.msra.mxu0 %v1036
        %1444 = vmatpush.msra.mxu0 %v1032
        %1445 = vmatmul.f32.gmra.mxu0 %v959
        %v1446 = vpop.f32.mrf.mxu0
        %v1447 = vadd.f32 %v1424, %v1446
        %1448 = vmatmul.f32.gmra.mxu0 %v963
        %v1449 = vpop.f32.mrf.mxu0
        %v1450 = vadd.f32 %v1427, %v1449
        %1451 = vdwg.mxu0
        %1452 = vmatpush.msra.mxu0 %v1156
        %1453 = vmatpush.msra.mxu0 %v1152
        %1454 = vmatpush.msra.mxu0 %v1148
        %1455 = vmatpush.msra.mxu0 %v1144
        %1456 = vmatpush.msra.mxu0 %v1140
        %1457 = vmatpush.msra.mxu0 %v1136
        %1458 = vmatpush.msra.mxu0 %v1132
        %1459 = vmatpush.msra.mxu0 %v1128
        %1460 = vmatpush.msra.mxu0 %v1124
        %1461 = vmatpush.msra.mxu0 %v1120
        %1462 = vmatpush.msra.mxu0 %v1116
        %1463 = vmatpush.msra.mxu0 %v1112
        %1464 = vmatpush.msra.mxu0 %v1108
        %1465 = vmatpush.msra.mxu0 %v1104
        %1466 = vmatpush.msra.mxu0 %v1100
        %1467 = vmatpush.msra.mxu0 %v1096
        %1468 = vmatmul.f32.gmra.mxu0 %v960
        %v1469 = vpop.f32.mrf.mxu0
        %v1470 = vadd.f32 %v1447, %v1469
        %1471 = vmatmul.f32.gmra.mxu0 %v964
        %v1472 = vpop.f32.mrf.mxu0
        %v1473 = vadd.f32 %v1450, %v1472
        %1474 = vdwg.mxu0
        %1475 = vmatpush.msra.mxu0 %v1220
        %1476 = vmatpush.msra.mxu0 %v1216
        %1477 = vmatpush.msra.mxu0 %v1212
        %1478 = vmatpush.msra.mxu0 %v1208
        %1479 = vmatpush.msra.mxu0 %v1204
        %1480 = vmatpush.msra.mxu0 %v1200
        %1481 = vmatpush.msra.mxu0 %v1196
        %1482 = vmatpush.msra.mxu0 %v1192
        %1483 = vmatpush.msra.mxu0 %v1188
        %1484 = vmatpush.msra.mxu0 %v1184
        %1485 = vmatpush.msra.mxu0 %v1180
        %1486 = vmatpush.msra.mxu0 %v1176
        %1487 = vmatpush.msra.mxu0 %v1172
        %1488 = vmatpush.msra.mxu0 %v1168
        %1489 = vmatpush.msra.mxu0 %v1164
        %1490 = vmatpush.msra.mxu0 %v1160
        %1491 = vmatmul.f32.gmra.mxu0 %v961
        %v1492 = vpop.f32.mrf.mxu0
        %v1493 = vadd.f32 %v1470, %v1492
        %1494 = vmatmul.f32.gmra.mxu0 %v965
        %v1495 = vpop.f32.mrf.mxu0
        %v1496 = vadd.f32 %v1473, %v1495
        %1497 = vdwg.mxu0
        %1498 = vmatpush.msra.mxu0 %v1029
        %1499 = vmatpush.msra.mxu0 %v1025
        %1500 = vmatpush.msra.mxu0 %v1021
        %1501 = vmatpush.msra.mxu0 %v1017
        %1502 = vmatpush.msra.mxu0 %v1013
        %1503 = vmatpush.msra.mxu0 %v1009
        %1504 = vmatpush.msra.mxu0 %v1005
        %1505 = vmatpush.msra.mxu0 %v1001
        %1506 = vmatpush.msra.mxu0 %v997
        %1507 = vmatpush.msra.mxu0 %v993
        %1508 = vmatpush.msra.mxu0 %v989
        %1509 = vmatpush.msra.mxu0 %v985
        %1510 = vmatpush.msra.mxu0 %v981
        %1511 = vmatpush.msra.mxu0 %v977
        %1512 = vmatpush.msra.mxu0 %v973
        %1513 = vmatpush.msra.mxu0 %v969
        %1514 = vmatmul.f32.gmra.mxu0 %v958
        %v1515 = vpop.f32.mrf.mxu0
        %v1516 = vadd.f32 0.0, %v1515
        %1517 = vmatmul.f32.gmra.mxu0 %v962
        %v1518 = vpop.f32.mrf.mxu0
        %v1519 = vadd.f32 0.0, %v1518
        %1520 = vdwg.mxu0
        %1521 = vmatpush.msra.mxu0 %v1093
        %1522 = vmatpush.msra.mxu0 %v1089
        %1523 = vmatpush.msra.mxu0 %v1085
        %1524 = vmatpush.msra.mxu0 %v1081
        %1525 = vmatpush.msra.mxu0 %v1077
        %1526 = vmatpush.msra.mxu0 %v1073
        %1527 = vmatpush.msra.mxu0 %v1069
        %1528 = vmatpush.msra.mxu0 %v1065
        %1529 = vmatpush.msra.mxu0 %v1061
        %1530 = vmatpush.msra.mxu0 %v1057
        %1531 = vmatpush.msra.mxu0 %v1053
        %1532 = vmatpush.msra.mxu0 %v1049
        %1533 = vmatpush.msra.mxu0 %v1045
        %1534 = vmatpush.msra.mxu0 %v1041
        %1535 = vmatpush.msra.mxu0 %v1037
        %1536 = vmatpush.msra.mxu0 %v1033
        %1537 = vmatmul.f32.gmra.mxu0 %v959
        %v1538 = vpop.f32.mrf.mxu0
        %v1539 = vadd.f32 %v1516, %v1538
        %1540 = vmatmul.f32.gmra.mxu0 %v963
        %v1541 = vpop.f32.mrf.mxu0
        %v1542 = vadd.f32 %v1519, %v1541
        %1543 = vdwg.mxu0
        %1544 = vmatpush.msra.mxu0 %v1157
        %1545 = vmatpush.msra.mxu0 %v1153
        %1546 = vmatpush.msra.mxu0 %v1149
        %1547 = vmatpush.msra.mxu0 %v1145
        %1548 = vmatpush.msra.mxu0 %v1141
        %1549 = vmatpush.msra.mxu0 %v1137
        %1550 = vmatpush.msra.mxu0 %v1133
        %1551 = vmatpush.msra.mxu0 %v1129
        %1552 = vmatpush.msra.mxu0 %v1125
        %1553 = vmatpush.msra.mxu0 %v1121
        %1554 = vmatpush.msra.mxu0 %v1117
        %1555 = vmatpush.msra.mxu0 %v1113
        %1556 = vmatpush.msra.mxu0 %v1109
        %1557 = vmatpush.msra.mxu0 %v1105
        %1558 = vmatpush.msra.mxu0 %v1101
        %1559 = vmatpush.msra.mxu0 %v1097
        %1560 = vmatmul.f32.gmra.mxu0 %v960
        %v1561 = vpop.f32.mrf.mxu0
        %v1562 = vadd.f32 %v1539, %v1561
        %1563 = vmatmul.f32.gmra.mxu0 %v964
        %v1564 = vpop.f32.mrf.mxu0
        %v1565 = vadd.f32 %v1542, %v1564
        %1566 = vdwg.mxu0
        %1567 = vmatpush.msra.mxu0 %v1221
        %1568 = vmatpush.msra.mxu0 %v1217
        %1569 = vmatpush.msra.mxu0 %v1213
        %1570 = vmatpush.msra.mxu0 %v1209
        %1571 = vmatpush.msra.mxu0 %v1205
        %1572 = vmatpush.msra.mxu0 %v1201
        %1573 = vmatpush.msra.mxu0 %v1197
        %1574 = vmatpush.msra.mxu0 %v1193
        %1575 = vmatpush.msra.mxu0 %v1189
        %1576 = vmatpush.msra.mxu0 %v1185
        %1577 = vmatpush.msra.mxu0 %v1181
        %1578 = vmatpush.msra.mxu0 %v1177
        %1579 = vmatpush.msra.mxu0 %v1173
        %1580 = vmatpush.msra.mxu0 %v1169
        %1581 = vmatpush.msra.mxu0 %v1165
        %1582 = vmatpush.msra.mxu0 %v1161
        %1583 = vmatmul.f32.gmra.mxu0 %v961
        %v1584 = vpop.f32.mrf.mxu0
        %v1585 = vadd.f32 %v1562, %v1584
        %1586 = vmatmul.f32.gmra.mxu0 %v965
        %v1587 = vpop.f32.mrf.mxu0
        %v1588 = vadd.f32 %v1565, %v1587
        %1589 = vdwg.mxu0
        %v1590 = vld [vmem:[#allocation2] sm:$0xfe]
        %v1591 = vld [vmem:[#allocation2 + $0x8] sm:$0xfe]
        %v1592 = vld [vmem:[#allocation2 + $0x10] sm:$0xfe]
        %v1593 = vld [vmem:[#allocation2 + $0x18] sm:$0xfe]
        %v1594 = vld [vmem:[#allocation2 + $0x20] sm:$0xff]
        %v1595 = vld [vmem:[#allocation2 + $0x28] sm:$0xff]
        %v1596 = vld [vmem:[#allocation2 + $0x30] sm:$0xff]
        %v1597 = vld [vmem:[#allocation2 + $0x38] sm:$0xff]
        %vm1606 = vcmask 1040384
        %v1607 = vrot.slane %v1309, 7
        %v1608 = vrot.slane %v1401, 7
        %v1609 = vrot.slane %v1493, 7
        %v1610 = vrot.slane %v1585, 7
        %v1611 = vrot.slane %v1312, 7
        %v1612 = vsel %vm1606, %v1607, %v1611
        %v1613 = vrot.slane %v1404, 7
        %v1614 = vsel %vm1606, %v1608, %v1613
        %v1615 = vrot.slane %v1496, 7
        %v1616 = vsel %vm1606, %v1609, %v1615
        %v1617 = vrot.slane %v1588, 7
        %v1618 = vsel %vm1606, %v1610, %v1617
        %v1627 = vadd.f32 %v1590, %v1607
        %v1628 = vadd.f32 %v1591, %v1608
        %v1629 = vadd.f32 %v1592, %v1609
        %v1630 = vadd.f32 %v1593, %v1610
        %v1631 = vadd.f32 %v1594, %v1612
        %v1632 = vadd.f32 %v1595, %v1614
        %v1633 = vadd.f32 %v1596, %v1616
        %v1634 = vadd.f32 %v1597, %v1618
        %1635 = vst [vmem:[#allocation2] sm:$0xfe] %v1627
        %1636 = vst [vmem:[#allocation2 + $0x8] sm:$0xfe] %v1628
        %1637 = vst [vmem:[#allocation2 + $0x10] sm:$0xfe] %v1629
        %1638 = vst [vmem:[#allocation2 + $0x18] sm:$0xfe] %v1630
        %1639 = vst [vmem:[#allocation2 + $0x20] sm:$0xff] %v1631
        %1640 = vst [vmem:[#allocation2 + $0x28] sm:$0xff] %v1632
        %1641 = vst [vmem:[#allocation2 + $0x30] sm:$0xff] %v1633
        %1642 = vst [vmem:[#allocation2 + $0x38] sm:$0xff] %v1634
        %v1643 = vld [vmem:[%s259] sm:$0xff]
        %v1644 = vld [vmem:[%s259 + $0x8] sm:$0xff]
        %v1645 = vld [vmem:[%s259 + $0x10] sm:$0xff]
        %v1646 = vld [vmem:[%s259 + $0x18] sm:$0xff]
        %v1647 = vld [vmem:[%s259 + $0x20] sm:$0xff]
        %v1648 = vld [vmem:[%s259 + $0x28] sm:$0xff]
        %v1649 = vld [vmem:[%s259 + $0x30] sm:$0xff]
        %v1650 = vld [vmem:[%s259 + $0x38] sm:$0xff]
        %s1651 = scalar_lea.vmem [#allocation7], 4096
        %v1652 = vld [vmem:[%s1651] sm:$0xff]
        %v1653 = vld [vmem:[%s1651 + $0x8] sm:$0xff]
        %v1654 = vld [vmem:[%s1651 + $0x10] sm:$0xff]
        %v1655 = vld [vmem:[%s1651 + $0x18] sm:$0xff]
        %v1656 = vld [vmem:[%s1651 + $0x20] sm:$0xff]
        %v1657 = vld [vmem:[%s1651 + $0x28] sm:$0xff]
        %v1658 = vld [vmem:[%s1651 + $0x30] sm:$0xff]
        %v1659 = vld [vmem:[%s1651 + $0x38] sm:$0xff]
        %v1660 = vld [vmem:[%s1651 + $0x40] sm:$0xff]
        %v1661 = vld [vmem:[%s1651 + $0x48] sm:$0xff]
        %v1662 = vld [vmem:[%s1651 + $0x50] sm:$0xff]
        %v1663 = vld [vmem:[%s1651 + $0x58] sm:$0xff]
        %v1664 = vld [vmem:[%s1651 + $0x60] sm:$0xff]
        %v1665 = vld [vmem:[%s1651 + $0x68] sm:$0xff]
        %v1666 = vld [vmem:[%s1651 + $0x70] sm:$0xff]
        %v1667 = vld [vmem:[%s1651 + $0x78] sm:$0xff]
        %v1668 = vld [vmem:[%s1651 + $0x80] sm:$0xff]
        %v1669 = vld [vmem:[%s1651 + $0x88] sm:$0xff]
        %v1670 = vld [vmem:[%s1651 + $0x90] sm:$0xff]
        %v1671 = vld [vmem:[%s1651 + $0x98] sm:$0xff]
        %v1672 = vld [vmem:[%s1651 + $0xa0] sm:$0xff]
        %v1673 = vld [vmem:[%s1651 + $0xa8] sm:$0xff]
        %v1674 = vld [vmem:[%s1651 + $0xb0] sm:$0xff]
        %v1675 = vld [vmem:[%s1651 + $0xb8] sm:$0xff]
        %v1676 = vld [vmem:[%s1651 + $0xc0] sm:$0xff]
        %v1677 = vld [vmem:[%s1651 + $0xc8] sm:$0xff]
        %v1678 = vld [vmem:[%s1651 + $0xd0] sm:$0xff]
        %v1679 = vld [vmem:[%s1651 + $0xd8] sm:$0xff]
        %v1680 = vld [vmem:[%s1651 + $0xe0] sm:$0xff]
        %v1681 = vld [vmem:[%s1651 + $0xe8] sm:$0xff]
        %v1682 = vld [vmem:[%s1651 + $0xf0] sm:$0xff]
        %v1683 = vld [vmem:[%s1651 + $0xf8] sm:$0xff]
        %v1684 = vld [vmem:[%s1651 + $0x100] sm:$0xff]
        %v1685 = vld [vmem:[%s1651 + $0x108] sm:$0xff]
        %v1686 = vld [vmem:[%s1651 + $0x110] sm:$0xff]
        %v1687 = vld [vmem:[%s1651 + $0x118] sm:$0xff]
        %v1688 = vld [vmem:[%s1651 + $0x120] sm:$0xff]
        %v1689 = vld [vmem:[%s1651 + $0x128] sm:$0xff]
        %v1690 = vld [vmem:[%s1651 + $0x130] sm:$0xff]
        %v1691 = vld [vmem:[%s1651 + $0x138] sm:$0xff]
        %v1692 = vld [vmem:[%s1651 + $0x140] sm:$0xff]
        %v1693 = vld [vmem:[%s1651 + $0x148] sm:$0xff]
        %v1694 = vld [vmem:[%s1651 + $0x150] sm:$0xff]
        %v1695 = vld [vmem:[%s1651 + $0x158] sm:$0xff]
        %v1696 = vld [vmem:[%s1651 + $0x160] sm:$0xff]
        %v1697 = vld [vmem:[%s1651 + $0x168] sm:$0xff]
        %v1698 = vld [vmem:[%s1651 + $0x170] sm:$0xff]
        %v1699 = vld [vmem:[%s1651 + $0x178] sm:$0xff]
        %v1700 = vld [vmem:[%s1651 + $0x180] sm:$0xff]
        %v1701 = vld [vmem:[%s1651 + $0x188] sm:$0xff]
        %v1702 = vld [vmem:[%s1651 + $0x190] sm:$0xff]
        %v1703 = vld [vmem:[%s1651 + $0x198] sm:$0xff]
        %v1704 = vld [vmem:[%s1651 + $0x1a0] sm:$0xff]
        %v1705 = vld [vmem:[%s1651 + $0x1a8] sm:$0xff]
        %v1706 = vld [vmem:[%s1651 + $0x1b0] sm:$0xff]
        %v1707 = vld [vmem:[%s1651 + $0x1b8] sm:$0xff]
        %v1708 = vld [vmem:[%s1651 + $0x1c0] sm:$0xff]
        %v1709 = vld [vmem:[%s1651 + $0x1c8] sm:$0xff]
        %v1710 = vld [vmem:[%s1651 + $0x1d0] sm:$0xff]
        %v1711 = vld [vmem:[%s1651 + $0x1d8] sm:$0xff]
        %v1712 = vld [vmem:[%s1651 + $0x1e0] sm:$0xff]
        %v1713 = vld [vmem:[%s1651 + $0x1e8] sm:$0xff]
        %v1714 = vld [vmem:[%s1651 + $0x1f0] sm:$0xff]
        %v1715 = vld [vmem:[%s1651 + $0x1f8] sm:$0xff]
        %v1716 = vld [vmem:[%s1651 + $0x200] sm:$0xff]
        %v1717 = vld [vmem:[%s1651 + $0x208] sm:$0xff]
        %v1718 = vld [vmem:[%s1651 + $0x210] sm:$0xff]
        %v1719 = vld [vmem:[%s1651 + $0x218] sm:$0xff]
        %v1720 = vld [vmem:[%s1651 + $0x220] sm:$0xff]
        %v1721 = vld [vmem:[%s1651 + $0x228] sm:$0xff]
        %v1722 = vld [vmem:[%s1651 + $0x230] sm:$0xff]
        %v1723 = vld [vmem:[%s1651 + $0x238] sm:$0xff]
        %v1724 = vld [vmem:[%s1651 + $0x240] sm:$0xff]
        %v1725 = vld [vmem:[%s1651 + $0x248] sm:$0xff]
        %v1726 = vld [vmem:[%s1651 + $0x250] sm:$0xff]
        %v1727 = vld [vmem:[%s1651 + $0x258] sm:$0xff]
        %v1728 = vld [vmem:[%s1651 + $0x260] sm:$0xff]
        %v1729 = vld [vmem:[%s1651 + $0x268] sm:$0xff]
        %v1730 = vld [vmem:[%s1651 + $0x270] sm:$0xff]
        %v1731 = vld [vmem:[%s1651 + $0x278] sm:$0xff]
        %v1732 = vld [vmem:[%s1651 + $0x280] sm:$0xff]
        %v1733 = vld [vmem:[%s1651 + $0x288] sm:$0xff]
        %v1734 = vld [vmem:[%s1651 + $0x290] sm:$0xff]
        %v1735 = vld [vmem:[%s1651 + $0x298] sm:$0xff]
        %v1736 = vld [vmem:[%s1651 + $0x2a0] sm:$0xff]
        %v1737 = vld [vmem:[%s1651 + $0x2a8] sm:$0xff]
        %v1738 = vld [vmem:[%s1651 + $0x2b0] sm:$0xff]
        %v1739 = vld [vmem:[%s1651 + $0x2b8] sm:$0xff]
        %v1740 = vld [vmem:[%s1651 + $0x2c0] sm:$0xff]
        %v1741 = vld [vmem:[%s1651 + $0x2c8] sm:$0xff]
        %v1742 = vld [vmem:[%s1651 + $0x2d0] sm:$0xff]
        %v1743 = vld [vmem:[%s1651 + $0x2d8] sm:$0xff]
        %v1744 = vld [vmem:[%s1651 + $0x2e0] sm:$0xff]
        %v1745 = vld [vmem:[%s1651 + $0x2e8] sm:$0xff]
        %v1746 = vld [vmem:[%s1651 + $0x2f0] sm:$0xff]
        %v1747 = vld [vmem:[%s1651 + $0x2f8] sm:$0xff]
        %v1748 = vld [vmem:[%s1651 + $0x300] sm:$0xff]
        %v1749 = vld [vmem:[%s1651 + $0x308] sm:$0xff]
        %v1750 = vld [vmem:[%s1651 + $0x310] sm:$0xff]
        %v1751 = vld [vmem:[%s1651 + $0x318] sm:$0xff]
        %v1752 = vld [vmem:[%s1651 + $0x320] sm:$0xff]
        %v1753 = vld [vmem:[%s1651 + $0x328] sm:$0xff]
        %v1754 = vld [vmem:[%s1651 + $0x330] sm:$0xff]
        %v1755 = vld [vmem:[%s1651 + $0x338] sm:$0xff]
        %v1756 = vld [vmem:[%s1651 + $0x340] sm:$0xff]
        %v1757 = vld [vmem:[%s1651 + $0x348] sm:$0xff]
        %v1758 = vld [vmem:[%s1651 + $0x350] sm:$0xff]
        %v1759 = vld [vmem:[%s1651 + $0x358] sm:$0xff]
        %v1760 = vld [vmem:[%s1651 + $0x360] sm:$0xff]
        %v1761 = vld [vmem:[%s1651 + $0x368] sm:$0xff]
        %v1762 = vld [vmem:[%s1651 + $0x370] sm:$0xff]
        %v1763 = vld [vmem:[%s1651 + $0x378] sm:$0xff]
        %v1764 = vld [vmem:[%s1651 + $0x380] sm:$0xff]
        %v1765 = vld [vmem:[%s1651 + $0x388] sm:$0xff]
        %v1766 = vld [vmem:[%s1651 + $0x390] sm:$0xff]
        %v1767 = vld [vmem:[%s1651 + $0x398] sm:$0xff]
        %v1768 = vld [vmem:[%s1651 + $0x3a0] sm:$0xff]
        %v1769 = vld [vmem:[%s1651 + $0x3a8] sm:$0xff]
        %v1770 = vld [vmem:[%s1651 + $0x3b0] sm:$0xff]
        %v1771 = vld [vmem:[%s1651 + $0x3b8] sm:$0xff]
        %v1772 = vld [vmem:[%s1651 + $0x3c0] sm:$0xff]
        %v1773 = vld [vmem:[%s1651 + $0x3c8] sm:$0xff]
        %v1774 = vld [vmem:[%s1651 + $0x3d0] sm:$0xff]
        %v1775 = vld [vmem:[%s1651 + $0x3d8] sm:$0xff]
        %v1776 = vld [vmem:[%s1651 + $0x3e0] sm:$0xff]
        %v1777 = vld [vmem:[%s1651 + $0x3e8] sm:$0xff]
        %v1778 = vld [vmem:[%s1651 + $0x3f0] sm:$0xff]
        %v1779 = vld [vmem:[%s1651 + $0x3f8] sm:$0xff]
        %v1780 = vld [vmem:[%s1651 + $0x400] sm:$0xff]
        %v1781 = vld [vmem:[%s1651 + $0x408] sm:$0xff]
        %v1782 = vld [vmem:[%s1651 + $0x410] sm:$0xff]
        %v1783 = vld [vmem:[%s1651 + $0x418] sm:$0xff]
        %v1784 = vld [vmem:[%s1651 + $0x420] sm:$0xff]
        %v1785 = vld [vmem:[%s1651 + $0x428] sm:$0xff]
        %v1786 = vld [vmem:[%s1651 + $0x430] sm:$0xff]
        %v1787 = vld [vmem:[%s1651 + $0x438] sm:$0xff]
        %v1788 = vld [vmem:[%s1651 + $0x440] sm:$0xff]
        %v1789 = vld [vmem:[%s1651 + $0x448] sm:$0xff]
        %v1790 = vld [vmem:[%s1651 + $0x450] sm:$0xff]
        %v1791 = vld [vmem:[%s1651 + $0x458] sm:$0xff]
        %v1792 = vld [vmem:[%s1651 + $0x460] sm:$0xff]
        %v1793 = vld [vmem:[%s1651 + $0x468] sm:$0xff]
        %v1794 = vld [vmem:[%s1651 + $0x470] sm:$0xff]
        %v1795 = vld [vmem:[%s1651 + $0x478] sm:$0xff]
        %v1796 = vld [vmem:[%s1651 + $0x480] sm:$0xff]
        %v1797 = vld [vmem:[%s1651 + $0x488] sm:$0xff]
        %v1798 = vld [vmem:[%s1651 + $0x490] sm:$0xff]
        %v1799 = vld [vmem:[%s1651 + $0x498] sm:$0xff]
        %v1800 = vld [vmem:[%s1651 + $0x4a0] sm:$0xff]
        %v1801 = vld [vmem:[%s1651 + $0x4a8] sm:$0xff]
        %v1802 = vld [vmem:[%s1651 + $0x4b0] sm:$0xff]
        %v1803 = vld [vmem:[%s1651 + $0x4b8] sm:$0xff]
        %v1804 = vld [vmem:[%s1651 + $0x4c0] sm:$0xff]
        %v1805 = vld [vmem:[%s1651 + $0x4c8] sm:$0xff]
        %v1806 = vld [vmem:[%s1651 + $0x4d0] sm:$0xff]
        %v1807 = vld [vmem:[%s1651 + $0x4d8] sm:$0xff]
        %v1808 = vld [vmem:[%s1651 + $0x4e0] sm:$0xff]
        %v1809 = vld [vmem:[%s1651 + $0x4e8] sm:$0xff]
        %v1810 = vld [vmem:[%s1651 + $0x4f0] sm:$0xff]
        %v1811 = vld [vmem:[%s1651 + $0x4f8] sm:$0xff]
        %v1812 = vld [vmem:[%s1651 + $0x500] sm:$0xff]
        %v1813 = vld [vmem:[%s1651 + $0x508] sm:$0xff]
        %v1814 = vld [vmem:[%s1651 + $0x510] sm:$0xff]
        %v1815 = vld [vmem:[%s1651 + $0x518] sm:$0xff]
        %v1816 = vld [vmem:[%s1651 + $0x520] sm:$0xff]
        %v1817 = vld [vmem:[%s1651 + $0x528] sm:$0xff]
        %v1818 = vld [vmem:[%s1651 + $0x530] sm:$0xff]
        %v1819 = vld [vmem:[%s1651 + $0x538] sm:$0xff]
        %v1820 = vld [vmem:[%s1651 + $0x540] sm:$0xff]
        %v1821 = vld [vmem:[%s1651 + $0x548] sm:$0xff]
        %v1822 = vld [vmem:[%s1651 + $0x550] sm:$0xff]
        %v1823 = vld [vmem:[%s1651 + $0x558] sm:$0xff]
        %v1824 = vld [vmem:[%s1651 + $0x560] sm:$0xff]
        %v1825 = vld [vmem:[%s1651 + $0x568] sm:$0xff]
        %v1826 = vld [vmem:[%s1651 + $0x570] sm:$0xff]
        %v1827 = vld [vmem:[%s1651 + $0x578] sm:$0xff]
        %v1828 = vld [vmem:[%s1651 + $0x580] sm:$0xff]
        %v1829 = vld [vmem:[%s1651 + $0x588] sm:$0xff]
        %v1830 = vld [vmem:[%s1651 + $0x590] sm:$0xff]
        %v1831 = vld [vmem:[%s1651 + $0x598] sm:$0xff]
        %v1832 = vld [vmem:[%s1651 + $0x5a0] sm:$0xff]
        %v1833 = vld [vmem:[%s1651 + $0x5a8] sm:$0xff]
        %v1834 = vld [vmem:[%s1651 + $0x5b0] sm:$0xff]
        %v1835 = vld [vmem:[%s1651 + $0x5b8] sm:$0xff]
        %v1836 = vld [vmem:[%s1651 + $0x5c0] sm:$0xff]
        %v1837 = vld [vmem:[%s1651 + $0x5c8] sm:$0xff]
        %v1838 = vld [vmem:[%s1651 + $0x5d0] sm:$0xff]
        %v1839 = vld [vmem:[%s1651 + $0x5d8] sm:$0xff]
        %v1840 = vld [vmem:[%s1651 + $0x5e0] sm:$0xff]
        %v1841 = vld [vmem:[%s1651 + $0x5e8] sm:$0xff]
        %v1842 = vld [vmem:[%s1651 + $0x5f0] sm:$0xff]
        %v1843 = vld [vmem:[%s1651 + $0x5f8] sm:$0xff]
        %v1844 = vld [vmem:[%s1651 + $0x600] sm:$0xff]
        %v1845 = vld [vmem:[%s1651 + $0x608] sm:$0xff]
        %v1846 = vld [vmem:[%s1651 + $0x610] sm:$0xff]
        %v1847 = vld [vmem:[%s1651 + $0x618] sm:$0xff]
        %v1848 = vld [vmem:[%s1651 + $0x620] sm:$0xff]
        %v1849 = vld [vmem:[%s1651 + $0x628] sm:$0xff]
        %v1850 = vld [vmem:[%s1651 + $0x630] sm:$0xff]
        %v1851 = vld [vmem:[%s1651 + $0x638] sm:$0xff]
        %v1852 = vld [vmem:[%s1651 + $0x640] sm:$0xff]
        %v1853 = vld [vmem:[%s1651 + $0x648] sm:$0xff]
        %v1854 = vld [vmem:[%s1651 + $0x650] sm:$0xff]
        %v1855 = vld [vmem:[%s1651 + $0x658] sm:$0xff]
        %v1856 = vld [vmem:[%s1651 + $0x660] sm:$0xff]
        %v1857 = vld [vmem:[%s1651 + $0x668] sm:$0xff]
        %v1858 = vld [vmem:[%s1651 + $0x670] sm:$0xff]
        %v1859 = vld [vmem:[%s1651 + $0x678] sm:$0xff]
        %v1860 = vld [vmem:[%s1651 + $0x680] sm:$0xff]
        %v1861 = vld [vmem:[%s1651 + $0x688] sm:$0xff]
        %v1862 = vld [vmem:[%s1651 + $0x690] sm:$0xff]
        %v1863 = vld [vmem:[%s1651 + $0x698] sm:$0xff]
        %v1864 = vld [vmem:[%s1651 + $0x6a0] sm:$0xff]
        %v1865 = vld [vmem:[%s1651 + $0x6a8] sm:$0xff]
        %v1866 = vld [vmem:[%s1651 + $0x6b0] sm:$0xff]
        %v1867 = vld [vmem:[%s1651 + $0x6b8] sm:$0xff]
        %v1868 = vld [vmem:[%s1651 + $0x6c0] sm:$0xff]
        %v1869 = vld [vmem:[%s1651 + $0x6c8] sm:$0xff]
        %v1870 = vld [vmem:[%s1651 + $0x6d0] sm:$0xff]
        %v1871 = vld [vmem:[%s1651 + $0x6d8] sm:$0xff]
        %v1872 = vld [vmem:[%s1651 + $0x6e0] sm:$0xff]
        %v1873 = vld [vmem:[%s1651 + $0x6e8] sm:$0xff]
        %v1874 = vld [vmem:[%s1651 + $0x6f0] sm:$0xff]
        %v1875 = vld [vmem:[%s1651 + $0x6f8] sm:$0xff]
        %v1876 = vld [vmem:[%s1651 + $0x700] sm:$0xff]
        %v1877 = vld [vmem:[%s1651 + $0x708] sm:$0xff]
        %v1878 = vld [vmem:[%s1651 + $0x710] sm:$0xff]
        %v1879 = vld [vmem:[%s1651 + $0x718] sm:$0xff]
        %v1880 = vld [vmem:[%s1651 + $0x720] sm:$0xff]
        %v1881 = vld [vmem:[%s1651 + $0x728] sm:$0xff]
        %v1882 = vld [vmem:[%s1651 + $0x730] sm:$0xff]
        %v1883 = vld [vmem:[%s1651 + $0x738] sm:$0xff]
        %v1884 = vld [vmem:[%s1651 + $0x740] sm:$0xff]
        %v1885 = vld [vmem:[%s1651 + $0x748] sm:$0xff]
        %v1886 = vld [vmem:[%s1651 + $0x750] sm:$0xff]
        %v1887 = vld [vmem:[%s1651 + $0x758] sm:$0xff]
        %v1888 = vld [vmem:[%s1651 + $0x760] sm:$0xff]
        %v1889 = vld [vmem:[%s1651 + $0x768] sm:$0xff]
        %v1890 = vld [vmem:[%s1651 + $0x770] sm:$0xff]
        %v1891 = vld [vmem:[%s1651 + $0x778] sm:$0xff]
        %v1892 = vld [vmem:[%s1651 + $0x780] sm:$0xff]
        %v1893 = vld [vmem:[%s1651 + $0x788] sm:$0xff]
        %v1894 = vld [vmem:[%s1651 + $0x790] sm:$0xff]
        %v1895 = vld [vmem:[%s1651 + $0x798] sm:$0xff]
        %v1896 = vld [vmem:[%s1651 + $0x7a0] sm:$0xff]
        %v1897 = vld [vmem:[%s1651 + $0x7a8] sm:$0xff]
        %v1898 = vld [vmem:[%s1651 + $0x7b0] sm:$0xff]
        %v1899 = vld [vmem:[%s1651 + $0x7b8] sm:$0xff]
        %v1900 = vld [vmem:[%s1651 + $0x7c0] sm:$0xff]
        %v1901 = vld [vmem:[%s1651 + $0x7c8] sm:$0xff]
        %v1902 = vld [vmem:[%s1651 + $0x7d0] sm:$0xff]
        %v1903 = vld [vmem:[%s1651 + $0x7d8] sm:$0xff]
        %v1904 = vld [vmem:[%s1651 + $0x7e0] sm:$0xff]
        %v1905 = vld [vmem:[%s1651 + $0x7e8] sm:$0xff]
        %v1906 = vld [vmem:[%s1651 + $0x7f0] sm:$0xff]
        %v1907 = vld [vmem:[%s1651 + $0x7f8] sm:$0xff]
        %1908 = vmatpush.msra.mxu0 %v1712
        %1909 = vmatpush.msra.mxu0 %v1708
        %1910 = vmatpush.msra.mxu0 %v1704
        %1911 = vmatpush.msra.mxu0 %v1700
        %1912 = vmatpush.msra.mxu0 %v1696
        %1913 = vmatpush.msra.mxu0 %v1692
        %1914 = vmatpush.msra.mxu0 %v1688
        %1915 = vmatpush.msra.mxu0 %v1684
        %1916 = vmatpush.msra.mxu0 %v1680
        %1917 = vmatpush.msra.mxu0 %v1676
        %1918 = vmatpush.msra.mxu0 %v1672
        %1919 = vmatpush.msra.mxu0 %v1668
        %1920 = vmatpush.msra.mxu0 %v1664
        %1921 = vmatpush.msra.mxu0 %v1660
        %1922 = vmatpush.msra.mxu0 %v1656
        %1923 = vmatpush.msra.mxu0 %v1652
        %1924 = vmatmul.f32.gmra.mxu0 %v1643
        %v1925 = vpop.f32.mrf.mxu0
        %v1926 = vadd.f32 0.0, %v1925
        %1927 = vmatmul.f32.gmra.mxu0 %v1647
        %v1928 = vpop.f32.mrf.mxu0
        %v1929 = vadd.f32 0.0, %v1928
        %1930 = vdwg.mxu0
        %1931 = vmatpush.msra.mxu0 %v1776
        %1932 = vmatpush.msra.mxu0 %v1772
        %1933 = vmatpush.msra.mxu0 %v1768
        %1934 = vmatpush.msra.mxu0 %v1764
        %1935 = vmatpush.msra.mxu0 %v1760
        %1936 = vmatpush.msra.mxu0 %v1756
        %1937 = vmatpush.msra.mxu0 %v1752
        %1938 = vmatpush.msra.mxu0 %v1748
        %1939 = vmatpush.msra.mxu0 %v1744
        %1940 = vmatpush.msra.mxu0 %v1740
        %1941 = vmatpush.msra.mxu0 %v1736
        %1942 = vmatpush.msra.mxu0 %v1732
        %1943 = vmatpush.msra.mxu0 %v1728
        %1944 = vmatpush.msra.mxu0 %v1724
        %1945 = vmatpush.msra.mxu0 %v1720
        %1946 = vmatpush.msra.mxu0 %v1716
        %1947 = vmatmul.f32.gmra.mxu0 %v1644
        %v1948 = vpop.f32.mrf.mxu0
        %v1949 = vadd.f32 %v1926, %v1948
        %1950 = vmatmul.f32.gmra.mxu0 %v1648
        %v1951 = vpop.f32.mrf.mxu0
        %v1952 = vadd.f32 %v1929, %v1951
        %1953 = vdwg.mxu0
        %1954 = vmatpush.msra.mxu0 %v1840
        %1955 = vmatpush.msra.mxu0 %v1836
        %1956 = vmatpush.msra.mxu0 %v1832
        %1957 = vmatpush.msra.mxu0 %v1828
        %1958 = vmatpush.msra.mxu0 %v1824
        %1959 = vmatpush.msra.mxu0 %v1820
        %1960 = vmatpush.msra.mxu0 %v1816
        %1961 = vmatpush.msra.mxu0 %v1812
        %1962 = vmatpush.msra.mxu0 %v1808
        %1963 = vmatpush.msra.mxu0 %v1804
        %1964 = vmatpush.msra.mxu0 %v1800
        %1965 = vmatpush.msra.mxu0 %v1796
        %1966 = vmatpush.msra.mxu0 %v1792
        %1967 = vmatpush.msra.mxu0 %v1788
        %1968 = vmatpush.msra.mxu0 %v1784
        %1969 = vmatpush.msra.mxu0 %v1780
        %1970 = vmatmul.f32.gmra.mxu0 %v1645
        %v1971 = vpop.f32.mrf.mxu0
        %v1972 = vadd.f32 %v1949, %v1971
        %1973 = vmatmul.f32.gmra.mxu0 %v1649
        %v1974 = vpop.f32.mrf.mxu0
        %v1975 = vadd.f32 %v1952, %v1974
        %1976 = vdwg.mxu0
        %1977 = vmatpush.msra.mxu0 %v1904
        %1978 = vmatpush.msra.mxu0 %v1900
        %1979 = vmatpush.msra.mxu0 %v1896
        %1980 = vmatpush.msra.mxu0 %v1892
        %1981 = vmatpush.msra.mxu0 %v1888
        %1982 = vmatpush.msra.mxu0 %v1884
        %1983 = vmatpush.msra.mxu0 %v1880
        %1984 = vmatpush.msra.mxu0 %v1876
        %1985 = vmatpush.msra.mxu0 %v1872
        %1986 = vmatpush.msra.mxu0 %v1868
        %1987 = vmatpush.msra.mxu0 %v1864
        %1988 = vmatpush.msra.mxu0 %v1860
        %1989 = vmatpush.msra.mxu0 %v1856
        %1990 = vmatpush.msra.mxu0 %v1852
        %1991 = vmatpush.msra.mxu0 %v1848
        %1992 = vmatpush.msra.mxu0 %v1844
        %1993 = vmatmul.f32.gmra.mxu0 %v1646
        %v1994 = vpop.f32.mrf.mxu0
        %v1995 = vadd.f32 %v1972, %v1994
        %1996 = vmatmul.f32.gmra.mxu0 %v1650
        %v1997 = vpop.f32.mrf.mxu0
        %v1998 = vadd.f32 %v1975, %v1997
        %1999 = vdwg.mxu0
        %2000 = vmatpush.msra.mxu0 %v1713
        %2001 = vmatpush.msra.mxu0 %v1709
        %2002 = vmatpush.msra.mxu0 %v1705
        %2003 = vmatpush.msra.mxu0 %v1701
        %2004 = vmatpush.msra.mxu0 %v1697
        %2005 = vmatpush.msra.mxu0 %v1693
        %2006 = vmatpush.msra.mxu0 %v1689
        %2007 = vmatpush.msra.mxu0 %v1685
        %2008 = vmatpush.msra.mxu0 %v1681
        %2009 = vmatpush.msra.mxu0 %v1677
        %2010 = vmatpush.msra.mxu0 %v1673
        %2011 = vmatpush.msra.mxu0 %v1669
        %2012 = vmatpush.msra.mxu0 %v1665
        %2013 = vmatpush.msra.mxu0 %v1661
        %2014 = vmatpush.msra.mxu0 %v1657
        %2015 = vmatpush.msra.mxu0 %v1653
        %2016 = vmatmul.f32.gmra.mxu0 %v1643
        %v2017 = vpop.f32.mrf.mxu0
        %v2018 = vadd.f32 0.0, %v2017
        %2019 = vmatmul.f32.gmra.mxu0 %v1647
        %v2020 = vpop.f32.mrf.mxu0
        %v2021 = vadd.f32 0.0, %v2020
        %2022 = vdwg.mxu0
        %2023 = vmatpush.msra.mxu0 %v1777
        %2024 = vmatpush.msra.mxu0 %v1773
        %2025 = vmatpush.msra.mxu0 %v1769
        %2026 = vmatpush.msra.mxu0 %v1765
        %2027 = vmatpush.msra.mxu0 %v1761
        %2028 = vmatpush.msra.mxu0 %v1757
        %2029 = vmatpush.msra.mxu0 %v1753
        %2030 = vmatpush.msra.mxu0 %v1749
        %2031 = vmatpush.msra.mxu0 %v1745
        %2032 = vmatpush.msra.mxu0 %v1741
        %2033 = vmatpush.msra.mxu0 %v1737
        %2034 = vmatpush.msra.mxu0 %v1733
        %2035 = vmatpush.msra.mxu0 %v1729
        %2036 = vmatpush.msra.mxu0 %v1725
        %2037 = vmatpush.msra.mxu0 %v1721
        %2038 = vmatpush.msra.mxu0 %v1717
        %2039 = vmatmul.f32.gmra.mxu0 %v1644
        %v2040 = vpop.f32.mrf.mxu0
        %v2041 = vadd.f32 %v2018, %v2040
        %2042 = vmatmul.f32.gmra.mxu0 %v1648
        %v2043 = vpop.f32.mrf.mxu0
        %v2044 = vadd.f32 %v2021, %v2043
        %2045 = vdwg.mxu0
        %2046 = vmatpush.msra.mxu0 %v1841
        %2047 = vmatpush.msra.mxu0 %v1837
        %2048 = vmatpush.msra.mxu0 %v1833
        %2049 = vmatpush.msra.mxu0 %v1829
        %2050 = vmatpush.msra.mxu0 %v1825
        %2051 = vmatpush.msra.mxu0 %v1821
        %2052 = vmatpush.msra.mxu0 %v1817
        %2053 = vmatpush.msra.mxu0 %v1813
        %2054 = vmatpush.msra.mxu0 %v1809
        %2055 = vmatpush.msra.mxu0 %v1805
        %2056 = vmatpush.msra.mxu0 %v1801
        %2057 = vmatpush.msra.mxu0 %v1797
        %2058 = vmatpush.msra.mxu0 %v1793
        %2059 = vmatpush.msra.mxu0 %v1789
        %2060 = vmatpush.msra.mxu0 %v1785
        %2061 = vmatpush.msra.mxu0 %v1781
        %2062 = vmatmul.f32.gmra.mxu0 %v1645
        %v2063 = vpop.f32.mrf.mxu0
        %v2064 = vadd.f32 %v2041, %v2063
        %2065 = vmatmul.f32.gmra.mxu0 %v1649
        %v2066 = vpop.f32.mrf.mxu0
        %v2067 = vadd.f32 %v2044, %v2066
        %2068 = vdwg.mxu0
        %2069 = vmatpush.msra.mxu0 %v1905
        %2070 = vmatpush.msra.mxu0 %v1901
        %2071 = vmatpush.msra.mxu0 %v1897
        %2072 = vmatpush.msra.mxu0 %v1893
        %2073 = vmatpush.msra.mxu0 %v1889
        %2074 = vmatpush.msra.mxu0 %v1885
        %2075 = vmatpush.msra.mxu0 %v1881
        %2076 = vmatpush.msra.mxu0 %v1877
        %2077 = vmatpush.msra.mxu0 %v1873
        %2078 = vmatpush.msra.mxu0 %v1869
        %2079 = vmatpush.msra.mxu0 %v1865
        %2080 = vmatpush.msra.mxu0 %v1861
        %2081 = vmatpush.msra.mxu0 %v1857
        %2082 = vmatpush.msra.mxu0 %v1853
        %2083 = vmatpush.msra.mxu0 %v1849
        %2084 = vmatpush.msra.mxu0 %v1845
        %2085 = vmatmul.f32.gmra.mxu0 %v1646
        %v2086 = vpop.f32.mrf.mxu0
        %v2087 = vadd.f32 %v2064, %v2086
        %2088 = vmatmul.f32.gmra.mxu0 %v1650
        %v2089 = vpop.f32.mrf.mxu0
        %v2090 = vadd.f32 %v2067, %v2089
        %2091 = vdwg.mxu0
        %2092 = vmatpush.msra.mxu0 %v1714
        %2093 = vmatpush.msra.mxu0 %v1710
        %2094 = vmatpush.msra.mxu0 %v1706
        %2095 = vmatpush.msra.mxu0 %v1702
        %2096 = vmatpush.msra.mxu0 %v1698
        %2097 = vmatpush.msra.mxu0 %v1694
        %2098 = vmatpush.msra.mxu0 %v1690
        %2099 = vmatpush.msra.mxu0 %v1686
        %2100 = vmatpush.msra.mxu0 %v1682
        %2101 = vmatpush.msra.mxu0 %v1678
        %2102 = vmatpush.msra.mxu0 %v1674
        %2103 = vmatpush.msra.mxu0 %v1670
        %2104 = vmatpush.msra.mxu0 %v1666
        %2105 = vmatpush.msra.mxu0 %v1662
        %2106 = vmatpush.msra.mxu0 %v1658
        %2107 = vmatpush.msra.mxu0 %v1654
        %2108 = vmatmul.f32.gmra.mxu0 %v1643
        %v2109 = vpop.f32.mrf.mxu0
        %v2110 = vadd.f32 0.0, %v2109
        %2111 = vmatmul.f32.gmra.mxu0 %v1647
        %v2112 = vpop.f32.mrf.mxu0
        %v2113 = vadd.f32 0.0, %v2112
        %2114 = vdwg.mxu0
        %2115 = vmatpush.msra.mxu0 %v1778
        %2116 = vmatpush.msra.mxu0 %v1774
        %2117 = vmatpush.msra.mxu0 %v1770
        %2118 = vmatpush.msra.mxu0 %v1766
        %2119 = vmatpush.msra.mxu0 %v1762
        %2120 = vmatpush.msra.mxu0 %v1758
        %2121 = vmatpush.msra.mxu0 %v1754
        %2122 = vmatpush.msra.mxu0 %v1750
        %2123 = vmatpush.msra.mxu0 %v1746
        %2124 = vmatpush.msra.mxu0 %v1742
        %2125 = vmatpush.msra.mxu0 %v1738
        %2126 = vmatpush.msra.mxu0 %v1734
        %2127 = vmatpush.msra.mxu0 %v1730
        %2128 = vmatpush.msra.mxu0 %v1726
        %2129 = vmatpush.msra.mxu0 %v1722
        %2130 = vmatpush.msra.mxu0 %v1718
        %2131 = vmatmul.f32.gmra.mxu0 %v1644
        %v2132 = vpop.f32.mrf.mxu0
        %v2133 = vadd.f32 %v2110, %v2132
        %2134 = vmatmul.f32.gmra.mxu0 %v1648
        %v2135 = vpop.f32.mrf.mxu0
        %v2136 = vadd.f32 %v2113, %v2135
        %2137 = vdwg.mxu0
        %2138 = vmatpush.msra.mxu0 %v1842
        %2139 = vmatpush.msra.mxu0 %v1838
        %2140 = vmatpush.msra.mxu0 %v1834
        %2141 = vmatpush.msra.mxu0 %v1830
        %2142 = vmatpush.msra.mxu0 %v1826
        %2143 = vmatpush.msra.mxu0 %v1822
        %2144 = vmatpush.msra.mxu0 %v1818
        %2145 = vmatpush.msra.mxu0 %v1814
        %2146 = vmatpush.msra.mxu0 %v1810
        %2147 = vmatpush.msra.mxu0 %v1806
        %2148 = vmatpush.msra.mxu0 %v1802
        %2149 = vmatpush.msra.mxu0 %v1798
        %2150 = vmatpush.msra.mxu0 %v1794
        %2151 = vmatpush.msra.mxu0 %v1790
        %2152 = vmatpush.msra.mxu0 %v1786
        %2153 = vmatpush.msra.mxu0 %v1782
        %2154 = vmatmul.f32.gmra.mxu0 %v1645
        %v2155 = vpop.f32.mrf.mxu0
        %v2156 = vadd.f32 %v2133, %v2155
        %2157 = vmatmul.f32.gmra.mxu0 %v1649
        %v2158 = vpop.f32.mrf.mxu0
        %v2159 = vadd.f32 %v2136, %v2158
        %2160 = vdwg.mxu0
        %2161 = vmatpush.msra.mxu0 %v1906
        %2162 = vmatpush.msra.mxu0 %v1902
        %2163 = vmatpush.msra.mxu0 %v1898
        %2164 = vmatpush.msra.mxu0 %v1894
        %2165 = vmatpush.msra.mxu0 %v1890
        %2166 = vmatpush.msra.mxu0 %v1886
        %2167 = vmatpush.msra.mxu0 %v1882
        %2168 = vmatpush.msra.mxu0 %v1878
        %2169 = vmatpush.msra.mxu0 %v1874
        %2170 = vmatpush.msra.mxu0 %v1870
        %2171 = vmatpush.msra.mxu0 %v1866
        %2172 = vmatpush.msra.mxu0 %v1862
        %2173 = vmatpush.msra.mxu0 %v1858
        %2174 = vmatpush.msra.mxu0 %v1854
        %2175 = vmatpush.msra.mxu0 %v1850
        %2176 = vmatpush.msra.mxu0 %v1846
        %2177 = vmatmul.f32.gmra.mxu0 %v1646
        %v2178 = vpop.f32.mrf.mxu0
        %v2179 = vadd.f32 %v2156, %v2178
        %2180 = vmatmul.f32.gmra.mxu0 %v1650
        %v2181 = vpop.f32.mrf.mxu0
        %v2182 = vadd.f32 %v2159, %v2181
        %2183 = vdwg.mxu0
        %2184 = vmatpush.msra.mxu0 %v1715
        %2185 = vmatpush.msra.mxu0 %v1711
        %2186 = vmatpush.msra.mxu0 %v1707
        %2187 = vmatpush.msra.mxu0 %v1703
        %2188 = vmatpush.msra.mxu0 %v1699
        %2189 = vmatpush.msra.mxu0 %v1695
        %2190 = vmatpush.msra.mxu0 %v1691
        %2191 = vmatpush.msra.mxu0 %v1687
        %2192 = vmatpush.msra.mxu0 %v1683
        %2193 = vmatpush.msra.mxu0 %v1679
        %2194 = vmatpush.msra.mxu0 %v1675
        %2195 = vmatpush.msra.mxu0 %v1671
        %2196 = vmatpush.msra.mxu0 %v1667
        %2197 = vmatpush.msra.mxu0 %v1663
        %2198 = vmatpush.msra.mxu0 %v1659
        %2199 = vmatpush.msra.mxu0 %v1655
        %2200 = vmatmul.f32.gmra.mxu0 %v1643
        %v2201 = vpop.f32.mrf.mxu0
        %v2202 = vadd.f32 0.0, %v2201
        %2203 = vmatmul.f32.gmra.mxu0 %v1647
        %v2204 = vpop.f32.mrf.mxu0
        %v2205 = vadd.f32 0.0, %v2204
        %2206 = vdwg.mxu0
        %2207 = vmatpush.msra.mxu0 %v1779
        %2208 = vmatpush.msra.mxu0 %v1775
        %2209 = vmatpush.msra.mxu0 %v1771
        %2210 = vmatpush.msra.mxu0 %v1767
        %2211 = vmatpush.msra.mxu0 %v1763
        %2212 = vmatpush.msra.mxu0 %v1759
        %2213 = vmatpush.msra.mxu0 %v1755
        %2214 = vmatpush.msra.mxu0 %v1751
        %2215 = vmatpush.msra.mxu0 %v1747
        %2216 = vmatpush.msra.mxu0 %v1743
        %2217 = vmatpush.msra.mxu0 %v1739
        %2218 = vmatpush.msra.mxu0 %v1735
        %2219 = vmatpush.msra.mxu0 %v1731
        %2220 = vmatpush.msra.mxu0 %v1727
        %2221 = vmatpush.msra.mxu0 %v1723
        %2222 = vmatpush.msra.mxu0 %v1719
        %2223 = vmatmul.f32.gmra.mxu0 %v1644
        %v2224 = vpop.f32.mrf.mxu0
        %v2225 = vadd.f32 %v2202, %v2224
        %2226 = vmatmul.f32.gmra.mxu0 %v1648
        %v2227 = vpop.f32.mrf.mxu0
        %v2228 = vadd.f32 %v2205, %v2227
        %2229 = vdwg.mxu0
        %2230 = vmatpush.msra.mxu0 %v1843
        %2231 = vmatpush.msra.mxu0 %v1839
        %2232 = vmatpush.msra.mxu0 %v1835
        %2233 = vmatpush.msra.mxu0 %v1831
        %2234 = vmatpush.msra.mxu0 %v1827
        %2235 = vmatpush.msra.mxu0 %v1823
        %2236 = vmatpush.msra.mxu0 %v1819
        %2237 = vmatpush.msra.mxu0 %v1815
        %2238 = vmatpush.msra.mxu0 %v1811
        %2239 = vmatpush.msra.mxu0 %v1807
        %2240 = vmatpush.msra.mxu0 %v1803
        %2241 = vmatpush.msra.mxu0 %v1799
        %2242 = vmatpush.msra.mxu0 %v1795
        %2243 = vmatpush.msra.mxu0 %v1791
        %2244 = vmatpush.msra.mxu0 %v1787
        %2245 = vmatpush.msra.mxu0 %v1783
        %2246 = vmatmul.f32.gmra.mxu0 %v1645
        %v2247 = vpop.f32.mrf.mxu0
        %v2248 = vadd.f32 %v2225, %v2247
        %2249 = vmatmul.f32.gmra.mxu0 %v1649
        %v2250 = vpop.f32.mrf.mxu0
        %v2251 = vadd.f32 %v2228, %v2250
        %2252 = vdwg.mxu0
        %2253 = vmatpush.msra.mxu0 %v1907
        %2254 = vmatpush.msra.mxu0 %v1903
        %2255 = vmatpush.msra.mxu0 %v1899
        %2256 = vmatpush.msra.mxu0 %v1895
        %2257 = vmatpush.msra.mxu0 %v1891
        %2258 = vmatpush.msra.mxu0 %v1887
        %2259 = vmatpush.msra.mxu0 %v1883
        %2260 = vmatpush.msra.mxu0 %v1879
        %2261 = vmatpush.msra.mxu0 %v1875
        %2262 = vmatpush.msra.mxu0 %v1871
        %2263 = vmatpush.msra.mxu0 %v1867
        %2264 = vmatpush.msra.mxu0 %v1863
        %2265 = vmatpush.msra.mxu0 %v1859
        %2266 = vmatpush.msra.mxu0 %v1855
        %2267 = vmatpush.msra.mxu0 %v1851
        %2268 = vmatpush.msra.mxu0 %v1847
        %2269 = vmatmul.f32.gmra.mxu0 %v1646
        %v2270 = vpop.f32.mrf.mxu0
        %v2271 = vadd.f32 %v2248, %v2270
        %2272 = vmatmul.f32.gmra.mxu0 %v1650
        %v2273 = vpop.f32.mrf.mxu0
        %v2274 = vadd.f32 %v2251, %v2273
        %2275 = vdwg.mxu0
        %v2276 = vld [vmem:[#allocation2] sm:$0xff]
        %v2277 = vld [vmem:[#allocation2 + $0x8] sm:$0xff]
        %v2278 = vld [vmem:[#allocation2 + $0x10] sm:$0xff]
        %v2279 = vld [vmem:[#allocation2 + $0x18] sm:$0xff]
        %v2280 = vld [vmem:[#allocation2 + $0x20] sm:$0x7f]
        %v2281 = vld [vmem:[#allocation2 + $0x28] sm:$0x7f]
        %v2282 = vld [vmem:[#allocation2 + $0x30] sm:$0x7f]
        %v2283 = vld [vmem:[#allocation2 + $0x38] sm:$0x7f]
        %vm2292 = vcmask 1046528
        %v2293 = vrot.slane %v1995, 1
        %v2294 = vrot.slane %v1998, 1
        %v2295 = vsel %vm2292, %v2293, %v2294
        %v2296 = vrot.slane %v2087, 1
        %v2297 = vrot.slane %v2090, 1
        %v2298 = vsel %vm2292, %v2296, %v2297
        %v2299 = vrot.slane %v2179, 1
        %v2300 = vrot.slane %v2182, 1
        %v2301 = vsel %vm2292, %v2299, %v2300
        %v2302 = vrot.slane %v2271, 1
        %v2303 = vrot.slane %v2274, 1
        %v2304 = vsel %vm2292, %v2302, %v2303
        %v2313 = vadd.f32 %v2276, %v2295
        %v2314 = vadd.f32 %v2277, %v2298
        %v2315 = vadd.f32 %v2278, %v2301
        %v2316 = vadd.f32 %v2279, %v2304
        %v2317 = vadd.f32 %v2280, %v2294
        %v2318 = vadd.f32 %v2281, %v2297
        %v2319 = vadd.f32 %v2282, %v2300
        %v2320 = vadd.f32 %v2283, %v2303
        %2321 = vst [vmem:[#allocation2] sm:$0xff] %v2313
        %2322 = vst [vmem:[#allocation2 + $0x8] sm:$0xff] %v2314
        %2323 = vst [vmem:[#allocation2 + $0x10] sm:$0xff] %v2315
        %2324 = vst [vmem:[#allocation2 + $0x18] sm:$0xff] %v2316
        %2325 = vst [vmem:[#allocation2 + $0x20] sm:$0x7f] %v2317
        %2326 = vst [vmem:[#allocation2 + $0x28] sm:$0x7f] %v2318
        %2327 = vst [vmem:[#allocation2 + $0x30] sm:$0x7f] %v2319
        %2328 = vst [vmem:[#allocation2 + $0x38] sm:$0x7f] %v2320
        %v2329 = vld [vmem:[#allocation2] sm:$0xff]
        %v2330 = vld [vmem:[#allocation2 + $0x8] sm:$0xff]
        %v2331 = vld [vmem:[#allocation2 + $0x10] sm:$0xff]
        %v2332 = vld [vmem:[#allocation2 + $0x18] sm:$0xff]
        %v2333 = vld [vmem:[#allocation2 + $0x20] sm:$0xff]
        %v2334 = vld [vmem:[#allocation2 + $0x28] sm:$0xff]
        %v2335 = vld [vmem:[#allocation2 + $0x30] sm:$0xff]
        %v2336 = vld [vmem:[#allocation2 + $0x38] sm:$0xff]
        %v2337 = vmax.f32 %v2329, 0.0
        %v2338 = vmax.f32 %v2330, 0.0
        %v2339 = vmax.f32 %v2331, 0.0
        %v2340 = vmax.f32 %v2332, 0.0
        %v2341 = vmax.f32 %v2333, 0.0
        %v2342 = vmax.f32 %v2334, 0.0
        %v2343 = vmax.f32 %v2335, 0.0
        %v2344 = vmax.f32 %v2336, 0.0
        %2345 = vst [vmem:[#allocation2] sm:$0xff] %v2337
        %2346 = vst [vmem:[#allocation2 + $0x8] sm:$0xff] %v2338
        %2347 = vst [vmem:[#allocation2 + $0x10] sm:$0xff] %v2339
        %2348 = vst [vmem:[#allocation2 + $0x18] sm:$0xff] %v2340
        %2349 = vst [vmem:[#allocation2 + $0x20] sm:$0xff] %v2341
        %2350 = vst [vmem:[#allocation2 + $0x28] sm:$0xff] %v2342
        %2351 = vst [vmem:[#allocation2 + $0x30] sm:$0xff] %v2343
        %2352 = vst [vmem:[#allocation2 + $0x38] sm:$0xff] %v2344
        %v2353 = vld [vmem:[#allocation12] sm:$0xf]
        %v2354 = vld [vmem:[#allocation2] sm:$0xff]
        %v2355 = vld [vmem:[#allocation2 + $0x8] sm:$0xff]
        %v2356 = vld [vmem:[#allocation2 + $0x10] sm:$0xff]
        %v2357 = vld [vmem:[#allocation2 + $0x18] sm:$0xff]
        %v2358 = vld [vmem:[#allocation2 + $0x20] sm:$0xff]
        %v2359 = vld [vmem:[#allocation2 + $0x28] sm:$0xff]
        %v2360 = vld [vmem:[#allocation2 + $0x30] sm:$0xff]
        %v2361 = vld [vmem:[#allocation2 + $0x38] sm:$0xff]
        %s2362 = scalar_lea.vmem [#allocation10], 2048
        %v2363 = vld [vmem:[%s2362] sm:$0xff]
        %v2364 = vld [vmem:[%s2362 + $0x8] sm:$0xff]
        %v2365 = vld [vmem:[%s2362 + $0x10] sm:$0xff]
        %v2366 = vld [vmem:[%s2362 + $0x18] sm:$0xff]
        %v2367 = vld [vmem:[%s2362 + $0x20] sm:$0xff]
        %v2368 = vld [vmem:[%s2362 + $0x28] sm:$0xff]
        %v2369 = vld [vmem:[%s2362 + $0x30] sm:$0xff]
        %v2370 = vld [vmem:[%s2362 + $0x38] sm:$0xff]
        %v2371 = vld [vmem:[%s2362 + $0x40] sm:$0xff]
        %v2372 = vld [vmem:[%s2362 + $0x48] sm:$0xff]
        %v2373 = vld [vmem:[%s2362 + $0x50] sm:$0xff]
        %v2374 = vld [vmem:[%s2362 + $0x58] sm:$0xff]
        %v2375 = vld [vmem:[%s2362 + $0x60] sm:$0xff]
        %v2376 = vld [vmem:[%s2362 + $0x68] sm:$0xff]
        %v2377 = vld [vmem:[%s2362 + $0x70] sm:$0xff]
        %v2378 = vld [vmem:[%s2362 + $0x78] sm:$0xff]
        %v2379 = vld [vmem:[%s2362 + $0x80] sm:$0xff]
        %v2380 = vld [vmem:[%s2362 + $0x88] sm:$0xff]
        %v2381 = vld [vmem:[%s2362 + $0x90] sm:$0xff]
        %v2382 = vld [vmem:[%s2362 + $0x98] sm:$0xff]
        %v2383 = vld [vmem:[%s2362 + $0xa0] sm:$0xff]
        %v2384 = vld [vmem:[%s2362 + $0xa8] sm:$0xff]
        %v2385 = vld [vmem:[%s2362 + $0xb0] sm:$0xff]
        %v2386 = vld [vmem:[%s2362 + $0xb8] sm:$0xff]
        %v2387 = vld [vmem:[%s2362 + $0xc0] sm:$0xff]
        %v2388 = vld [vmem:[%s2362 + $0xc8] sm:$0xff]
        %v2389 = vld [vmem:[%s2362 + $0xd0] sm:$0xff]
        %v2390 = vld [vmem:[%s2362 + $0xd8] sm:$0xff]
        %v2391 = vld [vmem:[%s2362 + $0xe0] sm:$0xff]
        %v2392 = vld [vmem:[%s2362 + $0xe8] sm:$0xff]
        %v2393 = vld [vmem:[%s2362 + $0xf0] sm:$0xff]
        %v2394 = vld [vmem:[%s2362 + $0xf8] sm:$0xff]
        %v2395 = vld [vmem:[%s2362 + $0x100] sm:$0xff]
        %v2396 = vld [vmem:[%s2362 + $0x108] sm:$0xff]
        %v2397 = vld [vmem:[%s2362 + $0x110] sm:$0xff]
        %v2398 = vld [vmem:[%s2362 + $0x118] sm:$0xff]
        %v2399 = vld [vmem:[%s2362 + $0x120] sm:$0xff]
        %v2400 = vld [vmem:[%s2362 + $0x128] sm:$0xff]
        %v2401 = vld [vmem:[%s2362 + $0x130] sm:$0xff]
        %v2402 = vld [vmem:[%s2362 + $0x138] sm:$0xff]
        %v2403 = vld [vmem:[%s2362 + $0x140] sm:$0xff]
        %v2404 = vld [vmem:[%s2362 + $0x148] sm:$0xff]
        %v2405 = vld [vmem:[%s2362 + $0x150] sm:$0xff]
        %v2406 = vld [vmem:[%s2362 + $0x158] sm:$0xff]
        %v2407 = vld [vmem:[%s2362 + $0x160] sm:$0xff]
        %v2408 = vld [vmem:[%s2362 + $0x168] sm:$0xff]
        %v2409 = vld [vmem:[%s2362 + $0x170] sm:$0xff]
        %v2410 = vld [vmem:[%s2362 + $0x178] sm:$0xff]
        %v2411 = vld [vmem:[%s2362 + $0x180] sm:$0xff]
        %v2412 = vld [vmem:[%s2362 + $0x188] sm:$0xff]
        %v2413 = vld [vmem:[%s2362 + $0x190] sm:$0xff]
        %v2414 = vld [vmem:[%s2362 + $0x198] sm:$0xff]
        %v2415 = vld [vmem:[%s2362 + $0x1a0] sm:$0xff]
        %v2416 = vld [vmem:[%s2362 + $0x1a8] sm:$0xff]
        %v2417 = vld [vmem:[%s2362 + $0x1b0] sm:$0xff]
        %v2418 = vld [vmem:[%s2362 + $0x1b8] sm:$0xff]
        %v2419 = vld [vmem:[%s2362 + $0x1c0] sm:$0xff]
        %v2420 = vld [vmem:[%s2362 + $0x1c8] sm:$0xff]
        %v2421 = vld [vmem:[%s2362 + $0x1d0] sm:$0xff]
        %v2422 = vld [vmem:[%s2362 + $0x1d8] sm:$0xff]
        %v2423 = vld [vmem:[%s2362 + $0x1e0] sm:$0xff]
        %v2424 = vld [vmem:[%s2362 + $0x1e8] sm:$0xff]
        %v2425 = vld [vmem:[%s2362 + $0x1f0] sm:$0xff]
        %v2426 = vld [vmem:[%s2362 + $0x1f8] sm:$0xff]
        %v2427 = vld [vmem:[%s2362 + $0x200] sm:$0xff]
        %v2428 = vld [vmem:[%s2362 + $0x208] sm:$0xff]
        %v2429 = vld [vmem:[%s2362 + $0x210] sm:$0xff]
        %v2430 = vld [vmem:[%s2362 + $0x218] sm:$0xff]
        %v2431 = vld [vmem:[%s2362 + $0x220] sm:$0xff]
        %v2432 = vld [vmem:[%s2362 + $0x228] sm:$0xff]
        %v2433 = vld [vmem:[%s2362 + $0x230] sm:$0xff]
        %v2434 = vld [vmem:[%s2362 + $0x238] sm:$0xff]
        %v2435 = vld [vmem:[%s2362 + $0x240] sm:$0xff]
        %v2436 = vld [vmem:[%s2362 + $0x248] sm:$0xff]
        %v2437 = vld [vmem:[%s2362 + $0x250] sm:$0xff]
        %v2438 = vld [vmem:[%s2362 + $0x258] sm:$0xff]
        %v2439 = vld [vmem:[%s2362 + $0x260] sm:$0xff]
        %v2440 = vld [vmem:[%s2362 + $0x268] sm:$0xff]
        %v2441 = vld [vmem:[%s2362 + $0x270] sm:$0xff]
        %v2442 = vld [vmem:[%s2362 + $0x278] sm:$0xff]
        %v2443 = vld [vmem:[%s2362 + $0x280] sm:$0xff]
        %v2444 = vld [vmem:[%s2362 + $0x288] sm:$0xff]
        %v2445 = vld [vmem:[%s2362 + $0x290] sm:$0xff]
        %v2446 = vld [vmem:[%s2362 + $0x298] sm:$0xff]
        %v2447 = vld [vmem:[%s2362 + $0x2a0] sm:$0xff]
        %v2448 = vld [vmem:[%s2362 + $0x2a8] sm:$0xff]
        %v2449 = vld [vmem:[%s2362 + $0x2b0] sm:$0xff]
        %v2450 = vld [vmem:[%s2362 + $0x2b8] sm:$0xff]
        %v2451 = vld [vmem:[%s2362 + $0x2c0] sm:$0xff]
        %v2452 = vld [vmem:[%s2362 + $0x2c8] sm:$0xff]
        %v2453 = vld [vmem:[%s2362 + $0x2d0] sm:$0xff]
        %v2454 = vld [vmem:[%s2362 + $0x2d8] sm:$0xff]
        %v2455 = vld [vmem:[%s2362 + $0x2e0] sm:$0xff]
        %v2456 = vld [vmem:[%s2362 + $0x2e8] sm:$0xff]
        %v2457 = vld [vmem:[%s2362 + $0x2f0] sm:$0xff]
        %v2458 = vld [vmem:[%s2362 + $0x2f8] sm:$0xff]
        %v2459 = vld [vmem:[%s2362 + $0x300] sm:$0xff]
        %v2460 = vld [vmem:[%s2362 + $0x308] sm:$0xff]
        %v2461 = vld [vmem:[%s2362 + $0x310] sm:$0xff]
        %v2462 = vld [vmem:[%s2362 + $0x318] sm:$0xff]
        %v2463 = vld [vmem:[%s2362 + $0x320] sm:$0xff]
        %v2464 = vld [vmem:[%s2362 + $0x328] sm:$0xff]
        %v2465 = vld [vmem:[%s2362 + $0x330] sm:$0xff]
        %v2466 = vld [vmem:[%s2362 + $0x338] sm:$0xff]
        %v2467 = vld [vmem:[%s2362 + $0x340] sm:$0xff]
        %v2468 = vld [vmem:[%s2362 + $0x348] sm:$0xff]
        %v2469 = vld [vmem:[%s2362 + $0x350] sm:$0xff]
        %v2470 = vld [vmem:[%s2362 + $0x358] sm:$0xff]
        %v2471 = vld [vmem:[%s2362 + $0x360] sm:$0xff]
        %v2472 = vld [vmem:[%s2362 + $0x368] sm:$0xff]
        %v2473 = vld [vmem:[%s2362 + $0x370] sm:$0xff]
        %v2474 = vld [vmem:[%s2362 + $0x378] sm:$0xff]
        %v2475 = vld [vmem:[%s2362 + $0x380] sm:$0xff]
        %v2476 = vld [vmem:[%s2362 + $0x388] sm:$0xff]
        %v2477 = vld [vmem:[%s2362 + $0x390] sm:$0xff]
        %v2478 = vld [vmem:[%s2362 + $0x398] sm:$0xff]
        %v2479 = vld [vmem:[%s2362 + $0x3a0] sm:$0xff]
        %v2480 = vld [vmem:[%s2362 + $0x3a8] sm:$0xff]
        %v2481 = vld [vmem:[%s2362 + $0x3b0] sm:$0xff]
        %v2482 = vld [vmem:[%s2362 + $0x3b8] sm:$0xff]
        %v2483 = vld [vmem:[%s2362 + $0x3c0] sm:$0xff]
        %v2484 = vld [vmem:[%s2362 + $0x3c8] sm:$0xff]
        %v2485 = vld [vmem:[%s2362 + $0x3d0] sm:$0xff]
        %v2486 = vld [vmem:[%s2362 + $0x3d8] sm:$0xff]
        %v2487 = vld [vmem:[%s2362 + $0x3e0] sm:$0xff]
        %v2488 = vld [vmem:[%s2362 + $0x3e8] sm:$0xff]
        %v2489 = vld [vmem:[%s2362 + $0x3f0] sm:$0xff]
        %v2490 = vld [vmem:[%s2362 + $0x3f8] sm:$0xff]
        %v2491 = vld [vmem:[%s2362 + $0x400] sm:$0xff]
        %v2492 = vld [vmem:[%s2362 + $0x408] sm:$0xff]
        %v2493 = vld [vmem:[%s2362 + $0x410] sm:$0xff]
        %v2494 = vld [vmem:[%s2362 + $0x418] sm:$0xff]
        %v2495 = vld [vmem:[%s2362 + $0x420] sm:$0xff]
        %v2496 = vld [vmem:[%s2362 + $0x428] sm:$0xff]
        %v2497 = vld [vmem:[%s2362 + $0x430] sm:$0xff]
        %v2498 = vld [vmem:[%s2362 + $0x438] sm:$0xff]
        %v2499 = vld [vmem:[%s2362 + $0x440] sm:$0xff]
        %v2500 = vld [vmem:[%s2362 + $0x448] sm:$0xff]
        %v2501 = vld [vmem:[%s2362 + $0x450] sm:$0xff]
        %v2502 = vld [vmem:[%s2362 + $0x458] sm:$0xff]
        %v2503 = vld [vmem:[%s2362 + $0x460] sm:$0xff]
        %v2504 = vld [vmem:[%s2362 + $0x468] sm:$0xff]
        %v2505 = vld [vmem:[%s2362 + $0x470] sm:$0xff]
        %v2506 = vld [vmem:[%s2362 + $0x478] sm:$0xff]
        %v2507 = vld [vmem:[%s2362 + $0x480] sm:$0xff]
        %v2508 = vld [vmem:[%s2362 + $0x488] sm:$0xff]
        %v2509 = vld [vmem:[%s2362 + $0x490] sm:$0xff]
        %v2510 = vld [vmem:[%s2362 + $0x498] sm:$0xff]
        %v2511 = vld [vmem:[%s2362 + $0x4a0] sm:$0xff]
        %v2512 = vld [vmem:[%s2362 + $0x4a8] sm:$0xff]
        %v2513 = vld [vmem:[%s2362 + $0x4b0] sm:$0xff]
        %v2514 = vld [vmem:[%s2362 + $0x4b8] sm:$0xff]
        %v2515 = vld [vmem:[%s2362 + $0x4c0] sm:$0xff]
        %v2516 = vld [vmem:[%s2362 + $0x4c8] sm:$0xff]
        %v2517 = vld [vmem:[%s2362 + $0x4d0] sm:$0xff]
        %v2518 = vld [vmem:[%s2362 + $0x4d8] sm:$0xff]
        %v2519 = vld [vmem:[%s2362 + $0x4e0] sm:$0xff]
        %v2520 = vld [vmem:[%s2362 + $0x4e8] sm:$0xff]
        %v2521 = vld [vmem:[%s2362 + $0x4f0] sm:$0xff]
        %v2522 = vld [vmem:[%s2362 + $0x4f8] sm:$0xff]
        %v2523 = vld [vmem:[%s2362 + $0x500] sm:$0xff]
        %v2524 = vld [vmem:[%s2362 + $0x508] sm:$0xff]
        %v2525 = vld [vmem:[%s2362 + $0x510] sm:$0xff]
        %v2526 = vld [vmem:[%s2362 + $0x518] sm:$0xff]
        %v2527 = vld [vmem:[%s2362 + $0x520] sm:$0xff]
        %v2528 = vld [vmem:[%s2362 + $0x528] sm:$0xff]
        %v2529 = vld [vmem:[%s2362 + $0x530] sm:$0xff]
        %v2530 = vld [vmem:[%s2362 + $0x538] sm:$0xff]
        %v2531 = vld [vmem:[%s2362 + $0x540] sm:$0xff]
        %v2532 = vld [vmem:[%s2362 + $0x548] sm:$0xff]
        %v2533 = vld [vmem:[%s2362 + $0x550] sm:$0xff]
        %v2534 = vld [vmem:[%s2362 + $0x558] sm:$0xff]
        %v2535 = vld [vmem:[%s2362 + $0x560] sm:$0xff]
        %v2536 = vld [vmem:[%s2362 + $0x568] sm:$0xff]
        %v2537 = vld [vmem:[%s2362 + $0x570] sm:$0xff]
        %v2538 = vld [vmem:[%s2362 + $0x578] sm:$0xff]
        %v2539 = vld [vmem:[%s2362 + $0x580] sm:$0xff]
        %v2540 = vld [vmem:[%s2362 + $0x588] sm:$0xff]
        %v2541 = vld [vmem:[%s2362 + $0x590] sm:$0xff]
        %v2542 = vld [vmem:[%s2362 + $0x598] sm:$0xff]
        %v2543 = vld [vmem:[%s2362 + $0x5a0] sm:$0xff]
        %v2544 = vld [vmem:[%s2362 + $0x5a8] sm:$0xff]
        %v2545 = vld [vmem:[%s2362 + $0x5b0] sm:$0xff]
        %v2546 = vld [vmem:[%s2362 + $0x5b8] sm:$0xff]
        %v2547 = vld [vmem:[%s2362 + $0x5c0] sm:$0xff]
        %v2548 = vld [vmem:[%s2362 + $0x5c8] sm:$0xff]
        %v2549 = vld [vmem:[%s2362 + $0x5d0] sm:$0xff]
        %v2550 = vld [vmem:[%s2362 + $0x5d8] sm:$0xff]
        %v2551 = vld [vmem:[%s2362 + $0x5e0] sm:$0xff]
        %v2552 = vld [vmem:[%s2362 + $0x5e8] sm:$0xff]
        %v2553 = vld [vmem:[%s2362 + $0x5f0] sm:$0xff]
        %v2554 = vld [vmem:[%s2362 + $0x5f8] sm:$0xff]
        %v2555 = vld [vmem:[%s2362 + $0x600] sm:$0xff]
        %v2556 = vld [vmem:[%s2362 + $0x608] sm:$0xff]
        %v2557 = vld [vmem:[%s2362 + $0x610] sm:$0xff]
        %v2558 = vld [vmem:[%s2362 + $0x618] sm:$0xff]
        %v2559 = vld [vmem:[%s2362 + $0x620] sm:$0xff]
        %v2560 = vld [vmem:[%s2362 + $0x628] sm:$0xff]
        %v2561 = vld [vmem:[%s2362 + $0x630] sm:$0xff]
        %v2562 = vld [vmem:[%s2362 + $0x638] sm:$0xff]
        %v2563 = vld [vmem:[%s2362 + $0x640] sm:$0xff]
        %v2564 = vld [vmem:[%s2362 + $0x648] sm:$0xff]
        %v2565 = vld [vmem:[%s2362 + $0x650] sm:$0xff]
        %v2566 = vld [vmem:[%s2362 + $0x658] sm:$0xff]
        %v2567 = vld [vmem:[%s2362 + $0x660] sm:$0xff]
        %v2568 = vld [vmem:[%s2362 + $0x668] sm:$0xff]
        %v2569 = vld [vmem:[%s2362 + $0x670] sm:$0xff]
        %v2570 = vld [vmem:[%s2362 + $0x678] sm:$0xff]
        %v2571 = vld [vmem:[%s2362 + $0x680] sm:$0xff]
        %v2572 = vld [vmem:[%s2362 + $0x688] sm:$0xff]
        %v2573 = vld [vmem:[%s2362 + $0x690] sm:$0xff]
        %v2574 = vld [vmem:[%s2362 + $0x698] sm:$0xff]
        %v2575 = vld [vmem:[%s2362 + $0x6a0] sm:$0xff]
        %v2576 = vld [vmem:[%s2362 + $0x6a8] sm:$0xff]
        %v2577 = vld [vmem:[%s2362 + $0x6b0] sm:$0xff]
        %v2578 = vld [vmem:[%s2362 + $0x6b8] sm:$0xff]
        %v2579 = vld [vmem:[%s2362 + $0x6c0] sm:$0xff]
        %v2580 = vld [vmem:[%s2362 + $0x6c8] sm:$0xff]
        %v2581 = vld [vmem:[%s2362 + $0x6d0] sm:$0xff]
        %v2582 = vld [vmem:[%s2362 + $0x6d8] sm:$0xff]
        %v2583 = vld [vmem:[%s2362 + $0x6e0] sm:$0xff]
        %v2584 = vld [vmem:[%s2362 + $0x6e8] sm:$0xff]
        %v2585 = vld [vmem:[%s2362 + $0x6f0] sm:$0xff]
        %v2586 = vld [vmem:[%s2362 + $0x6f8] sm:$0xff]
        %v2587 = vld [vmem:[%s2362 + $0x700] sm:$0xff]
        %v2588 = vld [vmem:[%s2362 + $0x708] sm:$0xff]
        %v2589 = vld [vmem:[%s2362 + $0x710] sm:$0xff]
        %v2590 = vld [vmem:[%s2362 + $0x718] sm:$0xff]
        %v2591 = vld [vmem:[%s2362 + $0x720] sm:$0xff]
        %v2592 = vld [vmem:[%s2362 + $0x728] sm:$0xff]
        %v2593 = vld [vmem:[%s2362 + $0x730] sm:$0xff]
        %v2594 = vld [vmem:[%s2362 + $0x738] sm:$0xff]
        %v2595 = vld [vmem:[%s2362 + $0x740] sm:$0xff]
        %v2596 = vld [vmem:[%s2362 + $0x748] sm:$0xff]
        %v2597 = vld [vmem:[%s2362 + $0x750] sm:$0xff]
        %v2598 = vld [vmem:[%s2362 + $0x758] sm:$0xff]
        %v2599 = vld [vmem:[%s2362 + $0x760] sm:$0xff]
        %v2600 = vld [vmem:[%s2362 + $0x768] sm:$0xff]
        %v2601 = vld [vmem:[%s2362 + $0x770] sm:$0xff]
        %v2602 = vld [vmem:[%s2362 + $0x778] sm:$0xff]
        %v2603 = vld [vmem:[%s2362 + $0x780] sm:$0xff]
        %v2604 = vld [vmem:[%s2362 + $0x788] sm:$0xff]
        %v2605 = vld [vmem:[%s2362 + $0x790] sm:$0xff]
        %v2606 = vld [vmem:[%s2362 + $0x798] sm:$0xff]
        %v2607 = vld [vmem:[%s2362 + $0x7a0] sm:$0xff]
        %v2608 = vld [vmem:[%s2362 + $0x7a8] sm:$0xff]
        %v2609 = vld [vmem:[%s2362 + $0x7b0] sm:$0xff]
        %v2610 = vld [vmem:[%s2362 + $0x7b8] sm:$0xff]
        %v2611 = vld [vmem:[%s2362 + $0x7c0] sm:$0xff]
        %v2612 = vld [vmem:[%s2362 + $0x7c8] sm:$0xff]
        %v2613 = vld [vmem:[%s2362 + $0x7d0] sm:$0xff]
        %v2614 = vld [vmem:[%s2362 + $0x7d8] sm:$0xff]
        %v2615 = vld [vmem:[%s2362 + $0x7e0] sm:$0xff]
        %v2616 = vld [vmem:[%s2362 + $0x7e8] sm:$0xff]
        %v2617 = vld [vmem:[%s2362 + $0x7f0] sm:$0xff]
        %v2618 = vld [vmem:[%s2362 + $0x7f8] sm:$0xff]
        %v2620 = vperm.slane %v2353, 0
        %v2621 = vperm.slane %v2353, 1
        %v2622 = vperm.slane %v2353, 2
        %v2623 = vperm.slane %v2353, 3
        %2628 = vmatpush.msra.mxu0 %v2423
        %2629 = vmatpush.msra.mxu0 %v2419
        %2630 = vmatpush.msra.mxu0 %v2415
        %2631 = vmatpush.msra.mxu0 %v2411
        %2632 = vmatpush.msra.mxu0 %v2407
        %2633 = vmatpush.msra.mxu0 %v2403
        %2634 = vmatpush.msra.mxu0 %v2399
        %2635 = vmatpush.msra.mxu0 %v2395
        %2636 = vmatpush.msra.mxu0 %v2391
        %2637 = vmatpush.msra.mxu0 %v2387
        %2638 = vmatpush.msra.mxu0 %v2383
        %2639 = vmatpush.msra.mxu0 %v2379
        %2640 = vmatpush.msra.mxu0 %v2375
        %2641 = vmatpush.msra.mxu0 %v2371
        %2642 = vmatpush.msra.mxu0 %v2367
        %2643 = vmatpush.msra.mxu0 %v2363
        %2644 = vmatmul.f32.gmra.mxu0 %v2354
        %v2645 = vpop.f32.mrf.mxu0
        %v2646 = vadd.f32 %v2620, %v2645
        %2647 = vmatmul.f32.gmra.mxu0 %v2358
        %v2648 = vpop.f32.mrf.mxu0
        %v2649 = vadd.f32 %v2620, %v2648
        %2650 = vdwg.mxu0
        %2651 = vmatpush.msra.mxu0 %v2487
        %2652 = vmatpush.msra.mxu0 %v2483
        %2653 = vmatpush.msra.mxu0 %v2479
        %2654 = vmatpush.msra.mxu0 %v2475
        %2655 = vmatpush.msra.mxu0 %v2471
        %2656 = vmatpush.msra.mxu0 %v2467
        %2657 = vmatpush.msra.mxu0 %v2463
        %2658 = vmatpush.msra.mxu0 %v2459
        %2659 = vmatpush.msra.mxu0 %v2455
        %2660 = vmatpush.msra.mxu0 %v2451
        %2661 = vmatpush.msra.mxu0 %v2447
        %2662 = vmatpush.msra.mxu0 %v2443
        %2663 = vmatpush.msra.mxu0 %v2439
        %2664 = vmatpush.msra.mxu0 %v2435
        %2665 = vmatpush.msra.mxu0 %v2431
        %2666 = vmatpush.msra.mxu0 %v2427
        %2667 = vmatmul.f32.gmra.mxu0 %v2355
        %v2668 = vpop.f32.mrf.mxu0
        %v2669 = vadd.f32 %v2646, %v2668
        %2670 = vmatmul.f32.gmra.mxu0 %v2359
        %v2671 = vpop.f32.mrf.mxu0
        %v2672 = vadd.f32 %v2649, %v2671
        %2673 = vdwg.mxu0
        %2674 = vmatpush.msra.mxu0 %v2551
        %2675 = vmatpush.msra.mxu0 %v2547
        %2676 = vmatpush.msra.mxu0 %v2543
        %2677 = vmatpush.msra.mxu0 %v2539
        %2678 = vmatpush.msra.mxu0 %v2535
        %2679 = vmatpush.msra.mxu0 %v2531
        %2680 = vmatpush.msra.mxu0 %v2527
        %2681 = vmatpush.msra.mxu0 %v2523
        %2682 = vmatpush.msra.mxu0 %v2519
        %2683 = vmatpush.msra.mxu0 %v2515
        %2684 = vmatpush.msra.mxu0 %v2511
        %2685 = vmatpush.msra.mxu0 %v2507
        %2686 = vmatpush.msra.mxu0 %v2503
        %2687 = vmatpush.msra.mxu0 %v2499
        %2688 = vmatpush.msra.mxu0 %v2495
        %2689 = vmatpush.msra.mxu0 %v2491
        %2690 = vmatmul.f32.gmra.mxu0 %v2356
        %v2691 = vpop.f32.mrf.mxu0
        %v2692 = vadd.f32 %v2669, %v2691
        %2693 = vmatmul.f32.gmra.mxu0 %v2360
        %v2694 = vpop.f32.mrf.mxu0
        %v2695 = vadd.f32 %v2672, %v2694
        %2696 = vdwg.mxu0
        %2697 = vmatpush.msra.mxu0 %v2615
        %2698 = vmatpush.msra.mxu0 %v2611
        %2699 = vmatpush.msra.mxu0 %v2607
        %2700 = vmatpush.msra.mxu0 %v2603
        %2701 = vmatpush.msra.mxu0 %v2599
        %2702 = vmatpush.msra.mxu0 %v2595
        %2703 = vmatpush.msra.mxu0 %v2591
        %2704 = vmatpush.msra.mxu0 %v2587
        %2705 = vmatpush.msra.mxu0 %v2583
        %2706 = vmatpush.msra.mxu0 %v2579
        %2707 = vmatpush.msra.mxu0 %v2575
        %2708 = vmatpush.msra.mxu0 %v2571
        %2709 = vmatpush.msra.mxu0 %v2567
        %2710 = vmatpush.msra.mxu0 %v2563
        %2711 = vmatpush.msra.mxu0 %v2559
        %2712 = vmatpush.msra.mxu0 %v2555
        %2713 = vmatmul.f32.gmra.mxu0 %v2357
        %v2714 = vpop.f32.mrf.mxu0
        %v2715 = vadd.f32 %v2692, %v2714
        %2716 = vmatmul.f32.gmra.mxu0 %v2361
        %v2717 = vpop.f32.mrf.mxu0
        %v2718 = vadd.f32 %v2695, %v2717
        %2719 = vdwg.mxu0
        %2720 = vmatpush.msra.mxu0 %v2424
        %2721 = vmatpush.msra.mxu0 %v2420
        %2722 = vmatpush.msra.mxu0 %v2416
        %2723 = vmatpush.msra.mxu0 %v2412
        %2724 = vmatpush.msra.mxu0 %v2408
        %2725 = vmatpush.msra.mxu0 %v2404
        %2726 = vmatpush.msra.mxu0 %v2400
        %2727 = vmatpush.msra.mxu0 %v2396
        %2728 = vmatpush.msra.mxu0 %v2392
        %2729 = vmatpush.msra.mxu0 %v2388
        %2730 = vmatpush.msra.mxu0 %v2384
        %2731 = vmatpush.msra.mxu0 %v2380
        %2732 = vmatpush.msra.mxu0 %v2376
        %2733 = vmatpush.msra.mxu0 %v2372
        %2734 = vmatpush.msra.mxu0 %v2368
        %2735 = vmatpush.msra.mxu0 %v2364
        %2736 = vmatmul.f32.gmra.mxu0 %v2354
        %v2737 = vpop.f32.mrf.mxu0
        %v2738 = vadd.f32 %v2621, %v2737
        %2739 = vmatmul.f32.gmra.mxu0 %v2358
        %v2740 = vpop.f32.mrf.mxu0
        %v2741 = vadd.f32 %v2621, %v2740
        %2742 = vdwg.mxu0
        %2743 = vmatpush.msra.mxu0 %v2488
        %2744 = vmatpush.msra.mxu0 %v2484
        %2745 = vmatpush.msra.mxu0 %v2480
        %2746 = vmatpush.msra.mxu0 %v2476
        %2747 = vmatpush.msra.mxu0 %v2472
        %2748 = vmatpush.msra.mxu0 %v2468
        %2749 = vmatpush.msra.mxu0 %v2464
        %2750 = vmatpush.msra.mxu0 %v2460
        %2751 = vmatpush.msra.mxu0 %v2456
        %2752 = vmatpush.msra.mxu0 %v2452
        %2753 = vmatpush.msra.mxu0 %v2448
        %2754 = vmatpush.msra.mxu0 %v2444
        %2755 = vmatpush.msra.mxu0 %v2440
        %2756 = vmatpush.msra.mxu0 %v2436
        %2757 = vmatpush.msra.mxu0 %v2432
        %2758 = vmatpush.msra.mxu0 %v2428
        %2759 = vmatmul.f32.gmra.mxu0 %v2355
        %v2760 = vpop.f32.mrf.mxu0
        %v2761 = vadd.f32 %v2738, %v2760
        %2762 = vmatmul.f32.gmra.mxu0 %v2359
        %v2763 = vpop.f32.mrf.mxu0
        %v2764 = vadd.f32 %v2741, %v2763
        %2765 = vdwg.mxu0
        %2766 = vmatpush.msra.mxu0 %v2552
        %2767 = vmatpush.msra.mxu0 %v2548
        %2768 = vmatpush.msra.mxu0 %v2544
        %2769 = vmatpush.msra.mxu0 %v2540
        %2770 = vmatpush.msra.mxu0 %v2536
        %2771 = vmatpush.msra.mxu0 %v2532
        %2772 = vmatpush.msra.mxu0 %v2528
        %2773 = vmatpush.msra.mxu0 %v2524
        %2774 = vmatpush.msra.mxu0 %v2520
        %2775 = vmatpush.msra.mxu0 %v2516
        %2776 = vmatpush.msra.mxu0 %v2512
        %2777 = vmatpush.msra.mxu0 %v2508
        %2778 = vmatpush.msra.mxu0 %v2504
        %2779 = vmatpush.msra.mxu0 %v2500
        %2780 = vmatpush.msra.mxu0 %v2496
        %2781 = vmatpush.msra.mxu0 %v2492
        %2782 = vmatmul.f32.gmra.mxu0 %v2356
        %v2783 = vpop.f32.mrf.mxu0
        %v2784 = vadd.f32 %v2761, %v2783
        %2785 = vmatmul.f32.gmra.mxu0 %v2360
        %v2786 = vpop.f32.mrf.mxu0
        %v2787 = vadd.f32 %v2764, %v2786
        %2788 = vdwg.mxu0
        %2789 = vmatpush.msra.mxu0 %v2616
        %2790 = vmatpush.msra.mxu0 %v2612
        %2791 = vmatpush.msra.mxu0 %v2608
        %2792 = vmatpush.msra.mxu0 %v2604
        %2793 = vmatpush.msra.mxu0 %v2600
        %2794 = vmatpush.msra.mxu0 %v2596
        %2795 = vmatpush.msra.mxu0 %v2592
        %2796 = vmatpush.msra.mxu0 %v2588
        %2797 = vmatpush.msra.mxu0 %v2584
        %2798 = vmatpush.msra.mxu0 %v2580
        %2799 = vmatpush.msra.mxu0 %v2576
        %2800 = vmatpush.msra.mxu0 %v2572
        %2801 = vmatpush.msra.mxu0 %v2568
        %2802 = vmatpush.msra.mxu0 %v2564
        %2803 = vmatpush.msra.mxu0 %v2560
        %2804 = vmatpush.msra.mxu0 %v2556
        %2805 = vmatmul.f32.gmra.mxu0 %v2357
        %v2806 = vpop.f32.mrf.mxu0
        %v2807 = vadd.f32 %v2784, %v2806
        %2808 = vmatmul.f32.gmra.mxu0 %v2361
        %v2809 = vpop.f32.mrf.mxu0
        %v2810 = vadd.f32 %v2787, %v2809
        %2811 = vdwg.mxu0
        %2812 = vmatpush.msra.mxu0 %v2425
        %2813 = vmatpush.msra.mxu0 %v2421
        %2814 = vmatpush.msra.mxu0 %v2417
        %2815 = vmatpush.msra.mxu0 %v2413
        %2816 = vmatpush.msra.mxu0 %v2409
        %2817 = vmatpush.msra.mxu0 %v2405
        %2818 = vmatpush.msra.mxu0 %v2401
        %2819 = vmatpush.msra.mxu0 %v2397
        %2820 = vmatpush.msra.mxu0 %v2393
        %2821 = vmatpush.msra.mxu0 %v2389
        %2822 = vmatpush.msra.mxu0 %v2385
        %2823 = vmatpush.msra.mxu0 %v2381
        %2824 = vmatpush.msra.mxu0 %v2377
        %2825 = vmatpush.msra.mxu0 %v2373
        %2826 = vmatpush.msra.mxu0 %v2369
        %2827 = vmatpush.msra.mxu0 %v2365
        %2828 = vmatmul.f32.gmra.mxu0 %v2354
        %v2829 = vpop.f32.mrf.mxu0
        %v2830 = vadd.f32 %v2622, %v2829
        %2831 = vmatmul.f32.gmra.mxu0 %v2358
        %v2832 = vpop.f32.mrf.mxu0
        %v2833 = vadd.f32 %v2622, %v2832
        %2834 = vdwg.mxu0
        %2835 = vmatpush.msra.mxu0 %v2489
        %2836 = vmatpush.msra.mxu0 %v2485
        %2837 = vmatpush.msra.mxu0 %v2481
        %2838 = vmatpush.msra.mxu0 %v2477
        %2839 = vmatpush.msra.mxu0 %v2473
        %2840 = vmatpush.msra.mxu0 %v2469
        %2841 = vmatpush.msra.mxu0 %v2465
        %2842 = vmatpush.msra.mxu0 %v2461
        %2843 = vmatpush.msra.mxu0 %v2457
        %2844 = vmatpush.msra.mxu0 %v2453
        %2845 = vmatpush.msra.mxu0 %v2449
        %2846 = vmatpush.msra.mxu0 %v2445
        %2847 = vmatpush.msra.mxu0 %v2441
        %2848 = vmatpush.msra.mxu0 %v2437
        %2849 = vmatpush.msra.mxu0 %v2433
        %2850 = vmatpush.msra.mxu0 %v2429
        %2851 = vmatmul.f32.gmra.mxu0 %v2355
        %v2852 = vpop.f32.mrf.mxu0
        %v2853 = vadd.f32 %v2830, %v2852
        %2854 = vmatmul.f32.gmra.mxu0 %v2359
        %v2855 = vpop.f32.mrf.mxu0
        %v2856 = vadd.f32 %v2833, %v2855
        %2857 = vdwg.mxu0
        %2858 = vmatpush.msra.mxu0 %v2553
        %2859 = vmatpush.msra.mxu0 %v2549
        %2860 = vmatpush.msra.mxu0 %v2545
        %2861 = vmatpush.msra.mxu0 %v2541
        %2862 = vmatpush.msra.mxu0 %v2537
        %2863 = vmatpush.msra.mxu0 %v2533
        %2864 = vmatpush.msra.mxu0 %v2529
        %2865 = vmatpush.msra.mxu0 %v2525
        %2866 = vmatpush.msra.mxu0 %v2521
        %2867 = vmatpush.msra.mxu0 %v2517
        %2868 = vmatpush.msra.mxu0 %v2513
        %2869 = vmatpush.msra.mxu0 %v2509
        %2870 = vmatpush.msra.mxu0 %v2505
        %2871 = vmatpush.msra.mxu0 %v2501
        %2872 = vmatpush.msra.mxu0 %v2497
        %2873 = vmatpush.msra.mxu0 %v2493
        %2874 = vmatmul.f32.gmra.mxu0 %v2356
        %v2875 = vpop.f32.mrf.mxu0
        %v2876 = vadd.f32 %v2853, %v2875
        %2877 = vmatmul.f32.gmra.mxu0 %v2360
        %v2878 = vpop.f32.mrf.mxu0
        %v2879 = vadd.f32 %v2856, %v2878
        %2880 = vdwg.mxu0
        %2881 = vmatpush.msra.mxu0 %v2617
        %2882 = vmatpush.msra.mxu0 %v2613
        %2883 = vmatpush.msra.mxu0 %v2609
        %2884 = vmatpush.msra.mxu0 %v2605
        %2885 = vmatpush.msra.mxu0 %v2601
        %2886 = vmatpush.msra.mxu0 %v2597
        %2887 = vmatpush.msra.mxu0 %v2593
        %2888 = vmatpush.msra.mxu0 %v2589
        %2889 = vmatpush.msra.mxu0 %v2585
        %2890 = vmatpush.msra.mxu0 %v2581
        %2891 = vmatpush.msra.mxu0 %v2577
        %2892 = vmatpush.msra.mxu0 %v2573
        %2893 = vmatpush.msra.mxu0 %v2569
        %2894 = vmatpush.msra.mxu0 %v2565
        %2895 = vmatpush.msra.mxu0 %v2561
        %2896 = vmatpush.msra.mxu0 %v2557
        %2897 = vmatmul.f32.gmra.mxu0 %v2357
        %v2898 = vpop.f32.mrf.mxu0
        %v2899 = vadd.f32 %v2876, %v2898
        %2900 = vmatmul.f32.gmra.mxu0 %v2361
        %v2901 = vpop.f32.mrf.mxu0
        %v2902 = vadd.f32 %v2879, %v2901
        %2903 = vdwg.mxu0
        %2904 = vmatpush.msra.mxu0 %v2426
        %2905 = vmatpush.msra.mxu0 %v2422
        %2906 = vmatpush.msra.mxu0 %v2418
        %2907 = vmatpush.msra.mxu0 %v2414
        %2908 = vmatpush.msra.mxu0 %v2410
        %2909 = vmatpush.msra.mxu0 %v2406
        %2910 = vmatpush.msra.mxu0 %v2402
        %2911 = vmatpush.msra.mxu0 %v2398
        %2912 = vmatpush.msra.mxu0 %v2394
        %2913 = vmatpush.msra.mxu0 %v2390
        %2914 = vmatpush.msra.mxu0 %v2386
        %2915 = vmatpush.msra.mxu0 %v2382
        %2916 = vmatpush.msra.mxu0 %v2378
        %2917 = vmatpush.msra.mxu0 %v2374
        %2918 = vmatpush.msra.mxu0 %v2370
        %2919 = vmatpush.msra.mxu0 %v2366
        %2920 = vmatmul.f32.gmra.mxu0 %v2354
        %v2921 = vpop.f32.mrf.mxu0
        %v2922 = vadd.f32 %v2623, %v2921
        %2923 = vmatmul.f32.gmra.mxu0 %v2358
        %v2924 = vpop.f32.mrf.mxu0
        %v2925 = vadd.f32 %v2623, %v2924
        %2926 = vdwg.mxu0
        %2927 = vmatpush.msra.mxu0 %v2490
        %2928 = vmatpush.msra.mxu0 %v2486
        %2929 = vmatpush.msra.mxu0 %v2482
        %2930 = vmatpush.msra.mxu0 %v2478
        %2931 = vmatpush.msra.mxu0 %v2474
        %2932 = vmatpush.msra.mxu0 %v2470
        %2933 = vmatpush.msra.mxu0 %v2466
        %2934 = vmatpush.msra.mxu0 %v2462
        %2935 = vmatpush.msra.mxu0 %v2458
        %2936 = vmatpush.msra.mxu0 %v2454
        %2937 = vmatpush.msra.mxu0 %v2450
        %2938 = vmatpush.msra.mxu0 %v2446
        %2939 = vmatpush.msra.mxu0 %v2442
        %2940 = vmatpush.msra.mxu0 %v2438
        %2941 = vmatpush.msra.mxu0 %v2434
        %2942 = vmatpush.msra.mxu0 %v2430
        %2943 = vmatmul.f32.gmra.mxu0 %v2355
        %v2944 = vpop.f32.mrf.mxu0
        %v2945 = vadd.f32 %v2922, %v2944
        %2946 = vmatmul.f32.gmra.mxu0 %v2359
        %v2947 = vpop.f32.mrf.mxu0
        %v2948 = vadd.f32 %v2925, %v2947
        %2949 = vdwg.mxu0
        %2950 = vmatpush.msra.mxu0 %v2554
        %2951 = vmatpush.msra.mxu0 %v2550
        %2952 = vmatpush.msra.mxu0 %v2546
        %2953 = vmatpush.msra.mxu0 %v2542
        %2954 = vmatpush.msra.mxu0 %v2538
        %2955 = vmatpush.msra.mxu0 %v2534
        %2956 = vmatpush.msra.mxu0 %v2530
        %2957 = vmatpush.msra.mxu0 %v2526
        %2958 = vmatpush.msra.mxu0 %v2522
        %2959 = vmatpush.msra.mxu0 %v2518
        %2960 = vmatpush.msra.mxu0 %v2514
        %2961 = vmatpush.msra.mxu0 %v2510
        %2962 = vmatpush.msra.mxu0 %v2506
        %2963 = vmatpush.msra.mxu0 %v2502
        %2964 = vmatpush.msra.mxu0 %v2498
        %2965 = vmatpush.msra.mxu0 %v2494
        %2966 = vmatmul.f32.gmra.mxu0 %v2356
        %v2967 = vpop.f32.mrf.mxu0
        %v2968 = vadd.f32 %v2945, %v2967
        %2969 = vmatmul.f32.gmra.mxu0 %v2360
        %v2970 = vpop.f32.mrf.mxu0
        %v2971 = vadd.f32 %v2948, %v2970
        %2972 = vdwg.mxu0
        %2973 = vmatpush.msra.mxu0 %v2618
        %2974 = vmatpush.msra.mxu0 %v2614
        %2975 = vmatpush.msra.mxu0 %v2610
        %2976 = vmatpush.msra.mxu0 %v2606
        %2977 = vmatpush.msra.mxu0 %v2602
        %2978 = vmatpush.msra.mxu0 %v2598
        %2979 = vmatpush.msra.mxu0 %v2594
        %2980 = vmatpush.msra.mxu0 %v2590
        %2981 = vmatpush.msra.mxu0 %v2586
        %2982 = vmatpush.msra.mxu0 %v2582
        %2983 = vmatpush.msra.mxu0 %v2578
        %2984 = vmatpush.msra.mxu0 %v2574
        %2985 = vmatpush.msra.mxu0 %v2570
        %2986 = vmatpush.msra.mxu0 %v2566
        %2987 = vmatpush.msra.mxu0 %v2562
        %2988 = vmatpush.msra.mxu0 %v2558
        %2989 = vmatmul.f32.gmra.mxu0 %v2357
        %v2990 = vpop.f32.mrf.mxu0
        %v2991 = vadd.f32 %v2968, %v2990
        %2992 = vmatmul.f32.gmra.mxu0 %v2361
        %v2993 = vpop.f32.mrf.mxu0
        %v2994 = vadd.f32 %v2971, %v2993
        %2995 = vdwg.mxu0
        %2996 = vst [vmem:[#allocation3] sm:$0xff] %v2715
        %2997 = vst [vmem:[#allocation3 + $0x8] sm:$0xff] %v2807
        %2998 = vst [vmem:[#allocation3 + $0x10] sm:$0xff] %v2899
        %2999 = vst [vmem:[#allocation3 + $0x18] sm:$0xff] %v2991
        %3000 = vst [vmem:[#allocation3 + $0x20] sm:$0xff] %v2718
        %3001 = vst [vmem:[#allocation3 + $0x28] sm:$0xff] %v2810
        %3002 = vst [vmem:[#allocation3 + $0x30] sm:$0xff] %v2902
        %3003 = vst [vmem:[#allocation3 + $0x38] sm:$0xff] %v2994
        %v3004 = vld [vmem:[#allocation2] sm:$0xff]
        %v3005 = vld [vmem:[#allocation2 + $0x8] sm:$0xff]
        %v3006 = vld [vmem:[#allocation2 + $0x10] sm:$0xff]
        %v3007 = vld [vmem:[#allocation2 + $0x18] sm:$0xff]
        %v3008 = vld [vmem:[#allocation2 + $0x20] sm:$0xff]
        %v3009 = vld [vmem:[#allocation2 + $0x28] sm:$0xff]
        %v3010 = vld [vmem:[#allocation2 + $0x30] sm:$0xff]
        %v3011 = vld [vmem:[#allocation2 + $0x38] sm:$0xff]
        %v3012 = vld [vmem:[#allocation10] sm:$0xff]
        %v3013 = vld [vmem:[#allocation10 + $0x8] sm:$0xff]
        %v3014 = vld [vmem:[#allocation10 + $0x10] sm:$0xff]
        %v3015 = vld [vmem:[#allocation10 + $0x18] sm:$0xff]
        %v3016 = vld [vmem:[#allocation10 + $0x20] sm:$0xff]
        %v3017 = vld [vmem:[#allocation10 + $0x28] sm:$0xff]
        %v3018 = vld [vmem:[#allocation10 + $0x30] sm:$0xff]
        %v3019 = vld [vmem:[#allocation10 + $0x38] sm:$0xff]
        %v3020 = vld [vmem:[#allocation10 + $0x40] sm:$0xff]
        %v3021 = vld [vmem:[#allocation10 + $0x48] sm:$0xff]
        %v3022 = vld [vmem:[#allocation10 + $0x50] sm:$0xff]
        %v3023 = vld [vmem:[#allocation10 + $0x58] sm:$0xff]
        %v3024 = vld [vmem:[#allocation10 + $0x60] sm:$0xff]
        %v3025 = vld [vmem:[#allocation10 + $0x68] sm:$0xff]
        %v3026 = vld [vmem:[#allocation10 + $0x70] sm:$0xff]
        %v3027 = vld [vmem:[#allocation10 + $0x78] sm:$0xff]
        %v3028 = vld [vmem:[#allocation10 + $0x80] sm:$0xff]
        %v3029 = vld [vmem:[#allocation10 + $0x88] sm:$0xff]
        %v3030 = vld [vmem:[#allocation10 + $0x90] sm:$0xff]
        %v3031 = vld [vmem:[#allocation10 + $0x98] sm:$0xff]
        %v3032 = vld [vmem:[#allocation10 + $0xa0] sm:$0xff]
        %v3033 = vld [vmem:[#allocation10 + $0xa8] sm:$0xff]
        %v3034 = vld [vmem:[#allocation10 + $0xb0] sm:$0xff]
        %v3035 = vld [vmem:[#allocation10 + $0xb8] sm:$0xff]
        %v3036 = vld [vmem:[#allocation10 + $0xc0] sm:$0xff]
        %v3037 = vld [vmem:[#allocation10 + $0xc8] sm:$0xff]
        %v3038 = vld [vmem:[#allocation10 + $0xd0] sm:$0xff]
        %v3039 = vld [vmem:[#allocation10 + $0xd8] sm:$0xff]
        %v3040 = vld [vmem:[#allocation10 + $0xe0] sm:$0xff]
        %v3041 = vld [vmem:[#allocation10 + $0xe8] sm:$0xff]
        %v3042 = vld [vmem:[#allocation10 + $0xf0] sm:$0xff]
        %v3043 = vld [vmem:[#allocation10 + $0xf8] sm:$0xff]
        %v3044 = vld [vmem:[#allocation10 + $0x100] sm:$0xff]
        %v3045 = vld [vmem:[#allocation10 + $0x108] sm:$0xff]
        %v3046 = vld [vmem:[#allocation10 + $0x110] sm:$0xff]
        %v3047 = vld [vmem:[#allocation10 + $0x118] sm:$0xff]
        %v3048 = vld [vmem:[#allocation10 + $0x120] sm:$0xff]
        %v3049 = vld [vmem:[#allocation10 + $0x128] sm:$0xff]
        %v3050 = vld [vmem:[#allocation10 + $0x130] sm:$0xff]
        %v3051 = vld [vmem:[#allocation10 + $0x138] sm:$0xff]
        %v3052 = vld [vmem:[#allocation10 + $0x140] sm:$0xff]
        %v3053 = vld [vmem:[#allocation10 + $0x148] sm:$0xff]
        %v3054 = vld [vmem:[#allocation10 + $0x150] sm:$0xff]
        %v3055 = vld [vmem:[#allocation10 + $0x158] sm:$0xff]
        %v3056 = vld [vmem:[#allocation10 + $0x160] sm:$0xff]
        %v3057 = vld [vmem:[#allocation10 + $0x168] sm:$0xff]
        %v3058 = vld [vmem:[#allocation10 + $0x170] sm:$0xff]
        %v3059 = vld [vmem:[#allocation10 + $0x178] sm:$0xff]
        %v3060 = vld [vmem:[#allocation10 + $0x180] sm:$0xff]
        %v3061 = vld [vmem:[#allocation10 + $0x188] sm:$0xff]
        %v3062 = vld [vmem:[#allocation10 + $0x190] sm:$0xff]
        %v3063 = vld [vmem:[#allocation10 + $0x198] sm:$0xff]
        %v3064 = vld [vmem:[#allocation10 + $0x1a0] sm:$0xff]
        %v3065 = vld [vmem:[#allocation10 + $0x1a8] sm:$0xff]
        %v3066 = vld [vmem:[#allocation10 + $0x1b0] sm:$0xff]
        %v3067 = vld [vmem:[#allocation10 + $0x1b8] sm:$0xff]
        %v3068 = vld [vmem:[#allocation10 + $0x1c0] sm:$0xff]
        %v3069 = vld [vmem:[#allocation10 + $0x1c8] sm:$0xff]
        %v3070 = vld [vmem:[#allocation10 + $0x1d0] sm:$0xff]
        %v3071 = vld [vmem:[#allocation10 + $0x1d8] sm:$0xff]
        %v3072 = vld [vmem:[#allocation10 + $0x1e0] sm:$0xff]
        %v3073 = vld [vmem:[#allocation10 + $0x1e8] sm:$0xff]
        %v3074 = vld [vmem:[#allocation10 + $0x1f0] sm:$0xff]
        %v3075 = vld [vmem:[#allocation10 + $0x1f8] sm:$0xff]
        %v3076 = vld [vmem:[#allocation10 + $0x200] sm:$0xff]
        %v3077 = vld [vmem:[#allocation10 + $0x208] sm:$0xff]
        %v3078 = vld [vmem:[#allocation10 + $0x210] sm:$0xff]
        %v3079 = vld [vmem:[#allocation10 + $0x218] sm:$0xff]
        %v3080 = vld [vmem:[#allocation10 + $0x220] sm:$0xff]
        %v3081 = vld [vmem:[#allocation10 + $0x228] sm:$0xff]
        %v3082 = vld [vmem:[#allocation10 + $0x230] sm:$0xff]
        %v3083 = vld [vmem:[#allocation10 + $0x238] sm:$0xff]
        %v3084 = vld [vmem:[#allocation10 + $0x240] sm:$0xff]
        %v3085 = vld [vmem:[#allocation10 + $0x248] sm:$0xff]
        %v3086 = vld [vmem:[#allocation10 + $0x250] sm:$0xff]
        %v3087 = vld [vmem:[#allocation10 + $0x258] sm:$0xff]
        %v3088 = vld [vmem:[#allocation10 + $0x260] sm:$0xff]
        %v3089 = vld [vmem:[#allocation10 + $0x268] sm:$0xff]
        %v3090 = vld [vmem:[#allocation10 + $0x270] sm:$0xff]
        %v3091 = vld [vmem:[#allocation10 + $0x278] sm:$0xff]
        %v3092 = vld [vmem:[#allocation10 + $0x280] sm:$0xff]
        %v3093 = vld [vmem:[#allocation10 + $0x288] sm:$0xff]
        %v3094 = vld [vmem:[#allocation10 + $0x290] sm:$0xff]
        %v3095 = vld [vmem:[#allocation10 + $0x298] sm:$0xff]
        %v3096 = vld [vmem:[#allocation10 + $0x2a0] sm:$0xff]
        %v3097 = vld [vmem:[#allocation10 + $0x2a8] sm:$0xff]
        %v3098 = vld [vmem:[#allocation10 + $0x2b0] sm:$0xff]
        %v3099 = vld [vmem:[#allocation10 + $0x2b8] sm:$0xff]
        %v3100 = vld [vmem:[#allocation10 + $0x2c0] sm:$0xff]
        %v3101 = vld [vmem:[#allocation10 + $0x2c8] sm:$0xff]
        %v3102 = vld [vmem:[#allocation10 + $0x2d0] sm:$0xff]
        %v3103 = vld [vmem:[#allocation10 + $0x2d8] sm:$0xff]
        %v3104 = vld [vmem:[#allocation10 + $0x2e0] sm:$0xff]
        %v3105 = vld [vmem:[#allocation10 + $0x2e8] sm:$0xff]
        %v3106 = vld [vmem:[#allocation10 + $0x2f0] sm:$0xff]
        %v3107 = vld [vmem:[#allocation10 + $0x2f8] sm:$0xff]
        %v3108 = vld [vmem:[#allocation10 + $0x300] sm:$0xff]
        %v3109 = vld [vmem:[#allocation10 + $0x308] sm:$0xff]
        %v3110 = vld [vmem:[#allocation10 + $0x310] sm:$0xff]
        %v3111 = vld [vmem:[#allocation10 + $0x318] sm:$0xff]
        %v3112 = vld [vmem:[#allocation10 + $0x320] sm:$0xff]
        %v3113 = vld [vmem:[#allocation10 + $0x328] sm:$0xff]
        %v3114 = vld [vmem:[#allocation10 + $0x330] sm:$0xff]
        %v3115 = vld [vmem:[#allocation10 + $0x338] sm:$0xff]
        %v3116 = vld [vmem:[#allocation10 + $0x340] sm:$0xff]
        %v3117 = vld [vmem:[#allocation10 + $0x348] sm:$0xff]
        %v3118 = vld [vmem:[#allocation10 + $0x350] sm:$0xff]
        %v3119 = vld [vmem:[#allocation10 + $0x358] sm:$0xff]
        %v3120 = vld [vmem:[#allocation10 + $0x360] sm:$0xff]
        %v3121 = vld [vmem:[#allocation10 + $0x368] sm:$0xff]
        %v3122 = vld [vmem:[#allocation10 + $0x370] sm:$0xff]
        %v3123 = vld [vmem:[#allocation10 + $0x378] sm:$0xff]
        %v3124 = vld [vmem:[#allocation10 + $0x380] sm:$0xff]
        %v3125 = vld [vmem:[#allocation10 + $0x388] sm:$0xff]
        %v3126 = vld [vmem:[#allocation10 + $0x390] sm:$0xff]
        %v3127 = vld [vmem:[#allocation10 + $0x398] sm:$0xff]
        %v3128 = vld [vmem:[#allocation10 + $0x3a0] sm:$0xff]
        %v3129 = vld [vmem:[#allocation10 + $0x3a8] sm:$0xff]
        %v3130 = vld [vmem:[#allocation10 + $0x3b0] sm:$0xff]
        %v3131 = vld [vmem:[#allocation10 + $0x3b8] sm:$0xff]
        %v3132 = vld [vmem:[#allocation10 + $0x3c0] sm:$0xff]
        %v3133 = vld [vmem:[#allocation10 + $0x3c8] sm:$0xff]
        %v3134 = vld [vmem:[#allocation10 + $0x3d0] sm:$0xff]
        %v3135 = vld [vmem:[#allocation10 + $0x3d8] sm:$0xff]
        %v3136 = vld [vmem:[#allocation10 + $0x3e0] sm:$0xff]
        %v3137 = vld [vmem:[#allocation10 + $0x3e8] sm:$0xff]
        %v3138 = vld [vmem:[#allocation10 + $0x3f0] sm:$0xff]
        %v3139 = vld [vmem:[#allocation10 + $0x3f8] sm:$0xff]
        %v3140 = vld [vmem:[#allocation10 + $0x400] sm:$0xff]
        %v3141 = vld [vmem:[#allocation10 + $0x408] sm:$0xff]
        %v3142 = vld [vmem:[#allocation10 + $0x410] sm:$0xff]
        %v3143 = vld [vmem:[#allocation10 + $0x418] sm:$0xff]
        %v3144 = vld [vmem:[#allocation10 + $0x420] sm:$0xff]
        %v3145 = vld [vmem:[#allocation10 + $0x428] sm:$0xff]
        %v3146 = vld [vmem:[#allocation10 + $0x430] sm:$0xff]
        %v3147 = vld [vmem:[#allocation10 + $0x438] sm:$0xff]
        %v3148 = vld [vmem:[#allocation10 + $0x440] sm:$0xff]
        %v3149 = vld [vmem:[#allocation10 + $0x448] sm:$0xff]
        %v3150 = vld [vmem:[#allocation10 + $0x450] sm:$0xff]
        %v3151 = vld [vmem:[#allocation10 + $0x458] sm:$0xff]
        %v3152 = vld [vmem:[#allocation10 + $0x460] sm:$0xff]
        %v3153 = vld [vmem:[#allocation10 + $0x468] sm:$0xff]
        %v3154 = vld [vmem:[#allocation10 + $0x470] sm:$0xff]
        %v3155 = vld [vmem:[#allocation10 + $0x478] sm:$0xff]
        %v3156 = vld [vmem:[#allocation10 + $0x480] sm:$0xff]
        %v3157 = vld [vmem:[#allocation10 + $0x488] sm:$0xff]
        %v3158 = vld [vmem:[#allocation10 + $0x490] sm:$0xff]
        %v3159 = vld [vmem:[#allocation10 + $0x498] sm:$0xff]
        %v3160 = vld [vmem:[#allocation10 + $0x4a0] sm:$0xff]
        %v3161 = vld [vmem:[#allocation10 + $0x4a8] sm:$0xff]
        %v3162 = vld [vmem:[#allocation10 + $0x4b0] sm:$0xff]
        %v3163 = vld [vmem:[#allocation10 + $0x4b8] sm:$0xff]
        %v3164 = vld [vmem:[#allocation10 + $0x4c0] sm:$0xff]
        %v3165 = vld [vmem:[#allocation10 + $0x4c8] sm:$0xff]
        %v3166 = vld [vmem:[#allocation10 + $0x4d0] sm:$0xff]
        %v3167 = vld [vmem:[#allocation10 + $0x4d8] sm:$0xff]
        %v3168 = vld [vmem:[#allocation10 + $0x4e0] sm:$0xff]
        %v3169 = vld [vmem:[#allocation10 + $0x4e8] sm:$0xff]
        %v3170 = vld [vmem:[#allocation10 + $0x4f0] sm:$0xff]
        %v3171 = vld [vmem:[#allocation10 + $0x4f8] sm:$0xff]
        %v3172 = vld [vmem:[#allocation10 + $0x500] sm:$0xff]
        %v3173 = vld [vmem:[#allocation10 + $0x508] sm:$0xff]
        %v3174 = vld [vmem:[#allocation10 + $0x510] sm:$0xff]
        %v3175 = vld [vmem:[#allocation10 + $0x518] sm:$0xff]
        %v3176 = vld [vmem:[#allocation10 + $0x520] sm:$0xff]
        %v3177 = vld [vmem:[#allocation10 + $0x528] sm:$0xff]
        %v3178 = vld [vmem:[#allocation10 + $0x530] sm:$0xff]
        %v3179 = vld [vmem:[#allocation10 + $0x538] sm:$0xff]
        %v3180 = vld [vmem:[#allocation10 + $0x540] sm:$0xff]
        %v3181 = vld [vmem:[#allocation10 + $0x548] sm:$0xff]
        %v3182 = vld [vmem:[#allocation10 + $0x550] sm:$0xff]
        %v3183 = vld [vmem:[#allocation10 + $0x558] sm:$0xff]
        %v3184 = vld [vmem:[#allocation10 + $0x560] sm:$0xff]
        %v3185 = vld [vmem:[#allocation10 + $0x568] sm:$0xff]
        %v3186 = vld [vmem:[#allocation10 + $0x570] sm:$0xff]
        %v3187 = vld [vmem:[#allocation10 + $0x578] sm:$0xff]
        %v3188 = vld [vmem:[#allocation10 + $0x580] sm:$0xff]
        %v3189 = vld [vmem:[#allocation10 + $0x588] sm:$0xff]
        %v3190 = vld [vmem:[#allocation10 + $0x590] sm:$0xff]
        %v3191 = vld [vmem:[#allocation10 + $0x598] sm:$0xff]
        %v3192 = vld [vmem:[#allocation10 + $0x5a0] sm:$0xff]
        %v3193 = vld [vmem:[#allocation10 + $0x5a8] sm:$0xff]
        %v3194 = vld [vmem:[#allocation10 + $0x5b0] sm:$0xff]
        %v3195 = vld [vmem:[#allocation10 + $0x5b8] sm:$0xff]
        %v3196 = vld [vmem:[#allocation10 + $0x5c0] sm:$0xff]
        %v3197 = vld [vmem:[#allocation10 + $0x5c8] sm:$0xff]
        %v3198 = vld [vmem:[#allocation10 + $0x5d0] sm:$0xff]
        %v3199 = vld [vmem:[#allocation10 + $0x5d8] sm:$0xff]
        %v3200 = vld [vmem:[#allocation10 + $0x5e0] sm:$0xff]
        %v3201 = vld [vmem:[#allocation10 + $0x5e8] sm:$0xff]
        %v3202 = vld [vmem:[#allocation10 + $0x5f0] sm:$0xff]
        %v3203 = vld [vmem:[#allocation10 + $0x5f8] sm:$0xff]
        %v3204 = vld [vmem:[#allocation10 + $0x600] sm:$0xff]
        %v3205 = vld [vmem:[#allocation10 + $0x608] sm:$0xff]
        %v3206 = vld [vmem:[#allocation10 + $0x610] sm:$0xff]
        %v3207 = vld [vmem:[#allocation10 + $0x618] sm:$0xff]
        %v3208 = vld [vmem:[#allocation10 + $0x620] sm:$0xff]
        %v3209 = vld [vmem:[#allocation10 + $0x628] sm:$0xff]
        %v3210 = vld [vmem:[#allocation10 + $0x630] sm:$0xff]
        %v3211 = vld [vmem:[#allocation10 + $0x638] sm:$0xff]
        %v3212 = vld [vmem:[#allocation10 + $0x640] sm:$0xff]
        %v3213 = vld [vmem:[#allocation10 + $0x648] sm:$0xff]
        %v3214 = vld [vmem:[#allocation10 + $0x650] sm:$0xff]
        %v3215 = vld [vmem:[#allocation10 + $0x658] sm:$0xff]
        %v3216 = vld [vmem:[#allocation10 + $0x660] sm:$0xff]
        %v3217 = vld [vmem:[#allocation10 + $0x668] sm:$0xff]
        %v3218 = vld [vmem:[#allocation10 + $0x670] sm:$0xff]
        %v3219 = vld [vmem:[#allocation10 + $0x678] sm:$0xff]
        %v3220 = vld [vmem:[#allocation10 + $0x680] sm:$0xff]
        %v3221 = vld [vmem:[#allocation10 + $0x688] sm:$0xff]
        %v3222 = vld [vmem:[#allocation10 + $0x690] sm:$0xff]
        %v3223 = vld [vmem:[#allocation10 + $0x698] sm:$0xff]
        %v3224 = vld [vmem:[#allocation10 + $0x6a0] sm:$0xff]
        %v3225 = vld [vmem:[#allocation10 + $0x6a8] sm:$0xff]
        %v3226 = vld [vmem:[#allocation10 + $0x6b0] sm:$0xff]
        %v3227 = vld [vmem:[#allocation10 + $0x6b8] sm:$0xff]
        %v3228 = vld [vmem:[#allocation10 + $0x6c0] sm:$0xff]
        %v3229 = vld [vmem:[#allocation10 + $0x6c8] sm:$0xff]
        %v3230 = vld [vmem:[#allocation10 + $0x6d0] sm:$0xff]
        %v3231 = vld [vmem:[#allocation10 + $0x6d8] sm:$0xff]
        %v3232 = vld [vmem:[#allocation10 + $0x6e0] sm:$0xff]
        %v3233 = vld [vmem:[#allocation10 + $0x6e8] sm:$0xff]
        %v3234 = vld [vmem:[#allocation10 + $0x6f0] sm:$0xff]
        %v3235 = vld [vmem:[#allocation10 + $0x6f8] sm:$0xff]
        %v3236 = vld [vmem:[#allocation10 + $0x700] sm:$0xff]
        %v3237 = vld [vmem:[#allocation10 + $0x708] sm:$0xff]
        %v3238 = vld [vmem:[#allocation10 + $0x710] sm:$0xff]
        %v3239 = vld [vmem:[#allocation10 + $0x718] sm:$0xff]
        %v3240 = vld [vmem:[#allocation10 + $0x720] sm:$0xff]
        %v3241 = vld [vmem:[#allocation10 + $0x728] sm:$0xff]
        %v3242 = vld [vmem:[#allocation10 + $0x730] sm:$0xff]
        %v3243 = vld [vmem:[#allocation10 + $0x738] sm:$0xff]
        %v3244 = vld [vmem:[#allocation10 + $0x740] sm:$0xff]
        %v3245 = vld [vmem:[#allocation10 + $0x748] sm:$0xff]
        %v3246 = vld [vmem:[#allocation10 + $0x750] sm:$0xff]
        %v3247 = vld [vmem:[#allocation10 + $0x758] sm:$0xff]
        %v3248 = vld [vmem:[#allocation10 + $0x760] sm:$0xff]
        %v3249 = vld [vmem:[#allocation10 + $0x768] sm:$0xff]
        %v3250 = vld [vmem:[#allocation10 + $0x770] sm:$0xff]
        %v3251 = vld [vmem:[#allocation10 + $0x778] sm:$0xff]
        %v3252 = vld [vmem:[#allocation10 + $0x780] sm:$0xff]
        %v3253 = vld [vmem:[#allocation10 + $0x788] sm:$0xff]
        %v3254 = vld [vmem:[#allocation10 + $0x790] sm:$0xff]
        %v3255 = vld [vmem:[#allocation10 + $0x798] sm:$0xff]
        %v3256 = vld [vmem:[#allocation10 + $0x7a0] sm:$0xff]
        %v3257 = vld [vmem:[#allocation10 + $0x7a8] sm:$0xff]
        %v3258 = vld [vmem:[#allocation10 + $0x7b0] sm:$0xff]
        %v3259 = vld [vmem:[#allocation10 + $0x7b8] sm:$0xff]
        %v3260 = vld [vmem:[#allocation10 + $0x7c0] sm:$0xff]
        %v3261 = vld [vmem:[#allocation10 + $0x7c8] sm:$0xff]
        %v3262 = vld [vmem:[#allocation10 + $0x7d0] sm:$0xff]
        %v3263 = vld [vmem:[#allocation10 + $0x7d8] sm:$0xff]
        %v3264 = vld [vmem:[#allocation10 + $0x7e0] sm:$0xff]
        %v3265 = vld [vmem:[#allocation10 + $0x7e8] sm:$0xff]
        %v3266 = vld [vmem:[#allocation10 + $0x7f0] sm:$0xff]
        %v3267 = vld [vmem:[#allocation10 + $0x7f8] sm:$0xff]
        %3268 = vmatpush.msra.mxu0 %v3072
        %3269 = vmatpush.msra.mxu0 %v3068
        %3270 = vmatpush.msra.mxu0 %v3064
        %3271 = vmatpush.msra.mxu0 %v3060
        %3272 = vmatpush.msra.mxu0 %v3056
        %3273 = vmatpush.msra.mxu0 %v3052
        %3274 = vmatpush.msra.mxu0 %v3048
        %3275 = vmatpush.msra.mxu0 %v3044
        %3276 = vmatpush.msra.mxu0 %v3040
        %3277 = vmatpush.msra.mxu0 %v3036
        %3278 = vmatpush.msra.mxu0 %v3032
        %3279 = vmatpush.msra.mxu0 %v3028
        %3280 = vmatpush.msra.mxu0 %v3024
        %3281 = vmatpush.msra.mxu0 %v3020
        %3282 = vmatpush.msra.mxu0 %v3016
        %3283 = vmatpush.msra.mxu0 %v3012
        %3284 = vmatmul.f32.gmra.mxu0 %v3004
        %v3285 = vpop.f32.mrf.mxu0
        %v3286 = vadd.f32 0.0, %v3285
        %3287 = vmatmul.f32.gmra.mxu0 %v3008
        %v3288 = vpop.f32.mrf.mxu0
        %v3289 = vadd.f32 0.0, %v3288
        %3290 = vdwg.mxu0
        %3291 = vmatpush.msra.mxu0 %v3136
        %3292 = vmatpush.msra.mxu0 %v3132
        %3293 = vmatpush.msra.mxu0 %v3128
        %3294 = vmatpush.msra.mxu0 %v3124
        %3295 = vmatpush.msra.mxu0 %v3120
        %3296 = vmatpush.msra.mxu0 %v3116
        %3297 = vmatpush.msra.mxu0 %v3112
        %3298 = vmatpush.msra.mxu0 %v3108
        %3299 = vmatpush.msra.mxu0 %v3104
        %3300 = vmatpush.msra.mxu0 %v3100
        %3301 = vmatpush.msra.mxu0 %v3096
        %3302 = vmatpush.msra.mxu0 %v3092
        %3303 = vmatpush.msra.mxu0 %v3088
        %3304 = vmatpush.msra.mxu0 %v3084
        %3305 = vmatpush.msra.mxu0 %v3080
        %3306 = vmatpush.msra.mxu0 %v3076
        %3307 = vmatmul.f32.gmra.mxu0 %v3005
        %v3308 = vpop.f32.mrf.mxu0
        %v3309 = vadd.f32 %v3286, %v3308
        %3310 = vmatmul.f32.gmra.mxu0 %v3009
        %v3311 = vpop.f32.mrf.mxu0
        %v3312 = vadd.f32 %v3289, %v3311
        %3313 = vdwg.mxu0
        %3314 = vmatpush.msra.mxu0 %v3200
        %3315 = vmatpush.msra.mxu0 %v3196
        %3316 = vmatpush.msra.mxu0 %v3192
        %3317 = vmatpush.msra.mxu0 %v3188
        %3318 = vmatpush.msra.mxu0 %v3184
        %3319 = vmatpush.msra.mxu0 %v3180
        %3320 = vmatpush.msra.mxu0 %v3176
        %3321 = vmatpush.msra.mxu0 %v3172
        %3322 = vmatpush.msra.mxu0 %v3168
        %3323 = vmatpush.msra.mxu0 %v3164
        %3324 = vmatpush.msra.mxu0 %v3160
        %3325 = vmatpush.msra.mxu0 %v3156
        %3326 = vmatpush.msra.mxu0 %v3152
        %3327 = vmatpush.msra.mxu0 %v3148
        %3328 = vmatpush.msra.mxu0 %v3144
        %3329 = vmatpush.msra.mxu0 %v3140
        %3330 = vmatmul.f32.gmra.mxu0 %v3006
        %v3331 = vpop.f32.mrf.mxu0
        %v3332 = vadd.f32 %v3309, %v3331
        %3333 = vmatmul.f32.gmra.mxu0 %v3010
        %v3334 = vpop.f32.mrf.mxu0
        %v3335 = vadd.f32 %v3312, %v3334
        %3336 = vdwg.mxu0
        %3337 = vmatpush.msra.mxu0 %v3264
        %3338 = vmatpush.msra.mxu0 %v3260
        %3339 = vmatpush.msra.mxu0 %v3256
        %3340 = vmatpush.msra.mxu0 %v3252
        %3341 = vmatpush.msra.mxu0 %v3248
        %3342 = vmatpush.msra.mxu0 %v3244
        %3343 = vmatpush.msra.mxu0 %v3240
        %3344 = vmatpush.msra.mxu0 %v3236
        %3345 = vmatpush.msra.mxu0 %v3232
        %3346 = vmatpush.msra.mxu0 %v3228
        %3347 = vmatpush.msra.mxu0 %v3224
        %3348 = vmatpush.msra.mxu0 %v3220
        %3349 = vmatpush.msra.mxu0 %v3216
        %3350 = vmatpush.msra.mxu0 %v3212
        %3351 = vmatpush.msra.mxu0 %v3208
        %3352 = vmatpush.msra.mxu0 %v3204
        %3353 = vmatmul.f32.gmra.mxu0 %v3007
        %v3354 = vpop.f32.mrf.mxu0
        %v3355 = vadd.f32 %v3332, %v3354
        %3356 = vmatmul.f32.gmra.mxu0 %v3011
        %v3357 = vpop.f32.mrf.mxu0
        %v3358 = vadd.f32 %v3335, %v3357
        %3359 = vdwg.mxu0
        %3360 = vmatpush.msra.mxu0 %v3073
        %3361 = vmatpush.msra.mxu0 %v3069
        %3362 = vmatpush.msra.mxu0 %v3065
        %3363 = vmatpush.msra.mxu0 %v3061
        %3364 = vmatpush.msra.mxu0 %v3057
        %3365 = vmatpush.msra.mxu0 %v3053
        %3366 = vmatpush.msra.mxu0 %v3049
        %3367 = vmatpush.msra.mxu0 %v3045
        %3368 = vmatpush.msra.mxu0 %v3041
        %3369 = vmatpush.msra.mxu0 %v3037
        %3370 = vmatpush.msra.mxu0 %v3033
        %3371 = vmatpush.msra.mxu0 %v3029
        %3372 = vmatpush.msra.mxu0 %v3025
        %3373 = vmatpush.msra.mxu0 %v3021
        %3374 = vmatpush.msra.mxu0 %v3017
        %3375 = vmatpush.msra.mxu0 %v3013
        %3376 = vmatmul.f32.gmra.mxu0 %v3004
        %v3377 = vpop.f32.mrf.mxu0
        %v3378 = vadd.f32 0.0, %v3377
        %3379 = vmatmul.f32.gmra.mxu0 %v3008
        %v3380 = vpop.f32.mrf.mxu0
        %v3381 = vadd.f32 0.0, %v3380
        %3382 = vdwg.mxu0
        %3383 = vmatpush.msra.mxu0 %v3137
        %3384 = vmatpush.msra.mxu0 %v3133
        %3385 = vmatpush.msra.mxu0 %v3129
        %3386 = vmatpush.msra.mxu0 %v3125
        %3387 = vmatpush.msra.mxu0 %v3121
        %3388 = vmatpush.msra.mxu0 %v3117
        %3389 = vmatpush.msra.mxu0 %v3113
        %3390 = vmatpush.msra.mxu0 %v3109
        %3391 = vmatpush.msra.mxu0 %v3105
        %3392 = vmatpush.msra.mxu0 %v3101
        %3393 = vmatpush.msra.mxu0 %v3097
        %3394 = vmatpush.msra.mxu0 %v3093
        %3395 = vmatpush.msra.mxu0 %v3089
        %3396 = vmatpush.msra.mxu0 %v3085
        %3397 = vmatpush.msra.mxu0 %v3081
        %3398 = vmatpush.msra.mxu0 %v3077
        %3399 = vmatmul.f32.gmra.mxu0 %v3005
        %v3400 = vpop.f32.mrf.mxu0
        %v3401 = vadd.f32 %v3378, %v3400
        %3402 = vmatmul.f32.gmra.mxu0 %v3009
        %v3403 = vpop.f32.mrf.mxu0
        %v3404 = vadd.f32 %v3381, %v3403
        %3405 = vdwg.mxu0
        %3406 = vmatpush.msra.mxu0 %v3201
        %3407 = vmatpush.msra.mxu0 %v3197
        %3408 = vmatpush.msra.mxu0 %v3193
        %3409 = vmatpush.msra.mxu0 %v3189
        %3410 = vmatpush.msra.mxu0 %v3185
        %3411 = vmatpush.msra.mxu0 %v3181
        %3412 = vmatpush.msra.mxu0 %v3177
        %3413 = vmatpush.msra.mxu0 %v3173
        %3414 = vmatpush.msra.mxu0 %v3169
        %3415 = vmatpush.msra.mxu0 %v3165
        %3416 = vmatpush.msra.mxu0 %v3161
        %3417 = vmatpush.msra.mxu0 %v3157
        %3418 = vmatpush.msra.mxu0 %v3153
        %3419 = vmatpush.msra.mxu0 %v3149
        %3420 = vmatpush.msra.mxu0 %v3145
        %3421 = vmatpush.msra.mxu0 %v3141
        %3422 = vmatmul.f32.gmra.mxu0 %v3006
        %v3423 = vpop.f32.mrf.mxu0
        %v3424 = vadd.f32 %v3401, %v3423
        %3425 = vmatmul.f32.gmra.mxu0 %v3010
        %v3426 = vpop.f32.mrf.mxu0
        %v3427 = vadd.f32 %v3404, %v3426
        %3428 = vdwg.mxu0
        %3429 = vmatpush.msra.mxu0 %v3265
        %3430 = vmatpush.msra.mxu0 %v3261
        %3431 = vmatpush.msra.mxu0 %v3257
        %3432 = vmatpush.msra.mxu0 %v3253
        %3433 = vmatpush.msra.mxu0 %v3249
        %3434 = vmatpush.msra.mxu0 %v3245
        %3435 = vmatpush.msra.mxu0 %v3241
        %3436 = vmatpush.msra.mxu0 %v3237
        %3437 = vmatpush.msra.mxu0 %v3233
        %3438 = vmatpush.msra.mxu0 %v3229
        %3439 = vmatpush.msra.mxu0 %v3225
        %3440 = vmatpush.msra.mxu0 %v3221
        %3441 = vmatpush.msra.mxu0 %v3217
        %3442 = vmatpush.msra.mxu0 %v3213
        %3443 = vmatpush.msra.mxu0 %v3209
        %3444 = vmatpush.msra.mxu0 %v3205
        %3445 = vmatmul.f32.gmra.mxu0 %v3007
        %v3446 = vpop.f32.mrf.mxu0
        %v3447 = vadd.f32 %v3424, %v3446
        %3448 = vmatmul.f32.gmra.mxu0 %v3011
        %v3449 = vpop.f32.mrf.mxu0
        %v3450 = vadd.f32 %v3427, %v3449
        %3451 = vdwg.mxu0
        %3452 = vmatpush.msra.mxu0 %v3074
        %3453 = vmatpush.msra.mxu0 %v3070
        %3454 = vmatpush.msra.mxu0 %v3066
        %3455 = vmatpush.msra.mxu0 %v3062
        %3456 = vmatpush.msra.mxu0 %v3058
        %3457 = vmatpush.msra.mxu0 %v3054
        %3458 = vmatpush.msra.mxu0 %v3050
        %3459 = vmatpush.msra.mxu0 %v3046
        %3460 = vmatpush.msra.mxu0 %v3042
        %3461 = vmatpush.msra.mxu0 %v3038
        %3462 = vmatpush.msra.mxu0 %v3034
        %3463 = vmatpush.msra.mxu0 %v3030
        %3464 = vmatpush.msra.mxu0 %v3026
        %3465 = vmatpush.msra.mxu0 %v3022
        %3466 = vmatpush.msra.mxu0 %v3018
        %3467 = vmatpush.msra.mxu0 %v3014
        %3468 = vmatmul.f32.gmra.mxu0 %v3004
        %v3469 = vpop.f32.mrf.mxu0
        %v3470 = vadd.f32 0.0, %v3469
        %3471 = vmatmul.f32.gmra.mxu0 %v3008
        %v3472 = vpop.f32.mrf.mxu0
        %v3473 = vadd.f32 0.0, %v3472
        %3474 = vdwg.mxu0
        %3475 = vmatpush.msra.mxu0 %v3138
        %3476 = vmatpush.msra.mxu0 %v3134
        %3477 = vmatpush.msra.mxu0 %v3130
        %3478 = vmatpush.msra.mxu0 %v3126
        %3479 = vmatpush.msra.mxu0 %v3122
        %3480 = vmatpush.msra.mxu0 %v3118
        %3481 = vmatpush.msra.mxu0 %v3114
        %3482 = vmatpush.msra.mxu0 %v3110
        %3483 = vmatpush.msra.mxu0 %v3106
        %3484 = vmatpush.msra.mxu0 %v3102
        %3485 = vmatpush.msra.mxu0 %v3098
        %3486 = vmatpush.msra.mxu0 %v3094
        %3487 = vmatpush.msra.mxu0 %v3090
        %3488 = vmatpush.msra.mxu0 %v3086
        %3489 = vmatpush.msra.mxu0 %v3082
        %3490 = vmatpush.msra.mxu0 %v3078
        %3491 = vmatmul.f32.gmra.mxu0 %v3005
        %v3492 = vpop.f32.mrf.mxu0
        %v3493 = vadd.f32 %v3470, %v3492
        %3494 = vmatmul.f32.gmra.mxu0 %v3009
        %v3495 = vpop.f32.mrf.mxu0
        %v3496 = vadd.f32 %v3473, %v3495
        %3497 = vdwg.mxu0
        %3498 = vmatpush.msra.mxu0 %v3202
        %3499 = vmatpush.msra.mxu0 %v3198
        %3500 = vmatpush.msra.mxu0 %v3194
        %3501 = vmatpush.msra.mxu0 %v3190
        %3502 = vmatpush.msra.mxu0 %v3186
        %3503 = vmatpush.msra.mxu0 %v3182
        %3504 = vmatpush.msra.mxu0 %v3178
        %3505 = vmatpush.msra.mxu0 %v3174
        %3506 = vmatpush.msra.mxu0 %v3170
        %3507 = vmatpush.msra.mxu0 %v3166
        %3508 = vmatpush.msra.mxu0 %v3162
        %3509 = vmatpush.msra.mxu0 %v3158
        %3510 = vmatpush.msra.mxu0 %v3154
        %3511 = vmatpush.msra.mxu0 %v3150
        %3512 = vmatpush.msra.mxu0 %v3146
        %3513 = vmatpush.msra.mxu0 %v3142
        %3514 = vmatmul.f32.gmra.mxu0 %v3006
        %v3515 = vpop.f32.mrf.mxu0
        %v3516 = vadd.f32 %v3493, %v3515
        %3517 = vmatmul.f32.gmra.mxu0 %v3010
        %v3518 = vpop.f32.mrf.mxu0
        %v3519 = vadd.f32 %v3496, %v3518
        %3520 = vdwg.mxu0
        %3521 = vmatpush.msra.mxu0 %v3266
        %3522 = vmatpush.msra.mxu0 %v3262
        %3523 = vmatpush.msra.mxu0 %v3258
        %3524 = vmatpush.msra.mxu0 %v3254
        %3525 = vmatpush.msra.mxu0 %v3250
        %3526 = vmatpush.msra.mxu0 %v3246
        %3527 = vmatpush.msra.mxu0 %v3242
        %3528 = vmatpush.msra.mxu0 %v3238
        %3529 = vmatpush.msra.mxu0 %v3234
        %3530 = vmatpush.msra.mxu0 %v3230
        %3531 = vmatpush.msra.mxu0 %v3226
        %3532 = vmatpush.msra.mxu0 %v3222
        %3533 = vmatpush.msra.mxu0 %v3218
        %3534 = vmatpush.msra.mxu0 %v3214
        %3535 = vmatpush.msra.mxu0 %v3210
        %3536 = vmatpush.msra.mxu0 %v3206
        %3537 = vmatmul.f32.gmra.mxu0 %v3007
        %v3538 = vpop.f32.mrf.mxu0
        %v3539 = vadd.f32 %v3516, %v3538
        %3540 = vmatmul.f32.gmra.mxu0 %v3011
        %v3541 = vpop.f32.mrf.mxu0
        %v3542 = vadd.f32 %v3519, %v3541
        %3543 = vdwg.mxu0
        %3544 = vmatpush.msra.mxu0 %v3075
        %3545 = vmatpush.msra.mxu0 %v3071
        %3546 = vmatpush.msra.mxu0 %v3067
        %3547 = vmatpush.msra.mxu0 %v3063
        %3548 = vmatpush.msra.mxu0 %v3059
        %3549 = vmatpush.msra.mxu0 %v3055
        %3550 = vmatpush.msra.mxu0 %v3051
        %3551 = vmatpush.msra.mxu0 %v3047
        %3552 = vmatpush.msra.mxu0 %v3043
        %3553 = vmatpush.msra.mxu0 %v3039
        %3554 = vmatpush.msra.mxu0 %v3035
        %3555 = vmatpush.msra.mxu0 %v3031
        %3556 = vmatpush.msra.mxu0 %v3027
        %3557 = vmatpush.msra.mxu0 %v3023
        %3558 = vmatpush.msra.mxu0 %v3019
        %3559 = vmatpush.msra.mxu0 %v3015
        %3560 = vmatmul.f32.gmra.mxu0 %v3004
        %v3561 = vpop.f32.mrf.mxu0
        %v3562 = vadd.f32 0.0, %v3561
        %3563 = vmatmul.f32.gmra.mxu0 %v3008
        %v3564 = vpop.f32.mrf.mxu0
        %v3565 = vadd.f32 0.0, %v3564
        %3566 = vdwg.mxu0
        %3567 = vmatpush.msra.mxu0 %v3139
        %3568 = vmatpush.msra.mxu0 %v3135
        %3569 = vmatpush.msra.mxu0 %v3131
        %3570 = vmatpush.msra.mxu0 %v3127
        %3571 = vmatpush.msra.mxu0 %v3123
        %3572 = vmatpush.msra.mxu0 %v3119
        %3573 = vmatpush.msra.mxu0 %v3115
        %3574 = vmatpush.msra.mxu0 %v3111
        %3575 = vmatpush.msra.mxu0 %v3107
        %3576 = vmatpush.msra.mxu0 %v3103
        %3577 = vmatpush.msra.mxu0 %v3099
        %3578 = vmatpush.msra.mxu0 %v3095
        %3579 = vmatpush.msra.mxu0 %v3091
        %3580 = vmatpush.msra.mxu0 %v3087
        %3581 = vmatpush.msra.mxu0 %v3083
        %3582 = vmatpush.msra.mxu0 %v3079
        %3583 = vmatmul.f32.gmra.mxu0 %v3005
        %v3584 = vpop.f32.mrf.mxu0
        %v3585 = vadd.f32 %v3562, %v3584
        %3586 = vmatmul.f32.gmra.mxu0 %v3009
        %v3587 = vpop.f32.mrf.mxu0
        %v3588 = vadd.f32 %v3565, %v3587
        %3589 = vdwg.mxu0
        %3590 = vmatpush.msra.mxu0 %v3203
        %3591 = vmatpush.msra.mxu0 %v3199
        %3592 = vmatpush.msra.mxu0 %v3195
        %3593 = vmatpush.msra.mxu0 %v3191
        %3594 = vmatpush.msra.mxu0 %v3187
        %3595 = vmatpush.msra.mxu0 %v3183
        %3596 = vmatpush.msra.mxu0 %v3179
        %3597 = vmatpush.msra.mxu0 %v3175
        %3598 = vmatpush.msra.mxu0 %v3171
        %3599 = vmatpush.msra.mxu0 %v3167
        %3600 = vmatpush.msra.mxu0 %v3163
        %3601 = vmatpush.msra.mxu0 %v3159
        %3602 = vmatpush.msra.mxu0 %v3155
        %3603 = vmatpush.msra.mxu0 %v3151
        %3604 = vmatpush.msra.mxu0 %v3147
        %3605 = vmatpush.msra.mxu0 %v3143
        %3606 = vmatmul.f32.gmra.mxu0 %v3006
        %v3607 = vpop.f32.mrf.mxu0
        %v3608 = vadd.f32 %v3585, %v3607
        %3609 = vmatmul.f32.gmra.mxu0 %v3010
        %v3610 = vpop.f32.mrf.mxu0
        %v3611 = vadd.f32 %v3588, %v3610
        %3612 = vdwg.mxu0
        %3613 = vmatpush.msra.mxu0 %v3267
        %3614 = vmatpush.msra.mxu0 %v3263
        %3615 = vmatpush.msra.mxu0 %v3259
        %3616 = vmatpush.msra.mxu0 %v3255
        %3617 = vmatpush.msra.mxu0 %v3251
        %3618 = vmatpush.msra.mxu0 %v3247
        %3619 = vmatpush.msra.mxu0 %v3243
        %3620 = vmatpush.msra.mxu0 %v3239
        %3621 = vmatpush.msra.mxu0 %v3235
        %3622 = vmatpush.msra.mxu0 %v3231
        %3623 = vmatpush.msra.mxu0 %v3227
        %3624 = vmatpush.msra.mxu0 %v3223
        %3625 = vmatpush.msra.mxu0 %v3219
        %3626 = vmatpush.msra.mxu0 %v3215
        %3627 = vmatpush.msra.mxu0 %v3211
        %3628 = vmatpush.msra.mxu0 %v3207
        %3629 = vmatmul.f32.gmra.mxu0 %v3007
        %v3630 = vpop.f32.mrf.mxu0
        %v3631 = vadd.f32 %v3608, %v3630
        %3632 = vmatmul.f32.gmra.mxu0 %v3011
        %v3633 = vpop.f32.mrf.mxu0
        %v3634 = vadd.f32 %v3611, %v3633
        %3635 = vdwg.mxu0
        %v3636 = vld [vmem:[#allocation3] sm:$0xfe]
        %v3637 = vld [vmem:[#allocation3 + $0x8] sm:$0xfe]
        %v3638 = vld [vmem:[#allocation3 + $0x10] sm:$0xfe]
        %v3639 = vld [vmem:[#allocation3 + $0x18] sm:$0xfe]
        %v3640 = vld [vmem:[#allocation3 + $0x20] sm:$0xff]
        %v3641 = vld [vmem:[#allocation3 + $0x28] sm:$0xff]
        %v3642 = vld [vmem:[#allocation3 + $0x30] sm:$0xff]
        %v3643 = vld [vmem:[#allocation3 + $0x38] sm:$0xff]
        %v3652 = vrot.slane %v3355, 7
        %v3653 = vrot.slane %v3447, 7
        %v3654 = vrot.slane %v3539, 7
        %v3655 = vrot.slane %v3631, 7
        %v3656 = vrot.slane %v3358, 7
        %v3657 = vsel %vm1606, %v3652, %v3656
        %v3658 = vrot.slane %v3450, 7
        %v3659 = vsel %vm1606, %v3653, %v3658
        %v3660 = vrot.slane %v3542, 7
        %v3661 = vsel %vm1606, %v3654, %v3660
        %v3662 = vrot.slane %v3634, 7
        %v3663 = vsel %vm1606, %v3655, %v3662
        %v3672 = vadd.f32 %v3636, %v3652
        %v3673 = vadd.f32 %v3637, %v3653
        %v3674 = vadd.f32 %v3638, %v3654
        %v3675 = vadd.f32 %v3639, %v3655
        %v3676 = vadd.f32 %v3640, %v3657
        %v3677 = vadd.f32 %v3641, %v3659
        %v3678 = vadd.f32 %v3642, %v3661
        %v3679 = vadd.f32 %v3643, %v3663
        %3680 = vst [vmem:[#allocation3] sm:$0xfe] %v3672
        %3681 = vst [vmem:[#allocation3 + $0x8] sm:$0xfe] %v3673
        %3682 = vst [vmem:[#allocation3 + $0x10] sm:$0xfe] %v3674
        %3683 = vst [vmem:[#allocation3 + $0x18] sm:$0xfe] %v3675
        %3684 = vst [vmem:[#allocation3 + $0x20] sm:$0xff] %v3676
        %3685 = vst [vmem:[#allocation3 + $0x28] sm:$0xff] %v3677
        %3686 = vst [vmem:[#allocation3 + $0x30] sm:$0xff] %v3678
        %3687 = vst [vmem:[#allocation3 + $0x38] sm:$0xff] %v3679
        %v3688 = vld [vmem:[#allocation2] sm:$0xff]
        %v3689 = vld [vmem:[#allocation2 + $0x8] sm:$0xff]
        %v3690 = vld [vmem:[#allocation2 + $0x10] sm:$0xff]
        %v3691 = vld [vmem:[#allocation2 + $0x18] sm:$0xff]
        %v3692 = vld [vmem:[#allocation2 + $0x20] sm:$0xff]
        %v3693 = vld [vmem:[#allocation2 + $0x28] sm:$0xff]
        %v3694 = vld [vmem:[#allocation2 + $0x30] sm:$0xff]
        %v3695 = vld [vmem:[#allocation2 + $0x38] sm:$0xff]
        %s3696 = scalar_lea.vmem [#allocation10], 4096
        %v3697 = vld [vmem:[%s3696] sm:$0xff]
        %v3698 = vld [vmem:[%s3696 + $0x8] sm:$0xff]
        %v3699 = vld [vmem:[%s3696 + $0x10] sm:$0xff]
        %v3700 = vld [vmem:[%s3696 + $0x18] sm:$0xff]
        %v3701 = vld [vmem:[%s3696 + $0x20] sm:$0xff]
        %v3702 = vld [vmem:[%s3696 + $0x28] sm:$0xff]
        %v3703 = vld [vmem:[%s3696 + $0x30] sm:$0xff]
        %v3704 = vld [vmem:[%s3696 + $0x38] sm:$0xff]
        %v3705 = vld [vmem:[%s3696 + $0x40] sm:$0xff]
        %v3706 = vld [vmem:[%s3696 + $0x48] sm:$0xff]
        %v3707 = vld [vmem:[%s3696 + $0x50] sm:$0xff]
        %v3708 = vld [vmem:[%s3696 + $0x58] sm:$0xff]
        %v3709 = vld [vmem:[%s3696 + $0x60] sm:$0xff]
        %v3710 = vld [vmem:[%s3696 + $0x68] sm:$0xff]
        %v3711 = vld [vmem:[%s3696 + $0x70] sm:$0xff]
        %v3712 = vld [vmem:[%s3696 + $0x78] sm:$0xff]
        %v3713 = vld [vmem:[%s3696 + $0x80] sm:$0xff]
        %v3714 = vld [vmem:[%s3696 + $0x88] sm:$0xff]
        %v3715 = vld [vmem:[%s3696 + $0x90] sm:$0xff]
        %v3716 = vld [vmem:[%s3696 + $0x98] sm:$0xff]
        %v3717 = vld [vmem:[%s3696 + $0xa0] sm:$0xff]
        %v3718 = vld [vmem:[%s3696 + $0xa8] sm:$0xff]
        %v3719 = vld [vmem:[%s3696 + $0xb0] sm:$0xff]
        %v3720 = vld [vmem:[%s3696 + $0xb8] sm:$0xff]
        %v3721 = vld [vmem:[%s3696 + $0xc0] sm:$0xff]
        %v3722 = vld [vmem:[%s3696 + $0xc8] sm:$0xff]
        %v3723 = vld [vmem:[%s3696 + $0xd0] sm:$0xff]
        %v3724 = vld [vmem:[%s3696 + $0xd8] sm:$0xff]
        %v3725 = vld [vmem:[%s3696 + $0xe0] sm:$0xff]
        %v3726 = vld [vmem:[%s3696 + $0xe8] sm:$0xff]
        %v3727 = vld [vmem:[%s3696 + $0xf0] sm:$0xff]
        %v3728 = vld [vmem:[%s3696 + $0xf8] sm:$0xff]
        %v3729 = vld [vmem:[%s3696 + $0x100] sm:$0xff]
        %v3730 = vld [vmem:[%s3696 + $0x108] sm:$0xff]
        %v3731 = vld [vmem:[%s3696 + $0x110] sm:$0xff]
        %v3732 = vld [vmem:[%s3696 + $0x118] sm:$0xff]
        %v3733 = vld [vmem:[%s3696 + $0x120] sm:$0xff]
        %v3734 = vld [vmem:[%s3696 + $0x128] sm:$0xff]
        %v3735 = vld [vmem:[%s3696 + $0x130] sm:$0xff]
        %v3736 = vld [vmem:[%s3696 + $0x138] sm:$0xff]
        %v3737 = vld [vmem:[%s3696 + $0x140] sm:$0xff]
        %v3738 = vld [vmem:[%s3696 + $0x148] sm:$0xff]
        %v3739 = vld [vmem:[%s3696 + $0x150] sm:$0xff]
        %v3740 = vld [vmem:[%s3696 + $0x158] sm:$0xff]
        %v3741 = vld [vmem:[%s3696 + $0x160] sm:$0xff]
        %v3742 = vld [vmem:[%s3696 + $0x168] sm:$0xff]
        %v3743 = vld [vmem:[%s3696 + $0x170] sm:$0xff]
        %v3744 = vld [vmem:[%s3696 + $0x178] sm:$0xff]
        %v3745 = vld [vmem:[%s3696 + $0x180] sm:$0xff]
        %v3746 = vld [vmem:[%s3696 + $0x188] sm:$0xff]
        %v3747 = vld [vmem:[%s3696 + $0x190] sm:$0xff]
        %v3748 = vld [vmem:[%s3696 + $0x198] sm:$0xff]
        %v3749 = vld [vmem:[%s3696 + $0x1a0] sm:$0xff]
        %v3750 = vld [vmem:[%s3696 + $0x1a8] sm:$0xff]
        %v3751 = vld [vmem:[%s3696 + $0x1b0] sm:$0xff]
        %v3752 = vld [vmem:[%s3696 + $0x1b8] sm:$0xff]
        %v3753 = vld [vmem:[%s3696 + $0x1c0] sm:$0xff]
        %v3754 = vld [vmem:[%s3696 + $0x1c8] sm:$0xff]
        %v3755 = vld [vmem:[%s3696 + $0x1d0] sm:$0xff]
        %v3756 = vld [vmem:[%s3696 + $0x1d8] sm:$0xff]
        %v3757 = vld [vmem:[%s3696 + $0x1e0] sm:$0xff]
        %v3758 = vld [vmem:[%s3696 + $0x1e8] sm:$0xff]
        %v3759 = vld [vmem:[%s3696 + $0x1f0] sm:$0xff]
        %v3760 = vld [vmem:[%s3696 + $0x1f8] sm:$0xff]
        %v3761 = vld [vmem:[%s3696 + $0x200] sm:$0xff]
        %v3762 = vld [vmem:[%s3696 + $0x208] sm:$0xff]
        %v3763 = vld [vmem:[%s3696 + $0x210] sm:$0xff]
        %v3764 = vld [vmem:[%s3696 + $0x218] sm:$0xff]
        %v3765 = vld [vmem:[%s3696 + $0x220] sm:$0xff]
        %v3766 = vld [vmem:[%s3696 + $0x228] sm:$0xff]
        %v3767 = vld [vmem:[%s3696 + $0x230] sm:$0xff]
        %v3768 = vld [vmem:[%s3696 + $0x238] sm:$0xff]
        %v3769 = vld [vmem:[%s3696 + $0x240] sm:$0xff]
        %v3770 = vld [vmem:[%s3696 + $0x248] sm:$0xff]
        %v3771 = vld [vmem:[%s3696 + $0x250] sm:$0xff]
        %v3772 = vld [vmem:[%s3696 + $0x258] sm:$0xff]
        %v3773 = vld [vmem:[%s3696 + $0x260] sm:$0xff]
        %v3774 = vld [vmem:[%s3696 + $0x268] sm:$0xff]
        %v3775 = vld [vmem:[%s3696 + $0x270] sm:$0xff]
        %v3776 = vld [vmem:[%s3696 + $0x278] sm:$0xff]
        %v3777 = vld [vmem:[%s3696 + $0x280] sm:$0xff]
        %v3778 = vld [vmem:[%s3696 + $0x288] sm:$0xff]
        %v3779 = vld [vmem:[%s3696 + $0x290] sm:$0xff]
        %v3780 = vld [vmem:[%s3696 + $0x298] sm:$0xff]
        %v3781 = vld [vmem:[%s3696 + $0x2a0] sm:$0xff]
        %v3782 = vld [vmem:[%s3696 + $0x2a8] sm:$0xff]
        %v3783 = vld [vmem:[%s3696 + $0x2b0] sm:$0xff]
        %v3784 = vld [vmem:[%s3696 + $0x2b8] sm:$0xff]
        %v3785 = vld [vmem:[%s3696 + $0x2c0] sm:$0xff]
        %v3786 = vld [vmem:[%s3696 + $0x2c8] sm:$0xff]
        %v3787 = vld [vmem:[%s3696 + $0x2d0] sm:$0xff]
        %v3788 = vld [vmem:[%s3696 + $0x2d8] sm:$0xff]
        %v3789 = vld [vmem:[%s3696 + $0x2e0] sm:$0xff]
        %v3790 = vld [vmem:[%s3696 + $0x2e8] sm:$0xff]
        %v3791 = vld [vmem:[%s3696 + $0x2f0] sm:$0xff]
        %v3792 = vld [vmem:[%s3696 + $0x2f8] sm:$0xff]
        %v3793 = vld [vmem:[%s3696 + $0x300] sm:$0xff]
        %v3794 = vld [vmem:[%s3696 + $0x308] sm:$0xff]
        %v3795 = vld [vmem:[%s3696 + $0x310] sm:$0xff]
        %v3796 = vld [vmem:[%s3696 + $0x318] sm:$0xff]
        %v3797 = vld [vmem:[%s3696 + $0x320] sm:$0xff]
        %v3798 = vld [vmem:[%s3696 + $0x328] sm:$0xff]
        %v3799 = vld [vmem:[%s3696 + $0x330] sm:$0xff]
        %v3800 = vld [vmem:[%s3696 + $0x338] sm:$0xff]
        %v3801 = vld [vmem:[%s3696 + $0x340] sm:$0xff]
        %v3802 = vld [vmem:[%s3696 + $0x348] sm:$0xff]
        %v3803 = vld [vmem:[%s3696 + $0x350] sm:$0xff]
        %v3804 = vld [vmem:[%s3696 + $0x358] sm:$0xff]
        %v3805 = vld [vmem:[%s3696 + $0x360] sm:$0xff]
        %v3806 = vld [vmem:[%s3696 + $0x368] sm:$0xff]
        %v3807 = vld [vmem:[%s3696 + $0x370] sm:$0xff]
        %v3808 = vld [vmem:[%s3696 + $0x378] sm:$0xff]
        %v3809 = vld [vmem:[%s3696 + $0x380] sm:$0xff]
        %v3810 = vld [vmem:[%s3696 + $0x388] sm:$0xff]
        %v3811 = vld [vmem:[%s3696 + $0x390] sm:$0xff]
        %v3812 = vld [vmem:[%s3696 + $0x398] sm:$0xff]
        %v3813 = vld [vmem:[%s3696 + $0x3a0] sm:$0xff]
        %v3814 = vld [vmem:[%s3696 + $0x3a8] sm:$0xff]
        %v3815 = vld [vmem:[%s3696 + $0x3b0] sm:$0xff]
        %v3816 = vld [vmem:[%s3696 + $0x3b8] sm:$0xff]
        %v3817 = vld [vmem:[%s3696 + $0x3c0] sm:$0xff]
        %v3818 = vld [vmem:[%s3696 + $0x3c8] sm:$0xff]
        %v3819 = vld [vmem:[%s3696 + $0x3d0] sm:$0xff]
        %v3820 = vld [vmem:[%s3696 + $0x3d8] sm:$0xff]
        %v3821 = vld [vmem:[%s3696 + $0x3e0] sm:$0xff]
        %v3822 = vld [vmem:[%s3696 + $0x3e8] sm:$0xff]
        %v3823 = vld [vmem:[%s3696 + $0x3f0] sm:$0xff]
        %v3824 = vld [vmem:[%s3696 + $0x3f8] sm:$0xff]
        %v3825 = vld [vmem:[%s3696 + $0x400] sm:$0xff]
        %v3826 = vld [vmem:[%s3696 + $0x408] sm:$0xff]
        %v3827 = vld [vmem:[%s3696 + $0x410] sm:$0xff]
        %v3828 = vld [vmem:[%s3696 + $0x418] sm:$0xff]
        %v3829 = vld [vmem:[%s3696 + $0x420] sm:$0xff]
        %v3830 = vld [vmem:[%s3696 + $0x428] sm:$0xff]
        %v3831 = vld [vmem:[%s3696 + $0x430] sm:$0xff]
        %v3832 = vld [vmem:[%s3696 + $0x438] sm:$0xff]
        %v3833 = vld [vmem:[%s3696 + $0x440] sm:$0xff]
        %v3834 = vld [vmem:[%s3696 + $0x448] sm:$0xff]
        %v3835 = vld [vmem:[%s3696 + $0x450] sm:$0xff]
        %v3836 = vld [vmem:[%s3696 + $0x458] sm:$0xff]
        %v3837 = vld [vmem:[%s3696 + $0x460] sm:$0xff]
        %v3838 = vld [vmem:[%s3696 + $0x468] sm:$0xff]
        %v3839 = vld [vmem:[%s3696 + $0x470] sm:$0xff]
        %v3840 = vld [vmem:[%s3696 + $0x478] sm:$0xff]
        %v3841 = vld [vmem:[%s3696 + $0x480] sm:$0xff]
        %v3842 = vld [vmem:[%s3696 + $0x488] sm:$0xff]
        %v3843 = vld [vmem:[%s3696 + $0x490] sm:$0xff]
        %v3844 = vld [vmem:[%s3696 + $0x498] sm:$0xff]
        %v3845 = vld [vmem:[%s3696 + $0x4a0] sm:$0xff]
        %v3846 = vld [vmem:[%s3696 + $0x4a8] sm:$0xff]
        %v3847 = vld [vmem:[%s3696 + $0x4b0] sm:$0xff]
        %v3848 = vld [vmem:[%s3696 + $0x4b8] sm:$0xff]
        %v3849 = vld [vmem:[%s3696 + $0x4c0] sm:$0xff]
        %v3850 = vld [vmem:[%s3696 + $0x4c8] sm:$0xff]
        %v3851 = vld [vmem:[%s3696 + $0x4d0] sm:$0xff]
        %v3852 = vld [vmem:[%s3696 + $0x4d8] sm:$0xff]
        %v3853 = vld [vmem:[%s3696 + $0x4e0] sm:$0xff]
        %v3854 = vld [vmem:[%s3696 + $0x4e8] sm:$0xff]
        %v3855 = vld [vmem:[%s3696 + $0x4f0] sm:$0xff]
        %v3856 = vld [vmem:[%s3696 + $0x4f8] sm:$0xff]
        %v3857 = vld [vmem:[%s3696 + $0x500] sm:$0xff]
        %v3858 = vld [vmem:[%s3696 + $0x508] sm:$0xff]
        %v3859 = vld [vmem:[%s3696 + $0x510] sm:$0xff]
        %v3860 = vld [vmem:[%s3696 + $0x518] sm:$0xff]
        %v3861 = vld [vmem:[%s3696 + $0x520] sm:$0xff]
        %v3862 = vld [vmem:[%s3696 + $0x528] sm:$0xff]
        %v3863 = vld [vmem:[%s3696 + $0x530] sm:$0xff]
        %v3864 = vld [vmem:[%s3696 + $0x538] sm:$0xff]
        %v3865 = vld [vmem:[%s3696 + $0x540] sm:$0xff]
        %v3866 = vld [vmem:[%s3696 + $0x548] sm:$0xff]
        %v3867 = vld [vmem:[%s3696 + $0x550] sm:$0xff]
        %v3868 = vld [vmem:[%s3696 + $0x558] sm:$0xff]
        %v3869 = vld [vmem:[%s3696 + $0x560] sm:$0xff]
        %v3870 = vld [vmem:[%s3696 + $0x568] sm:$0xff]
        %v3871 = vld [vmem:[%s3696 + $0x570] sm:$0xff]
        %v3872 = vld [vmem:[%s3696 + $0x578] sm:$0xff]
        %v3873 = vld [vmem:[%s3696 + $0x580] sm:$0xff]
        %v3874 = vld [vmem:[%s3696 + $0x588] sm:$0xff]
        %v3875 = vld [vmem:[%s3696 + $0x590] sm:$0xff]
        %v3876 = vld [vmem:[%s3696 + $0x598] sm:$0xff]
        %v3877 = vld [vmem:[%s3696 + $0x5a0] sm:$0xff]
        %v3878 = vld [vmem:[%s3696 + $0x5a8] sm:$0xff]
        %v3879 = vld [vmem:[%s3696 + $0x5b0] sm:$0xff]
        %v3880 = vld [vmem:[%s3696 + $0x5b8] sm:$0xff]
        %v3881 = vld [vmem:[%s3696 + $0x5c0] sm:$0xff]
        %v3882 = vld [vmem:[%s3696 + $0x5c8] sm:$0xff]
        %v3883 = vld [vmem:[%s3696 + $0x5d0] sm:$0xff]
        %v3884 = vld [vmem:[%s3696 + $0x5d8] sm:$0xff]
        %v3885 = vld [vmem:[%s3696 + $0x5e0] sm:$0xff]
        %v3886 = vld [vmem:[%s3696 + $0x5e8] sm:$0xff]
        %v3887 = vld [vmem:[%s3696 + $0x5f0] sm:$0xff]
        %v3888 = vld [vmem:[%s3696 + $0x5f8] sm:$0xff]
        %v3889 = vld [vmem:[%s3696 + $0x600] sm:$0xff]
        %v3890 = vld [vmem:[%s3696 + $0x608] sm:$0xff]
        %v3891 = vld [vmem:[%s3696 + $0x610] sm:$0xff]
        %v3892 = vld [vmem:[%s3696 + $0x618] sm:$0xff]
        %v3893 = vld [vmem:[%s3696 + $0x620] sm:$0xff]
        %v3894 = vld [vmem:[%s3696 + $0x628] sm:$0xff]
        %v3895 = vld [vmem:[%s3696 + $0x630] sm:$0xff]
        %v3896 = vld [vmem:[%s3696 + $0x638] sm:$0xff]
        %v3897 = vld [vmem:[%s3696 + $0x640] sm:$0xff]
        %v3898 = vld [vmem:[%s3696 + $0x648] sm:$0xff]
        %v3899 = vld [vmem:[%s3696 + $0x650] sm:$0xff]
        %v3900 = vld [vmem:[%s3696 + $0x658] sm:$0xff]
        %v3901 = vld [vmem:[%s3696 + $0x660] sm:$0xff]
        %v3902 = vld [vmem:[%s3696 + $0x668] sm:$0xff]
        %v3903 = vld [vmem:[%s3696 + $0x670] sm:$0xff]
        %v3904 = vld [vmem:[%s3696 + $0x678] sm:$0xff]
        %v3905 = vld [vmem:[%s3696 + $0x680] sm:$0xff]
        %v3906 = vld [vmem:[%s3696 + $0x688] sm:$0xff]
        %v3907 = vld [vmem:[%s3696 + $0x690] sm:$0xff]
        %v3908 = vld [vmem:[%s3696 + $0x698] sm:$0xff]
        %v3909 = vld [vmem:[%s3696 + $0x6a0] sm:$0xff]
        %v3910 = vld [vmem:[%s3696 + $0x6a8] sm:$0xff]
        %v3911 = vld [vmem:[%s3696 + $0x6b0] sm:$0xff]
        %v3912 = vld [vmem:[%s3696 + $0x6b8] sm:$0xff]
        %v3913 = vld [vmem:[%s3696 + $0x6c0] sm:$0xff]
        %v3914 = vld [vmem:[%s3696 + $0x6c8] sm:$0xff]
        %v3915 = vld [vmem:[%s3696 + $0x6d0] sm:$0xff]
        %v3916 = vld [vmem:[%s3696 + $0x6d8] sm:$0xff]
        %v3917 = vld [vmem:[%s3696 + $0x6e0] sm:$0xff]
        %v3918 = vld [vmem:[%s3696 + $0x6e8] sm:$0xff]
        %v3919 = vld [vmem:[%s3696 + $0x6f0] sm:$0xff]
        %v3920 = vld [vmem:[%s3696 + $0x6f8] sm:$0xff]
        %v3921 = vld [vmem:[%s3696 + $0x700] sm:$0xff]
        %v3922 = vld [vmem:[%s3696 + $0x708] sm:$0xff]
        %v3923 = vld [vmem:[%s3696 + $0x710] sm:$0xff]
        %v3924 = vld [vmem:[%s3696 + $0x718] sm:$0xff]
        %v3925 = vld [vmem:[%s3696 + $0x720] sm:$0xff]
        %v3926 = vld [vmem:[%s3696 + $0x728] sm:$0xff]
        %v3927 = vld [vmem:[%s3696 + $0x730] sm:$0xff]
        %v3928 = vld [vmem:[%s3696 + $0x738] sm:$0xff]
        %v3929 = vld [vmem:[%s3696 + $0x740] sm:$0xff]
        %v3930 = vld [vmem:[%s3696 + $0x748] sm:$0xff]
        %v3931 = vld [vmem:[%s3696 + $0x750] sm:$0xff]
        %v3932 = vld [vmem:[%s3696 + $0x758] sm:$0xff]
        %v3933 = vld [vmem:[%s3696 + $0x760] sm:$0xff]
        %v3934 = vld [vmem:[%s3696 + $0x768] sm:$0xff]
        %v3935 = vld [vmem:[%s3696 + $0x770] sm:$0xff]
        %v3936 = vld [vmem:[%s3696 + $0x778] sm:$0xff]
        %v3937 = vld [vmem:[%s3696 + $0x780] sm:$0xff]
        %v3938 = vld [vmem:[%s3696 + $0x788] sm:$0xff]
        %v3939 = vld [vmem:[%s3696 + $0x790] sm:$0xff]
        %v3940 = vld [vmem:[%s3696 + $0x798] sm:$0xff]
        %v3941 = vld [vmem:[%s3696 + $0x7a0] sm:$0xff]
        %v3942 = vld [vmem:[%s3696 + $0x7a8] sm:$0xff]
        %v3943 = vld [vmem:[%s3696 + $0x7b0] sm:$0xff]
        %v3944 = vld [vmem:[%s3696 + $0x7b8] sm:$0xff]
        %v3945 = vld [vmem:[%s3696 + $0x7c0] sm:$0xff]
        %v3946 = vld [vmem:[%s3696 + $0x7c8] sm:$0xff]
        %v3947 = vld [vmem:[%s3696 + $0x7d0] sm:$0xff]
        %v3948 = vld [vmem:[%s3696 + $0x7d8] sm:$0xff]
        %v3949 = vld [vmem:[%s3696 + $0x7e0] sm:$0xff]
        %v3950 = vld [vmem:[%s3696 + $0x7e8] sm:$0xff]
        %v3951 = vld [vmem:[%s3696 + $0x7f0] sm:$0xff]
        %v3952 = vld [vmem:[%s3696 + $0x7f8] sm:$0xff]
        %3953 = vmatpush.msra.mxu0 %v3757
        %3954 = vmatpush.msra.mxu0 %v3753
        %3955 = vmatpush.msra.mxu0 %v3749
        %3956 = vmatpush.msra.mxu0 %v3745
        %3957 = vmatpush.msra.mxu0 %v3741
        %3958 = vmatpush.msra.mxu0 %v3737
        %3959 = vmatpush.msra.mxu0 %v3733
        %3960 = vmatpush.msra.mxu0 %v3729
        %3961 = vmatpush.msra.mxu0 %v3725
        %3962 = vmatpush.msra.mxu0 %v3721
        %3963 = vmatpush.msra.mxu0 %v3717
        %3964 = vmatpush.msra.mxu0 %v3713
        %3965 = vmatpush.msra.mxu0 %v3709
        %3966 = vmatpush.msra.mxu0 %v3705
        %3967 = vmatpush.msra.mxu0 %v3701
        %3968 = vmatpush.msra.mxu0 %v3697
        %3969 = vmatmul.f32.gmra.mxu0 %v3688
        %v3970 = vpop.f32.mrf.mxu0
        %v3971 = vadd.f32 0.0, %v3970
        %3972 = vmatmul.f32.gmra.mxu0 %v3692
        %v3973 = vpop.f32.mrf.mxu0
        %v3974 = vadd.f32 0.0, %v3973
        %3975 = vdwg.mxu0
        %3976 = vmatpush.msra.mxu0 %v3821
        %3977 = vmatpush.msra.mxu0 %v3817
        %3978 = vmatpush.msra.mxu0 %v3813
        %3979 = vmatpush.msra.mxu0 %v3809
        %3980 = vmatpush.msra.mxu0 %v3805
        %3981 = vmatpush.msra.mxu0 %v3801
        %3982 = vmatpush.msra.mxu0 %v3797
        %3983 = vmatpush.msra.mxu0 %v3793
        %3984 = vmatpush.msra.mxu0 %v3789
        %3985 = vmatpush.msra.mxu0 %v3785
        %3986 = vmatpush.msra.mxu0 %v3781
        %3987 = vmatpush.msra.mxu0 %v3777
        %3988 = vmatpush.msra.mxu0 %v3773
        %3989 = vmatpush.msra.mxu0 %v3769
        %3990 = vmatpush.msra.mxu0 %v3765
        %3991 = vmatpush.msra.mxu0 %v3761
        %3992 = vmatmul.f32.gmra.mxu0 %v3689
        %v3993 = vpop.f32.mrf.mxu0
        %v3994 = vadd.f32 %v3971, %v3993
        %3995 = vmatmul.f32.gmra.mxu0 %v3693
        %v3996 = vpop.f32.mrf.mxu0
        %v3997 = vadd.f32 %v3974, %v3996
        %3998 = vdwg.mxu0
        %3999 = vmatpush.msra.mxu0 %v3885
        %4000 = vmatpush.msra.mxu0 %v3881
        %4001 = vmatpush.msra.mxu0 %v3877
        %4002 = vmatpush.msra.mxu0 %v3873
        %4003 = vmatpush.msra.mxu0 %v3869
        %4004 = vmatpush.msra.mxu0 %v3865
        %4005 = vmatpush.msra.mxu0 %v3861
        %4006 = vmatpush.msra.mxu0 %v3857
        %4007 = vmatpush.msra.mxu0 %v3853
        %4008 = vmatpush.msra.mxu0 %v3849
        %4009 = vmatpush.msra.mxu0 %v3845
        %4010 = vmatpush.msra.mxu0 %v3841
        %4011 = vmatpush.msra.mxu0 %v3837
        %4012 = vmatpush.msra.mxu0 %v3833
        %4013 = vmatpush.msra.mxu0 %v3829
        %4014 = vmatpush.msra.mxu0 %v3825
        %4015 = vmatmul.f32.gmra.mxu0 %v3690
        %v4016 = vpop.f32.mrf.mxu0
        %v4017 = vadd.f32 %v3994, %v4016
        %4018 = vmatmul.f32.gmra.mxu0 %v3694
        %v4019 = vpop.f32.mrf.mxu0
        %v4020 = vadd.f32 %v3997, %v4019
        %4021 = vdwg.mxu0
        %4022 = vmatpush.msra.mxu0 %v3949
        %4023 = vmatpush.msra.mxu0 %v3945
        %4024 = vmatpush.msra.mxu0 %v3941
        %4025 = vmatpush.msra.mxu0 %v3937
        %4026 = vmatpush.msra.mxu0 %v3933
        %4027 = vmatpush.msra.mxu0 %v3929
        %4028 = vmatpush.msra.mxu0 %v3925
        %4029 = vmatpush.msra.mxu0 %v3921
        %4030 = vmatpush.msra.mxu0 %v3917
        %4031 = vmatpush.msra.mxu0 %v3913
        %4032 = vmatpush.msra.mxu0 %v3909
        %4033 = vmatpush.msra.mxu0 %v3905
        %4034 = vmatpush.msra.mxu0 %v3901
        %4035 = vmatpush.msra.mxu0 %v3897
        %4036 = vmatpush.msra.mxu0 %v3893
        %4037 = vmatpush.msra.mxu0 %v3889
        %4038 = vmatmul.f32.gmra.mxu0 %v3691
        %v4039 = vpop.f32.mrf.mxu0
        %v4040 = vadd.f32 %v4017, %v4039
        %4041 = vmatmul.f32.gmra.mxu0 %v3695
        %v4042 = vpop.f32.mrf.mxu0
        %v4043 = vadd.f32 %v4020, %v4042
        %4044 = vdwg.mxu0
        %4045 = vmatpush.msra.mxu0 %v3758
        %4046 = vmatpush.msra.mxu0 %v3754
        %4047 = vmatpush.msra.mxu0 %v3750
        %4048 = vmatpush.msra.mxu0 %v3746
        %4049 = vmatpush.msra.mxu0 %v3742
        %4050 = vmatpush.msra.mxu0 %v3738
        %4051 = vmatpush.msra.mxu0 %v3734
        %4052 = vmatpush.msra.mxu0 %v3730
        %4053 = vmatpush.msra.mxu0 %v3726
        %4054 = vmatpush.msra.mxu0 %v3722
        %4055 = vmatpush.msra.mxu0 %v3718
        %4056 = vmatpush.msra.mxu0 %v3714
        %4057 = vmatpush.msra.mxu0 %v3710
        %4058 = vmatpush.msra.mxu0 %v3706
        %4059 = vmatpush.msra.mxu0 %v3702
        %4060 = vmatpush.msra.mxu0 %v3698
        %4061 = vmatmul.f32.gmra.mxu0 %v3688
        %v4062 = vpop.f32.mrf.mxu0
        %v4063 = vadd.f32 0.0, %v4062
        %4064 = vmatmul.f32.gmra.mxu0 %v3692
        %v4065 = vpop.f32.mrf.mxu0
        %v4066 = vadd.f32 0.0, %v4065
        %4067 = vdwg.mxu0
        %4068 = vmatpush.msra.mxu0 %v3822
        %4069 = vmatpush.msra.mxu0 %v3818
        %4070 = vmatpush.msra.mxu0 %v3814
        %4071 = vmatpush.msra.mxu0 %v3810
        %4072 = vmatpush.msra.mxu0 %v3806
        %4073 = vmatpush.msra.mxu0 %v3802
        %4074 = vmatpush.msra.mxu0 %v3798
        %4075 = vmatpush.msra.mxu0 %v3794
        %4076 = vmatpush.msra.mxu0 %v3790
        %4077 = vmatpush.msra.mxu0 %v3786
        %4078 = vmatpush.msra.mxu0 %v3782
        %4079 = vmatpush.msra.mxu0 %v3778
        %4080 = vmatpush.msra.mxu0 %v3774
        %4081 = vmatpush.msra.mxu0 %v3770
        %4082 = vmatpush.msra.mxu0 %v3766
        %4083 = vmatpush.msra.mxu0 %v3762
        %4084 = vmatmul.f32.gmra.mxu0 %v3689
        %v4085 = vpop.f32.mrf.mxu0
        %v4086 = vadd.f32 %v4063, %v4085
        %4087 = vmatmul.f32.gmra.mxu0 %v3693
        %v4088 = vpop.f32.mrf.mxu0
        %v4089 = vadd.f32 %v4066, %v4088
        %4090 = vdwg.mxu0
        %4091 = vmatpush.msra.mxu0 %v3886
        %4092 = vmatpush.msra.mxu0 %v3882
        %4093 = vmatpush.msra.mxu0 %v3878
        %4094 = vmatpush.msra.mxu0 %v3874
        %4095 = vmatpush.msra.mxu0 %v3870
        %4096 = vmatpush.msra.mxu0 %v3866
        %4097 = vmatpush.msra.mxu0 %v3862
        %4098 = vmatpush.msra.mxu0 %v3858
        %4099 = vmatpush.msra.mxu0 %v3854
        %4100 = vmatpush.msra.mxu0 %v3850
        %4101 = vmatpush.msra.mxu0 %v3846
        %4102 = vmatpush.msra.mxu0 %v3842
        %4103 = vmatpush.msra.mxu0 %v3838
        %4104 = vmatpush.msra.mxu0 %v3834
        %4105 = vmatpush.msra.mxu0 %v3830
        %4106 = vmatpush.msra.mxu0 %v3826
        %4107 = vmatmul.f32.gmra.mxu0 %v3690
        %v4108 = vpop.f32.mrf.mxu0
        %v4109 = vadd.f32 %v4086, %v4108
        %4110 = vmatmul.f32.gmra.mxu0 %v3694
        %v4111 = vpop.f32.mrf.mxu0
        %v4112 = vadd.f32 %v4089, %v4111
        %4113 = vdwg.mxu0
        %4114 = vmatpush.msra.mxu0 %v3950
        %4115 = vmatpush.msra.mxu0 %v3946
        %4116 = vmatpush.msra.mxu0 %v3942
        %4117 = vmatpush.msra.mxu0 %v3938
        %4118 = vmatpush.msra.mxu0 %v3934
        %4119 = vmatpush.msra.mxu0 %v3930
        %4120 = vmatpush.msra.mxu0 %v3926
        %4121 = vmatpush.msra.mxu0 %v3922
        %4122 = vmatpush.msra.mxu0 %v3918
        %4123 = vmatpush.msra.mxu0 %v3914
        %4124 = vmatpush.msra.mxu0 %v3910
        %4125 = vmatpush.msra.mxu0 %v3906
        %4126 = vmatpush.msra.mxu0 %v3902
        %4127 = vmatpush.msra.mxu0 %v3898
        %4128 = vmatpush.msra.mxu0 %v3894
        %4129 = vmatpush.msra.mxu0 %v3890
        %4130 = vmatmul.f32.gmra.mxu0 %v3691
        %v4131 = vpop.f32.mrf.mxu0
        %v4132 = vadd.f32 %v4109, %v4131
        %4133 = vmatmul.f32.gmra.mxu0 %v3695
        %v4134 = vpop.f32.mrf.mxu0
        %v4135 = vadd.f32 %v4112, %v4134
        %4136 = vdwg.mxu0
        %4137 = vmatpush.msra.mxu0 %v3759
        %4138 = vmatpush.msra.mxu0 %v3755
        %4139 = vmatpush.msra.mxu0 %v3751
        %4140 = vmatpush.msra.mxu0 %v3747
        %4141 = vmatpush.msra.mxu0 %v3743
        %4142 = vmatpush.msra.mxu0 %v3739
        %4143 = vmatpush.msra.mxu0 %v3735
        %4144 = vmatpush.msra.mxu0 %v3731
        %4145 = vmatpush.msra.mxu0 %v3727
        %4146 = vmatpush.msra.mxu0 %v3723
        %4147 = vmatpush.msra.mxu0 %v3719
        %4148 = vmatpush.msra.mxu0 %v3715
        %4149 = vmatpush.msra.mxu0 %v3711
        %4150 = vmatpush.msra.mxu0 %v3707
        %4151 = vmatpush.msra.mxu0 %v3703
        %4152 = vmatpush.msra.mxu0 %v3699
        %4153 = vmatmul.f32.gmra.mxu0 %v3688
        %v4154 = vpop.f32.mrf.mxu0
        %v4155 = vadd.f32 0.0, %v4154
        %4156 = vmatmul.f32.gmra.mxu0 %v3692
        %v4157 = vpop.f32.mrf.mxu0
        %v4158 = vadd.f32 0.0, %v4157
        %4159 = vdwg.mxu0
        %4160 = vmatpush.msra.mxu0 %v3823
        %4161 = vmatpush.msra.mxu0 %v3819
        %4162 = vmatpush.msra.mxu0 %v3815
        %4163 = vmatpush.msra.mxu0 %v3811
        %4164 = vmatpush.msra.mxu0 %v3807
        %4165 = vmatpush.msra.mxu0 %v3803
        %4166 = vmatpush.msra.mxu0 %v3799
        %4167 = vmatpush.msra.mxu0 %v3795
        %4168 = vmatpush.msra.mxu0 %v3791
        %4169 = vmatpush.msra.mxu0 %v3787
        %4170 = vmatpush.msra.mxu0 %v3783
        %4171 = vmatpush.msra.mxu0 %v3779
        %4172 = vmatpush.msra.mxu0 %v3775
        %4173 = vmatpush.msra.mxu0 %v3771
        %4174 = vmatpush.msra.mxu0 %v3767
        %4175 = vmatpush.msra.mxu0 %v3763
        %4176 = vmatmul.f32.gmra.mxu0 %v3689
        %v4177 = vpop.f32.mrf.mxu0
        %v4178 = vadd.f32 %v4155, %v4177
        %4179 = vmatmul.f32.gmra.mxu0 %v3693
        %v4180 = vpop.f32.mrf.mxu0
        %v4181 = vadd.f32 %v4158, %v4180
        %4182 = vdwg.mxu0
        %4183 = vmatpush.msra.mxu0 %v3887
        %4184 = vmatpush.msra.mxu0 %v3883
        %4185 = vmatpush.msra.mxu0 %v3879
        %4186 = vmatpush.msra.mxu0 %v3875
        %4187 = vmatpush.msra.mxu0 %v3871
        %4188 = vmatpush.msra.mxu0 %v3867
        %4189 = vmatpush.msra.mxu0 %v3863
        %4190 = vmatpush.msra.mxu0 %v3859
        %4191 = vmatpush.msra.mxu0 %v3855
        %4192 = vmatpush.msra.mxu0 %v3851
        %4193 = vmatpush.msra.mxu0 %v3847
        %4194 = vmatpush.msra.mxu0 %v3843
        %4195 = vmatpush.msra.mxu0 %v3839
        %4196 = vmatpush.msra.mxu0 %v3835
        %4197 = vmatpush.msra.mxu0 %v3831
        %4198 = vmatpush.msra.mxu0 %v3827
        %4199 = vmatmul.f32.gmra.mxu0 %v3690
        %v4200 = vpop.f32.mrf.mxu0
        %v4201 = vadd.f32 %v4178, %v4200
        %4202 = vmatmul.f32.gmra.mxu0 %v3694
        %v4203 = vpop.f32.mrf.mxu0
        %v4204 = vadd.f32 %v4181, %v4203
        %4205 = vdwg.mxu0
        %4206 = vmatpush.msra.mxu0 %v3951
        %4207 = vmatpush.msra.mxu0 %v3947
        %4208 = vmatpush.msra.mxu0 %v3943
        %4209 = vmatpush.msra.mxu0 %v3939
        %4210 = vmatpush.msra.mxu0 %v3935
        %4211 = vmatpush.msra.mxu0 %v3931
        %4212 = vmatpush.msra.mxu0 %v3927
        %4213 = vmatpush.msra.mxu0 %v3923
        %4214 = vmatpush.msra.mxu0 %v3919
        %4215 = vmatpush.msra.mxu0 %v3915
        %4216 = vmatpush.msra.mxu0 %v3911
        %4217 = vmatpush.msra.mxu0 %v3907
        %4218 = vmatpush.msra.mxu0 %v3903
        %4219 = vmatpush.msra.mxu0 %v3899
        %4220 = vmatpush.msra.mxu0 %v3895
        %4221 = vmatpush.msra.mxu0 %v3891
        %4222 = vmatmul.f32.gmra.mxu0 %v3691
        %v4223 = vpop.f32.mrf.mxu0
        %v4224 = vadd.f32 %v4201, %v4223
        %4225 = vmatmul.f32.gmra.mxu0 %v3695
        %v4226 = vpop.f32.mrf.mxu0
        %v4227 = vadd.f32 %v4204, %v4226
        %4228 = vdwg.mxu0
        %4229 = vmatpush.msra.mxu0 %v3760
        %4230 = vmatpush.msra.mxu0 %v3756
        %4231 = vmatpush.msra.mxu0 %v3752
        %4232 = vmatpush.msra.mxu0 %v3748
        %4233 = vmatpush.msra.mxu0 %v3744
        %4234 = vmatpush.msra.mxu0 %v3740
        %4235 = vmatpush.msra.mxu0 %v3736
        %4236 = vmatpush.msra.mxu0 %v3732
        %4237 = vmatpush.msra.mxu0 %v3728
        %4238 = vmatpush.msra.mxu0 %v3724
        %4239 = vmatpush.msra.mxu0 %v3720
        %4240 = vmatpush.msra.mxu0 %v3716
        %4241 = vmatpush.msra.mxu0 %v3712
        %4242 = vmatpush.msra.mxu0 %v3708
        %4243 = vmatpush.msra.mxu0 %v3704
        %4244 = vmatpush.msra.mxu0 %v3700
        %4245 = vmatmul.f32.gmra.mxu0 %v3688
        %v4246 = vpop.f32.mrf.mxu0
        %v4247 = vadd.f32 0.0, %v4246
        %4248 = vmatmul.f32.gmra.mxu0 %v3692
        %v4249 = vpop.f32.mrf.mxu0
        %v4250 = vadd.f32 0.0, %v4249
        %4251 = vdwg.mxu0
        %4252 = vmatpush.msra.mxu0 %v3824
        %4253 = vmatpush.msra.mxu0 %v3820
        %4254 = vmatpush.msra.mxu0 %v3816
        %4255 = vmatpush.msra.mxu0 %v3812
        %4256 = vmatpush.msra.mxu0 %v3808
        %4257 = vmatpush.msra.mxu0 %v3804
        %4258 = vmatpush.msra.mxu0 %v3800
        %4259 = vmatpush.msra.mxu0 %v3796
        %4260 = vmatpush.msra.mxu0 %v3792
        %4261 = vmatpush.msra.mxu0 %v3788
        %4262 = vmatpush.msra.mxu0 %v3784
        %4263 = vmatpush.msra.mxu0 %v3780
        %4264 = vmatpush.msra.mxu0 %v3776
        %4265 = vmatpush.msra.mxu0 %v3772
        %4266 = vmatpush.msra.mxu0 %v3768
        %4267 = vmatpush.msra.mxu0 %v3764
        %4268 = vmatmul.f32.gmra.mxu0 %v3689
        %v4269 = vpop.f32.mrf.mxu0
        %v4270 = vadd.f32 %v4247, %v4269
        %4271 = vmatmul.f32.gmra.mxu0 %v3693
        %v4272 = vpop.f32.mrf.mxu0
        %v4273 = vadd.f32 %v4250, %v4272
        %4274 = vdwg.mxu0
        %4275 = vmatpush.msra.mxu0 %v3888
        %4276 = vmatpush.msra.mxu0 %v3884
        %4277 = vmatpush.msra.mxu0 %v3880
        %4278 = vmatpush.msra.mxu0 %v3876
        %4279 = vmatpush.msra.mxu0 %v3872
        %4280 = vmatpush.msra.mxu0 %v3868
        %4281 = vmatpush.msra.mxu0 %v3864
        %4282 = vmatpush.msra.mxu0 %v3860
        %4283 = vmatpush.msra.mxu0 %v3856
        %4284 = vmatpush.msra.mxu0 %v3852
        %4285 = vmatpush.msra.mxu0 %v3848
        %4286 = vmatpush.msra.mxu0 %v3844
        %4287 = vmatpush.msra.mxu0 %v3840
        %4288 = vmatpush.msra.mxu0 %v3836
        %4289 = vmatpush.msra.mxu0 %v3832
        %4290 = vmatpush.msra.mxu0 %v3828
        %4291 = vmatmul.f32.gmra.mxu0 %v3690
        %v4292 = vpop.f32.mrf.mxu0
        %v4293 = vadd.f32 %v4270, %v4292
        %4294 = vmatmul.f32.gmra.mxu0 %v3694
        %v4295 = vpop.f32.mrf.mxu0
        %v4296 = vadd.f32 %v4273, %v4295
        %4297 = vdwg.mxu0
        %4298 = vmatpush.msra.mxu0 %v3952
        %4299 = vmatpush.msra.mxu0 %v3948
        %4300 = vmatpush.msra.mxu0 %v3944
        %4301 = vmatpush.msra.mxu0 %v3940
        %4302 = vmatpush.msra.mxu0 %v3936
        %4303 = vmatpush.msra.mxu0 %v3932
        %4304 = vmatpush.msra.mxu0 %v3928
        %4305 = vmatpush.msra.mxu0 %v3924
        %4306 = vmatpush.msra.mxu0 %v3920
        %4307 = vmatpush.msra.mxu0 %v3916
        %4308 = vmatpush.msra.mxu0 %v3912
        %4309 = vmatpush.msra.mxu0 %v3908
        %4310 = vmatpush.msra.mxu0 %v3904
        %4311 = vmatpush.msra.mxu0 %v3900
        %4312 = vmatpush.msra.mxu0 %v3896
        %4313 = vmatpush.msra.mxu0 %v3892
        %4314 = vmatmul.f32.gmra.mxu0 %v3691
        %v4315 = vpop.f32.mrf.mxu0
        %v4316 = vadd.f32 %v4293, %v4315
        %4317 = vmatmul.f32.gmra.mxu0 %v3695
        %v4318 = vpop.f32.mrf.mxu0
        %v4319 = vadd.f32 %v4296, %v4318
        %4320 = vdwg.mxu0
        %v4321 = vld [vmem:[#allocation3] sm:$0xff]
        %v4322 = vld [vmem:[#allocation3 + $0x8] sm:$0xff]
        %v4323 = vld [vmem:[#allocation3 + $0x10] sm:$0xff]
        %v4324 = vld [vmem:[#allocation3 + $0x18] sm:$0xff]
        %v4325 = vld [vmem:[#allocation3 + $0x20] sm:$0x7f]
        %v4326 = vld [vmem:[#allocation3 + $0x28] sm:$0x7f]
        %v4327 = vld [vmem:[#allocation3 + $0x30] sm:$0x7f]
        %v4328 = vld [vmem:[#allocation3 + $0x38] sm:$0x7f]
        %v4337 = vrot.slane %v4040, 1
        %v4338 = vrot.slane %v4043, 1
        %v4339 = vsel %vm2292, %v4337, %v4338
        %v4340 = vrot.slane %v4132, 1
        %v4341 = vrot.slane %v4135, 1
        %v4342 = vsel %vm2292, %v4340, %v4341
        %v4343 = vrot.slane %v4224, 1
        %v4344 = vrot.slane %v4227, 1
        %v4345 = vsel %vm2292, %v4343, %v4344
        %v4346 = vrot.slane %v4316, 1
        %v4347 = vrot.slane %v4319, 1
        %v4348 = vsel %vm2292, %v4346, %v4347
        %v4357 = vadd.f32 %v4321, %v4339
        %v4358 = vadd.f32 %v4322, %v4342
        %v4359 = vadd.f32 %v4323, %v4345
        %v4360 = vadd.f32 %v4324, %v4348
        %v4361 = vadd.f32 %v4325, %v4338
        %v4362 = vadd.f32 %v4326, %v4341
        %v4363 = vadd.f32 %v4327, %v4344
        %v4364 = vadd.f32 %v4328, %v4347
        %4365 = vst [vmem:[#allocation3] sm:$0xff] %v4357
        %4366 = vst [vmem:[#allocation3 + $0x8] sm:$0xff] %v4358
        %4367 = vst [vmem:[#allocation3 + $0x10] sm:$0xff] %v4359
        %4368 = vst [vmem:[#allocation3 + $0x18] sm:$0xff] %v4360
        %4369 = vst [vmem:[#allocation3 + $0x20] sm:$0x7f] %v4361
        %4370 = vst [vmem:[#allocation3 + $0x28] sm:$0x7f] %v4362
        %4371 = vst [vmem:[#allocation3 + $0x30] sm:$0x7f] %v4363
        %4372 = vst [vmem:[#allocation3 + $0x38] sm:$0x7f] %v4364
        %v4373 = vld [vmem:[%s259] sm:$0xff]
        %v4374 = vld [vmem:[%s259 + $0x8] sm:$0xff]
        %v4375 = vld [vmem:[%s259 + $0x10] sm:$0xff]
        %v4376 = vld [vmem:[%s259 + $0x18] sm:$0xff]
        %v4377 = vld [vmem:[%s259 + $0x20] sm:$0xff]
        %v4378 = vld [vmem:[%s259 + $0x28] sm:$0xff]
        %v4379 = vld [vmem:[%s259 + $0x30] sm:$0xff]
        %v4380 = vld [vmem:[%s259 + $0x38] sm:$0xff]
        %v4381 = vld [vmem:[#allocation3] sm:$0xff]
        %v4382 = vld [vmem:[#allocation3 + $0x8] sm:$0xff]
        %v4383 = vld [vmem:[#allocation3 + $0x10] sm:$0xff]
        %v4384 = vld [vmem:[#allocation3 + $0x18] sm:$0xff]
        %v4385 = vld [vmem:[#allocation3 + $0x20] sm:$0xff]
        %v4386 = vld [vmem:[#allocation3 + $0x28] sm:$0xff]
        %v4387 = vld [vmem:[#allocation3 + $0x30] sm:$0xff]
        %v4388 = vld [vmem:[#allocation3 + $0x38] sm:$0xff]
        %v4389 = vadd.f32 %v4373, %v4381
        %v4390 = vadd.f32 %v4374, %v4382
        %v4391 = vadd.f32 %v4375, %v4383
        %v4392 = vadd.f32 %v4376, %v4384
        %v4393 = vadd.f32 %v4377, %v4385
        %v4394 = vadd.f32 %v4378, %v4386
        %v4395 = vadd.f32 %v4379, %v4387
        %v4396 = vadd.f32 %v4380, %v4388
        %4397 = vst [vmem:[%s306] sm:$0xff] %v4389
        %4398 = vst [vmem:[%s306 + $0x8] sm:$0xff] %v4390
        %4399 = vst [vmem:[%s306 + $0x10] sm:$0xff] %v4391
        %4400 = vst [vmem:[%s306 + $0x18] sm:$0xff] %v4392
        %4401 = vst [vmem:[%s306 + $0x20] sm:$0xff] %v4393
        %4402 = vst [vmem:[%s306 + $0x28] sm:$0xff] %v4394
        %4403 = vst [vmem:[%s306 + $0x30] sm:$0xff] %v4395
        %4404 = vst [vmem:[%s306 + $0x38] sm:$0xff] %v4396
        %s4405 = sand.u32 %s142, 1
        %s4406 = scalar_lea.sflag [#allocation6], %s4405
        %s4407 = sand.u32 %s142, 1
        %s4408 = smul.addr %s4407, 64
        %s4409 = scalar_lea.vmem [#allocation13], %s4408
        // Predicated region
        $region61: #{tpu_custom_call.1} parent=39 // pred_check
          %p4410 = pneg %p152
        $region62: #{tpu_custom_call.1} parent=39 // pred_check_branch
          %4412 = sbr.rel (%p4410) target = $region64
        $region63: #{tpu_custom_call.1} parent=39 // pred_region
          %4414 = vsyncadd %s4406, 0
          %s4415 = smul.addr %s24, 8
          %s4416 = smul.addr %s4415, 8
          %s4417 = scalar_lea.hbm %s5, %s4416
          %s4418 = sshll.u32 %s4409, 4
          %s4419 = int_to_ptr.vmem [resolvable:$true] %s4418
          %s4420 = sshll.u32 %s4417, 4
          %s4421 = int_to_ptr.hbm [resolvable:$true] %s4420
          %4426 = dma.vmem_to_hbm [thread:$0]  %s4419, 1024, %s4421, %s4406, 512, 512, 32
        $region64: #{tpu_custom_call.1} parent=39 // pred_fallthru
          _
      $region40: #{tpu_custom_call.1} parent=5 // pred_fallthru
        _
      %p4427 = scmp.le.s32.totalorder 2, %s19
      // Predicated region
      $region65: #{tpu_custom_call.1} parent=5 // pred_check
        %p4428 = pneg %p4427
      $region66: #{tpu_custom_call.1} parent=5 // pred_check_branch
        %4430 = sbr.rel (%p4428) target = $region68
      $region67: #{tpu_custom_call.1} parent=5 // pred_region
        %s4431 = ssub.s32 %s19, 2
        // Predicated region
        $region69: #{tpu_custom_call.1} parent=67 // pred_check
          %p4432 = pneg %p158
        $region70: #{tpu_custom_call.1} parent=67 // pred_check_branch
          %4434 = sbr.rel (%p4432) target = $region72
        $region71: #{tpu_custom_call.1} parent=67 // pred_region
          %s4435 = sand.u32 %s143, 1
          %s4436 = scalar_lea.sflag [#allocation6], %s4435
          %s4437 = sand.u32 %s143, 1
          %s4438 = smul.addr %s4437, 64
          %s4439 = scalar_lea.vmem [#allocation13], %s4438
          %4441 = dma.done %s4436, 1024
        $region72: #{tpu_custom_call.1} parent=67 // pred_fallthru
          _
      $region68: #{tpu_custom_call.1} parent=5 // pred_fallthru
        _
    $region6: #{tpu_custom_call.1} parent=1 // loop_footer
      %s23 = sadd.s32 1, %s19
    $region7: #{tpu_custom_call.1} parent=1 // loop_footer_branch
      %18 = sbr.rel target = $region3
    $region8: #{tpu_custom_call.1} parent=1 // loop_exit
      _
    %4442 = vsyncpa [#allocation5], 1
    %s4443 = scalar_lea.sflag [#allocation5], 1
    %4444 = vsyncpa %s4443, 1
    %4445 = vsyncpa [#allocation8], 1
    %4446 = vsyncpa [#allocation11], 1
    %4447 = vsyncpa [#allocation6], 1
    %s4448 = scalar_lea.sflag [#allocation6], 1
    %4449 = vsyncpa %s4448, 1

</llo_original>
